<compile_context>
chip_gen: v7x
topology: tpu7x:2x2x1
jax: 0.10.0
libtpu: 0.0.40
codegen_flags: <defaults>
</compile_context>

<pallas_src>
import functools

import jax
import jax.numpy as jnp
from jax.experimental import pallas as pl
from jax.experimental.pallas import tpu as pltpu

LANES = 128
SUBLANES = 8
_VMEM_LIMIT = 32 * 1024 * 1024  # safe on v5e (raise from 16MiB) and v7x (<=32MiB scoped)


def _round_up(x, m):
    return (x + m - 1) // m * m


# -----------------------------------------------------------------------------
# Kernel 1: bf16 MXU matmul + elementwise activation (layers without BatchNorm)
# -----------------------------------------------------------------------------
def _matmul_act_kernel(p_ref, w_ref, o_ref, *, act):
    y = jnp.dot(p_ref[...], w_ref[...], preferred_element_type=jnp.float32)
    if act == "leaky":
        y = jnp.where(y > 0, y, 0.2 * y)
    elif act == "sigmoid":
        # numerically stable sigmoid in f32
        z = jnp.exp(-jnp.abs(y))
        y = jnp.where(y >= 0, 1.0 / (1.0 + z), z / (1.0 + z))
    o_ref[...] = y


def matmul_act(patches, w2d, *, act, tile_m):
    Mp, Kp = patches.shape
    OCp = w2d.shape[1]
    return pl.pallas_call(
        functools.partial(_matmul_act_kernel, act=act),
        out_shape=jax.ShapeDtypeStruct((Mp, OCp), jnp.float32),
        grid_spec=pltpu.PrefetchScalarGridSpec(
            num_scalar_prefetch=0,
            grid=(Mp // tile_m,),
            in_specs=[
                pl.BlockSpec((tile_m, Kp), lambda m: (m, 0)),
                pl.BlockSpec((Kp, OCp), lambda m: (0, 0)),   # resident weights
            ],
            out_specs=pl.BlockSpec((tile_m, OCp), lambda m: (m, 0)),
        ),
        compiler_params=pltpu.CompilerParams(
            dimension_semantics=("parallel",),
            vmem_limit_bytes=_VMEM_LIMIT),
    )(patches, w2d)


# -----------------------------------------------------------------------------
# Kernel 2 (BN pass 1): matmul + per-channel sum / sum-of-squares accumulation
# -----------------------------------------------------------------------------
def _matmul_stats_kernel(p_ref, w_ref, y_ref, sum_ref, ssq_ref):
    y = jnp.dot(p_ref[...], w_ref[...], preferred_element_type=jnp.float32)
    y_ref[...] = y

    @pl.when(pl.program_id(0) == 0)
    def _():
        sum_ref[...] = jnp.zeros_like(sum_ref)
        ssq_ref[...] = jnp.zeros_like(ssq_ref)

    # (1, OCp) broadcasts across the 8-sublane accumulator block; row 0 carries
    # the full per-channel statistic.
    sum_ref[...] = sum_ref[...] + jnp.sum(y, axis=0, keepdims=True)
    ssq_ref[...] = ssq_ref[...] + jnp.sum(y * y, axis=0, keepdims=True)


def matmul_stats(patches, w2d, *, tile_m):
    Mp, Kp = patches.shape
    OCp = w2d.shape[1]
    y, s, ss = pl.pallas_call(
        _matmul_stats_kernel,
        out_shape=(jax.ShapeDtypeStruct((Mp, OCp), jnp.float32),
                   jax.ShapeDtypeStruct((SUBLANES, OCp), jnp.float32),
                   jax.ShapeDtypeStruct((SUBLANES, OCp), jnp.float32)),
        grid_spec=pltpu.PrefetchScalarGridSpec(
            num_scalar_prefetch=0,
            grid=(Mp // tile_m,),
            in_specs=[
                pl.BlockSpec((tile_m, Kp), lambda m: (m, 0)),
                pl.BlockSpec((Kp, OCp), lambda m: (0, 0)),
            ],
            out_specs=[
                pl.BlockSpec((tile_m, OCp), lambda m: (m, 0)),
                pl.BlockSpec((SUBLANES, OCp), lambda m: (0, 0)),
                pl.BlockSpec((SUBLANES, OCp), lambda m: (0, 0)),
            ],
        ),
        compiler_params=pltpu.CompilerParams(
            dimension_semantics=("arbitrary",),   # accumulator across M tiles
            vmem_limit_bytes=_VMEM_LIMIT),
    )(patches, w2d)
    return y, s[0], ss[0]


# -----------------------------------------------------------------------------
# Kernel 3 (BN pass 2): fused scale*x + bias + LeakyReLU(0.2)
# -----------------------------------------------------------------------------
def _scale_bias_lrelu_kernel(y_ref, s_ref, b_ref, o_ref):
    x = y_ref[...] * s_ref[...] + b_ref[...]
    o_ref[...] = jnp.where(x > 0, x, 0.2 * x)


def scale_bias_lrelu(y, scale, bias, *, tile_m):
    Mp, OCp = y.shape
    return pl.pallas_call(
        _scale_bias_lrelu_kernel,
        out_shape=jax.ShapeDtypeStruct((Mp, OCp), jnp.float32),
        grid_spec=pltpu.PrefetchScalarGridSpec(
            num_scalar_prefetch=0,
            grid=(Mp // tile_m,),
            in_specs=[
                pl.BlockSpec((tile_m, OCp), lambda m: (m, 0)),
                pl.BlockSpec((1, OCp), lambda m: (0, 0)),
                pl.BlockSpec((1, OCp), lambda m: (0, 0)),
            ],
            out_specs=pl.BlockSpec((tile_m, OCp), lambda m: (m, 0)),
        ),
        compiler_params=pltpu.CompilerParams(
            dimension_semantics=("parallel",),
            vmem_limit_bytes=_VMEM_LIMIT),
    )(y, scale, bias)


# -----------------------------------------------------------------------------
# Glue: NHWC im2col (strided slices only, no transposes) + conv block
# -----------------------------------------------------------------------------
def im2col_nhwc(x, k, stride, pad):
    N, H, W, C = x.shape
    xp = jnp.pad(x, ((0, 0), (pad, pad), (pad, pad), (0, 0)))
    OH = (H + 2 * pad - k) // stride + 1
    OW = (W + 2 * pad - k) // stride + 1
    cols = []
    for kh in range(k):
        for kw in range(k):
            cols.append(xp[:, kh:kh + stride * OH:stride,
                            kw:kw + stride * OW:stride, :])
    patches = jnp.stack(cols, axis=3)                 # (N, OH, OW, k*k, C)
    patches = patches.reshape(N * OH * OW, k * k * C)  # K ordered (kh, kw, C)
    return patches, OH, OW


def conv_block(x, w, gamma=None, beta=None, *, act, stride, pad, eps=1e-5):
    """x: (N, H, W, C) NHWC f32;  w: PyTorch conv weight (OC, IC, 4, 4)."""
    N = x.shape[0]
    OC, IC, KH, KW = w.shape
    patches, OH, OW = im2col_nhwc(x, KH, stride, pad)
    M, K = patches.shape

    # Lane/MXU-friendly padding: K, OC -> multiples of 128; M -> tile multiple.
    Kp = _round_up(K, LANES)
    OCp = _round_up(OC, LANES)
    tile_m = min(512, _round_up(M, SUBLANES))
    Mp = _round_up(M, tile_m)

    patches = jnp.pad(patches, ((0, Mp - M), (0, Kp - K))).astype(jnp.bfloat16)
    # (OC, IC, KH, KW) -> (KH, KW, IC, OC) to match NHWC patch ordering.
    w2d = jnp.transpose(w, (2, 3, 1, 0)).reshape(K, OC)
    w2d = jnp.pad(w2d, ((0, Kp - K), (0, OCp - OC))).astype(jnp.bfloat16)

    if gamma is None:
        y = matmul_act(patches, w2d, act=act, tile_m=tile_m)
    else:
        # Two-pass BatchNorm: accumulate moments, fold into one scale/bias FMA.
        y, s, ss = matmul_stats(patches, w2d, tile_m=tile_m)
        mean = s / M                                  # zero-padded rows add 0
        var = jnp.maximum(ss / M - mean * mean, 0.0)  # biased (training mode)
        g = jnp.pad(gamma, (0, OCp - OC), constant_values=1.0)
        b = jnp.pad(beta, (0, OCp - OC))
        scale = g * jax.lax.rsqrt(var + eps)
        bias = b - mean * scale
        y = scale_bias_lrelu(y, scale[None, :], bias[None, :], tile_m=tile_m)

    return y[:M, :OC].reshape(N, OH, OW, OC)          # NHWC, no transpose


# -----------------------------------------------------------------------------
# Discriminator: parameters + forward
# -----------------------------------------------------------------------------
def init_discriminator_params(key, ndf, nc):
    ks = jax.random.split(key, 5)

    def conv_w(k, oc, ic):
        return 0.02 * jax.random.normal(k, (oc, ic, 4, 4), jnp.float32)

    def bn(c):
        return jnp.ones((c,), jnp.float32), jnp.zeros((c,), jnp.float32)

    g2, b2 = bn(ndf * 2)
    g3, b3 = bn(ndf * 4)
    g4, b4 = bn(ndf * 8)
    return {
        "w1": conv_w(ks[0], ndf, nc),
        "w2": conv_w(ks[1], ndf * 2, ndf), "g2": g2, "b2": b2,
        "w3": conv_w(ks[2], ndf * 4, ndf * 2), "g3": g3, "b3": b3,
        "w4": conv_w(ks[3], ndf * 8, ndf * 4), "g4": g4, "b4": b4,
        "w5": conv_w(ks[4], 1, ndf * 8),
    }


def discriminator_forward(params, image, mask=None, mask_sizes=()):
    # mask_sizes=() -> all mask branches disabled (m4=m8=m16=m32=0).
    m32, m16, m8, m4 = (int(s in mask_sizes) for s in (32, 16, 8, 4))

    x = jnp.transpose(image, (0, 2, 3, 1))            # single NCHW -> NHWC
    x = conv_block(x, params["w1"], act="leaky", stride=2, pad=1)
    if m32:
        x = jnp.concatenate((x, jnp.transpose(mask[4], (0, 2, 3, 1))), axis=-1)
    x = conv_block(x, params["w2"], params["g2"], params["b2"],
                   act="leaky", stride=2, pad=1)
    if m16:
        x = jnp.concatenate((x, jnp.transpose(mask[3], (0, 2, 3, 1))), axis=-1)
    x = conv_block(x, params["w3"], params["g3"], params["b3"],
                   act="leaky", stride=2, pad=1)
    if m8:
        x = jnp.concatenate((x, jnp.transpose(mask[2], (0, 2, 3, 1))), axis=-1)
    x = conv_block(x, params["w4"], params["g4"], params["b4"],
                   act="leaky", stride=2, pad=1)
    if m4:
        x = jnp.concatenate((x, jnp.transpose(mask[1], (0, 2, 3, 1))), axis=-1)
    x = conv_block(x, params["w5"], act="sigmoid", stride=1, pad=0)
    return jnp.transpose(x, (0, 3, 1, 2))             # (N, 1, 1, 1)


# -----------------------------------------------------------------------------
if __name__ == "__main__":
    key = jax.random.PRNGKey(0)
    k_params, k_img = jax.random.split(key)

    ndf, nc, batch = 8, 3, 2
    # DCGAN discriminator geometry requires 64x64 input (64->32->16->8->4->1).
    image = jax.random.normal(k_img, (batch, nc, 64, 64), jnp.float32)
    params = init_discriminator_params(k_params, ndf, nc)

    fwd = jax.jit(lambda p, img: discriminator_forward(p, img))
    out = jax.block_until_ready(fwd(params, image))

    assert out.shape == (batch, 1, 1, 1), out.shape
    assert bool(jnp.all(jnp.isfinite(out)))
    assert bool(jnp.all((out >= 0.0) & (out <= 1.0)))
    print("KERNEL_OK")
</pallas_src>

<mosaic_0001>
module attributes {stable_mosaic.version = 11 : i64} {
  func.func @_matmul_act_kernel(%arg0: i32, %arg1: memref<512x128xbf16, #tpu.memory_space<vmem>>, %arg2: memref<128x128xbf16, #tpu.memory_space<vmem>>, %arg3: memref<512x128xf32, #tpu.memory_space<vmem>>) attributes {dimension_semantics = [#tpu.dimension_semantics<parallel>], iteration_bounds = array<i64: 4>, scalar_prefetch = 0 : i64, scratch_operands = 0 : i64, tpu.core_type = #tpu.core_type<tc>, window_params = [{transform_indices = @transform_0, window_bounds = array<i64: 512, 128>}, {pipeline_mode = #tpu.pipeline_mode<synchronous>, transform_indices = @transform_1, window_bounds = array<i64: 128, 128>}, {transform_indices = @transform_2, window_bounds = array<i64: 512, 128>}]} {
    %c0 = arith.constant 0 : index
    %c0_0 = arith.constant 0 : index
    %0 = vector.load %arg1[%c0, %c0_0] : memref<512x128xbf16, #tpu.memory_space<vmem>>, vector<512x128xbf16>
    %c0_1 = arith.constant 0 : index
    %c0_2 = arith.constant 0 : index
    %1 = vector.load %arg2[%c0_1, %c0_2] : memref<128x128xbf16, #tpu.memory_space<vmem>>, vector<128x128xbf16>
    %cst = arith.constant dense<0.000000e+00> : vector<512x128xf32>
    %2 = tpu.matmul %0, %1, %cst {dimension_numbers = #tpu.dot_dimension_numbers<[1], [0], [0], [1], [0, 0, 1, 1], [], []>} : vector<512x128xbf16>, vector<128x128xbf16>, vector<512x128xf32> -> vector<512x128xf32>
    %cst_3 = arith.constant 0.000000e+00 : f32
    %3 = vector.broadcast %cst_3 : f32 to vector<512x128xf32>
    %4 = arith.cmpf ogt, %2, %3 : vector<512x128xf32>
    %cst_4 = arith.constant 2.000000e-01 : f32
    %5 = vector.broadcast %cst_4 : f32 to vector<512x128xf32>
    %6 = arith.mulf %5, %2 : vector<512x128xf32>
    %7 = arith.select %4, %2, %6 : vector<512x128xi1>, vector<512x128xf32>
    %c0_5 = arith.constant 0 : index
    %c0_6 = arith.constant 0 : index
    %8 = vector.load %arg3[%c0_5, %c0_6] : memref<512x128xf32, #tpu.memory_space<vmem>>, vector<512x128xf32>
    tpu.vector_store %arg3[%c0_5, %c0_6], %7 {strides = array<i32>} : memref<512x128xf32, #tpu.memory_space<vmem>>, vector<512x128xf32>,
    return
  }
  func.func @transform_0(%arg0: i32) -> (i32, i32) {
    %c0_i32 = arith.constant 0 : i32
    %c0_i32_0 = arith.constant 0 : i32
    return %arg0, %c0_i32 : i32, i32
  }
  func.func @transform_1(%arg0: i32) -> (i32, i32) {
    %c0_i32 = arith.constant 0 : i32
    %c0_i32_0 = arith.constant 0 : i32
    %c0_i32_1 = arith.constant 0 : i32
    return %c0_i32, %c0_i32_0 : i32, i32
  }
  func.func @transform_2(%arg0: i32) -> (i32, i32) {
    %c0_i32 = arith.constant 0 : i32
    %c0_i32_0 = arith.constant 0 : i32
    return %arg0, %c0_i32 : i32, i32
  }
}

module attributes {stable_mosaic.version = 11 : i64} {
  func.func @_matmul_stats_kernel(%arg0: i32, %arg1: memref<512x128xbf16, #tpu.memory_space<vmem>>, %arg2: memref<128x128xbf16, #tpu.memory_space<vmem>>, %arg3: memref<512x128xf32, #tpu.memory_space<vmem>>, %arg4: memref<8x128xf32, #tpu.memory_space<vmem>>, %arg5: memref<8x128xf32, #tpu.memory_space<vmem>>) attributes {dimension_semantics = [#tpu.dimension_semantics<arbitrary>], iteration_bounds = array<i64: 1>, scalar_prefetch = 0 : i64, scratch_operands = 0 : i64, tpu.core_type = #tpu.core_type<tc>, window_params = [{transform_indices = @transform_0, window_bounds = array<i64: 512, 128>}, {pipeline_mode = #tpu.pipeline_mode<synchronous>, transform_indices = @transform_1, window_bounds = array<i64: 128, 128>}, {transform_indices = @transform_2, window_bounds = array<i64: 512, 128>}, {pipeline_mode = #tpu.pipeline_mode<synchronous>, transform_indices = @transform_3, window_bounds = array<i64: 8, 128>}, {pipeline_mode = #tpu.pipeline_mode<synchronous>, transform_indices = @transform_4, window_bounds = array<i64: 8, 128>}]} {
    %c0 = arith.constant 0 : index
    %c0_0 = arith.constant 0 : index
    %0 = vector.load %arg1[%c0, %c0_0] : memref<512x128xbf16, #tpu.memory_space<vmem>>, vector<512x128xbf16>
    %c0_1 = arith.constant 0 : index
    %c0_2 = arith.constant 0 : index
    %1 = vector.load %arg2[%c0_1, %c0_2] : memref<128x128xbf16, #tpu.memory_space<vmem>>, vector<128x128xbf16>
    %cst = arith.constant dense<0.000000e+00> : vector<512x128xf32>
    %2 = tpu.matmul %0, %1, %cst {dimension_numbers = #tpu.dot_dimension_numbers<[1], [0], [0], [1], [0, 0, 1, 1], [], []>} : vector<512x128xbf16>, vector<128x128xbf16>, vector<512x128xf32> -> vector<512x128xf32>
    %c0_3 = arith.constant 0 : index
    %c0_4 = arith.constant 0 : index
    %3 = vector.load %arg3[%c0_3, %c0_4] : memref<512x128xf32, #tpu.memory_space<vmem>>, vector<512x128xf32>
    tpu.vector_store %arg3[%c0_3, %c0_4], %2 {strides = array<i32>} : memref<512x128xf32, #tpu.memory_space<vmem>>, vector<512x128xf32>,
    %c0_i32 = arith.constant 0 : i32
    %4 = arith.cmpi eq, %arg0, %c0_i32 : i32
    %5 = arith.extui %4 : i1 to i32
    %c0_i32_5 = arith.constant 0 : i32
    %6 = arith.cmpi ne, %5, %c0_i32_5 : i32
    scf.if %6 {
      %cst_16 = arith.constant 0.000000e+00 : f32
      %20 = vector.broadcast %cst_16 : f32 to vector<8x128xf32>
      %c0_17 = arith.constant 0 : index
      %c0_18 = arith.constant 0 : index
      %21 = vector.load %arg4[%c0_17, %c0_18] : memref<8x128xf32, #tpu.memory_space<vmem>>, vector<8x128xf32>
      tpu.vector_store %arg4[%c0_17, %c0_18], %20 {strides = array<i32>} : memref<8x128xf32, #tpu.memory_space<vmem>>, vector<8x128xf32>,
      %cst_19 = arith.constant 0.000000e+00 : f32
      %22 = vector.broadcast %cst_19 : f32 to vector<8x128xf32>
      %c0_20 = arith.constant 0 : index
      %c0_21 = arith.constant 0 : index
      %23 = vector.load %arg5[%c0_20, %c0_21] : memref<8x128xf32, #tpu.memory_space<vmem>>, vector<8x128xf32>
      tpu.vector_store %arg5[%c0_20, %c0_21], %22 {strides = array<i32>} : memref<8x128xf32, #tpu.memory_space<vmem>>, vector<8x128xf32>,
    } else {
    }
    %c0_6 = arith.constant 0 : index
    %c0_7 = arith.constant 0 : index
    %7 = vector.load %arg4[%c0_6, %c0_7] : memref<8x128xf32, #tpu.memory_space<vmem>>, vector<8x128xf32>
    %cst_8 = arith.constant dense<0.000000e+00> : vector<128xf32>
    %8 = vector.multi_reduction <add>, %2, %cst_8 [0] : vector<512x128xf32> to vector<128xf32>
    %9 = vector.shape_cast %8 : vector<128xf32> to vector<1x128xf32>
    %10 = vector.broadcast %9 : vector<1x128xf32> to vector<8x128xf32>
    %11 = arith.addf %7, %10 : vector<8x128xf32>
    %c0_9 = arith.constant 0 : index
    %c0_10 = arith.constant 0 : index
    %12 = vector.load %arg4[%c0_9, %c0_10] : memref<8x128xf32, #tpu.memory_space<vmem>>, vector<8x128xf32>
    tpu.vector_store %arg4[%c0_9, %c0_10], %11 {strides = array<i32>} : memref<8x128xf32, #tpu.memory_space<vmem>>, vector<8x128xf32>,
    %c0_11 = arith.constant 0 : index
    %c0_12 = arith.constant 0 : index
    %13 = vector.load %arg5[%c0_11, %c0_12] : memref<8x128xf32, #tpu.memory_space<vmem>>, vector<8x128xf32>
    %14 = arith.mulf %2, %2 : vector<512x128xf32>
    %cst_13 = arith.constant dense<0.000000e+00> : vector<128xf32>
    %15 = vector.multi_reduction <add>, %14, %cst_13 [0] : vector<512x128xf32> to vector<128xf32>
    %16 = vector.shape_cast %15 : vector<128xf32> to vector<1x128xf32>
    %17 = vector.broadcast %16 : vector<1x128xf32> to vector<8x128xf32>
    %18 = arith.addf %13, %17 : vector<8x128xf32>
    %c0_14 = arith.constant 0 : index
    %c0_15 = arith.constant 0 : index
    %19 = vector.load %arg5[%c0_14, %c0_15] : memref<8x128xf32, #tpu.memory_space<vmem>>, vector<8x128xf32>
    tpu.vector_store %arg5[%c0_14, %c0_15], %18 {strides = array<i32>} : memref<8x128xf32, #tpu.memory_space<vmem>>, vector<8x128xf32>,
    return
  }
  func.func @transform_0(%arg0: i32) -> (i32, i32) {
    %c0_i32 = arith.constant 0 : i32
    %c0_i32_0 = arith.constant 0 : i32
    return %arg0, %c0_i32 : i32, i32
  }
  func.func @transform_1(%arg0: i32) -> (i32, i32) {
    %c0_i32 = arith.constant 0 : i32
    %c0_i32_0 = arith.constant 0 : i32
    %c0_i32_1 = arith.constant 0 : i32
    return %c0_i32, %c0_i32_0 : i32, i32
  }
  func.func @transform_2(%arg0: i32) -> (i32, i32) {
    %c0_i32 = arith.constant 0 : i32
    %c0_i32_0 = arith.constant 0 : i32
    return %arg0, %c0_i32 : i32, i32
  }
  func.func @transform_3(%arg0: i32) -> (i32, i32) {
    %c0_i32 = arith.constant 0 : i32
    %c0_i32_0 = arith.constant 0 : i32
    %c0_i32_1 = arith.constant 0 : i32
    return %c0_i32, %c0_i32_0 : i32, i32
  }
  func.func @transform_4(%arg0: i32) -> (i32, i32) {
    %c0_i32 = arith.constant 0 : i32
    %c0_i32_0 = arith.constant 0 : i32
    %c0_i32_1 = arith.constant 0 : i32
    return %c0_i32, %c0_i32_0 : i32, i32
  }
}

module attributes {stable_mosaic.version = 11 : i64} {
  func.func @_scale_bias_lrelu_kernel(%arg0: i32, %arg1: memref<512x128xf32, #tpu.memory_space<vmem>>, %arg2: memref<1x128xf32, #tpu.memory_space<vmem>>, %arg3: memref<1x128xf32, #tpu.memory_space<vmem>>, %arg4: memref<512x128xf32, #tpu.memory_space<vmem>>) attributes {dimension_semantics = [#tpu.dimension_semantics<parallel>], iteration_bounds = array<i64: 1>, scalar_prefetch = 0 : i64, scratch_operands = 0 : i64, tpu.core_type = #tpu.core_type<tc>, window_params = [{transform_indices = @transform_0, window_bounds = array<i64: 512, 128>}, {pipeline_mode = #tpu.pipeline_mode<synchronous>, transform_indices = @transform_1, window_bounds = array<i64: 1, 128>}, {pipeline_mode = #tpu.pipeline_mode<synchronous>, transform_indices = @transform_2, window_bounds = array<i64: 1, 128>}, {transform_indices = @transform_3, window_bounds = array<i64: 512, 128>}]} {
    %c0 = arith.constant 0 : index
    %c0_0 = arith.constant 0 : index
    %0 = vector.load %arg1[%c0, %c0_0] : memref<512x128xf32, #tpu.memory_space<vmem>>, vector<512x128xf32>
    %c0_1 = arith.constant 0 : index
    %c0_2 = arith.constant 0 : index
    %1 = vector.load %arg2[%c0_1, %c0_2] : memref<1x128xf32, #tpu.memory_space<vmem>>, vector<1x128xf32>
    %2 = vector.broadcast %1 : vector<1x128xf32> to vector<512x128xf32>
    %3 = arith.mulf %0, %2 : vector<512x128xf32>
    %c0_3 = arith.constant 0 : index
    %c0_4 = arith.constant 0 : index
    %4 = vector.load %arg3[%c0_3, %c0_4] : memref<1x128xf32, #tpu.memory_space<vmem>>, vector<1x128xf32>
    %5 = vector.broadcast %4 : vector<1x128xf32> to vector<512x128xf32>
    %6 = arith.addf %3, %5 : vector<512x128xf32>
    %cst = arith.constant 0.000000e+00 : f32
    %7 = vector.broadcast %cst : f32 to vector<512x128xf32>
    %8 = arith.cmpf ogt, %6, %7 : vector<512x128xf32>
    %cst_5 = arith.constant 2.000000e-01 : f32
    %9 = vector.broadcast %cst_5 : f32 to vector<512x128xf32>
    %10 = arith.mulf %9, %6 : vector<512x128xf32>
    %11 = arith.select %8, %6, %10 : vector<512x128xi1>, vector<512x128xf32>
    %c0_6 = arith.constant 0 : index
    %c0_7 = arith.constant 0 : index
    %12 = vector.load %arg4[%c0_6, %c0_7] : memref<512x128xf32, #tpu.memory_space<vmem>>, vector<512x128xf32>
    tpu.vector_store %arg4[%c0_6, %c0_7], %11 {strides = array<i32>} : memref<512x128xf32, #tpu.memory_space<vmem>>, vector<512x128xf32>,
    return
  }
  func.func @transform_0(%arg0: i32) -> (i32, i32) {
    %c0_i32 = arith.constant 0 : i32
    %c0_i32_0 = arith.constant 0 : i32
    return %arg0, %c0_i32 : i32, i32
  }
  func.func @transform_1(%arg0: i32) -> (i32, i32) {
    %c0_i32 = arith.constant 0 : i32
    %c0_i32_0 = arith.constant 0 : i32
    %c0_i32_1 = arith.constant 0 : i32
    return %c0_i32, %c0_i32_0 : i32, i32
  }
  func.func @transform_2(%arg0: i32) -> (i32, i32) {
    %c0_i32 = arith.constant 0 : i32
    %c0_i32_0 = arith.constant 0 : i32
    %c0_i32_1 = arith.constant 0 : i32
    return %c0_i32, %c0_i32_0 : i32, i32
  }
  func.func @transform_3(%arg0: i32) -> (i32, i32) {
    %c0_i32 = arith.constant 0 : i32
    %c0_i32_0 = arith.constant 0 : i32
    return %arg0, %c0_i32 : i32, i32
  }
}

module attributes {stable_mosaic.version = 11 : i64} {
  func.func @_matmul_stats_kernel(%arg0: i32, %arg1: memref<128x256xbf16, #tpu.memory_space<vmem>>, %arg2: memref<256x128xbf16, #tpu.memory_space<vmem>>, %arg3: memref<128x128xf32, #tpu.memory_space<vmem>>, %arg4: memref<8x128xf32, #tpu.memory_space<vmem>>, %arg5: memref<8x128xf32, #tpu.memory_space<vmem>>) attributes {dimension_semantics = [#tpu.dimension_semantics<arbitrary>], iteration_bounds = array<i64: 1>, scalar_prefetch = 0 : i64, scratch_operands = 0 : i64, tpu.core_type = #tpu.core_type<tc>, window_params = [{transform_indices = @transform_0, window_bounds = array<i64: 128, 256>}, {pipeline_mode = #tpu.pipeline_mode<synchronous>, transform_indices = @transform_1, window_bounds = array<i64: 256, 128>}, {transform_indices = @transform_2, window_bounds = array<i64: 128, 128>}, {pipeline_mode = #tpu.pipeline_mode<synchronous>, transform_indices = @transform_3, window_bounds = array<i64: 8, 128>}, {pipeline_mode = #tpu.pipeline_mode<synchronous>, transform_indices = @transform_4, window_bounds = array<i64: 8, 128>}]} {
    %c0 = arith.constant 0 : index
    %c0_0 = arith.constant 0 : index
    %0 = vector.load %arg1[%c0, %c0_0] : memref<128x256xbf16, #tpu.memory_space<vmem>>, vector<128x256xbf16>
    %c0_1 = arith.constant 0 : index
    %c0_2 = arith.constant 0 : index
    %1 = vector.load %arg2[%c0_1, %c0_2] : memref<256x128xbf16, #tpu.memory_space<vmem>>, vector<256x128xbf16>
    %cst = arith.constant dense<0.000000e+00> : vector<128x128xf32>
    %2 = tpu.matmul %0, %1, %cst {dimension_numbers = #tpu.dot_dimension_numbers<[1], [0], [0], [1], [0, 0, 1, 1], [], []>} : vector<128x256xbf16>, vector<256x128xbf16>, vector<128x128xf32> -> vector<128x128xf32>
    %c0_3 = arith.constant 0 : index
    %c0_4 = arith.constant 0 : index
    %3 = vector.load %arg3[%c0_3, %c0_4] : memref<128x128xf32, #tpu.memory_space<vmem>>, vector<128x128xf32>
    tpu.vector_store %arg3[%c0_3, %c0_4], %2 {strides = array<i32>} : memref<128x128xf32, #tpu.memory_space<vmem>>, vector<128x128xf32>,
    %c0_i32 = arith.constant 0 : i32
    %4 = arith.cmpi eq, %arg0, %c0_i32 : i32
    %5 = arith.extui %4 : i1 to i32
    %c0_i32_5 = arith.constant 0 : i32
    %6 = arith.cmpi ne, %5, %c0_i32_5 : i32
    scf.if %6 {
      %cst_16 = arith.constant 0.000000e+00 : f32
      %20 = vector.broadcast %cst_16 : f32 to vector<8x128xf32>
      %c0_17 = arith.constant 0 : index
      %c0_18 = arith.constant 0 : index
      %21 = vector.load %arg4[%c0_17, %c0_18] : memref<8x128xf32, #tpu.memory_space<vmem>>, vector<8x128xf32>
      tpu.vector_store %arg4[%c0_17, %c0_18], %20 {strides = array<i32>} : memref<8x128xf32, #tpu.memory_space<vmem>>, vector<8x128xf32>,
      %cst_19 = arith.constant 0.000000e+00 : f32
      %22 = vector.broadcast %cst_19 : f32 to vector<8x128xf32>
      %c0_20 = arith.constant 0 : index
      %c0_21 = arith.constant 0 : index
      %23 = vector.load %arg5[%c0_20, %c0_21] : memref<8x128xf32, #tpu.memory_space<vmem>>, vector<8x128xf32>
      tpu.vector_store %arg5[%c0_20, %c0_21], %22 {strides = array<i32>} : memref<8x128xf32, #tpu.memory_space<vmem>>, vector<8x128xf32>,
    } else {
    }
    %c0_6 = arith.constant 0 : index
    %c0_7 = arith.constant 0 : index
    %7 = vector.load %arg4[%c0_6, %c0_7] : memref<8x128xf32, #tpu.memory_space<vmem>>, vector<8x128xf32>
    %cst_8 = arith.constant dense<0.000000e+00> : vector<128xf32>
    %8 = vector.multi_reduction <add>, %2, %cst_8 [0] : vector<128x128xf32> to vector<128xf32>
    %9 = vector.shape_cast %8 : vector<128xf32> to vector<1x128xf32>
    %10 = vector.broadcast %9 : vector<1x128xf32> to vector<8x128xf32>
    %11 = arith.addf %7, %10 : vector<8x128xf32>
    %c0_9 = arith.constant 0 : index
    %c0_10 = arith.constant 0 : index
    %12 = vector.load %arg4[%c0_9, %c0_10] : memref<8x128xf32, #tpu.memory_space<vmem>>, vector<8x128xf32>
    tpu.vector_store %arg4[%c0_9, %c0_10], %11 {strides = array<i32>} : memref<8x128xf32, #tpu.memory_space<vmem>>, vector<8x128xf32>,
    %c0_11 = arith.constant 0 : index
    %c0_12 = arith.constant 0 : index
    %13 = vector.load %arg5[%c0_11, %c0_12] : memref<8x128xf32, #tpu.memory_space<vmem>>, vector<8x128xf32>
    %14 = arith.mulf %2, %2 : vector<128x128xf32>
    %cst_13 = arith.constant dense<0.000000e+00> : vector<128xf32>
    %15 = vector.multi_reduction <add>, %14, %cst_13 [0] : vector<128x128xf32> to vector<128xf32>
    %16 = vector.shape_cast %15 : vector<128xf32> to vector<1x128xf32>
    %17 = vector.broadcast %16 : vector<1x128xf32> to vector<8x128xf32>
    %18 = arith.addf %13, %17 : vector<8x128xf32>
    %c0_14 = arith.constant 0 : index
    %c0_15 = arith.constant 0 : index
    %19 = vector.load %arg5[%c0_14, %c0_15] : memref<8x128xf32, #tpu.memory_space<vmem>>, vector<8x128xf32>
    tpu.vector_store %arg5[%c0_14, %c0_15], %18 {strides = array<i32>} : memref<8x128xf32, #tpu.memory_space<vmem>>, vector<8x128xf32>,
    return
  }
  func.func @transform_0(%arg0: i32) -> (i32, i32) {
    %c0_i32 = arith.constant 0 : i32
    %c0_i32_0 = arith.constant 0 : i32
    return %arg0, %c0_i32 : i32, i32
  }
  func.func @transform_1(%arg0: i32) -> (i32, i32) {
    %c0_i32 = arith.constant 0 : i32
    %c0_i32_0 = arith.constant 0 : i32
    %c0_i32_1 = arith.constant 0 : i32
    return %c0_i32, %c0_i32_0 : i32, i32
  }
  func.func @transform_2(%arg0: i32) -> (i32, i32) {
    %c0_i32 = arith.constant 0 : i32
    %c0_i32_0 = arith.constant 0 : i32
    return %arg0, %c0_i32 : i32, i32
  }
  func.func @transform_3(%arg0: i32) -> (i32, i32) {
    %c0_i32 = arith.constant 0 : i32
    %c0_i32_0 = arith.constant 0 : i32
    %c0_i32_1 = arith.constant 0 : i32
    return %c0_i32, %c0_i32_0 : i32, i32
  }
  func.func @transform_4(%arg0: i32) -> (i32, i32) {
    %c0_i32 = arith.constant 0 : i32
    %c0_i32_0 = arith.constant 0 : i32
    %c0_i32_1 = arith.constant 0 : i32
    return %c0_i32, %c0_i32_0 : i32, i32
  }
}

module attributes {stable_mosaic.version = 11 : i64} {
  func.func @_scale_bias_lrelu_kernel(%arg0: i32, %arg1: memref<128x128xf32, #tpu.memory_space<vmem>>, %arg2: memref<1x128xf32, #tpu.memory_space<vmem>>, %arg3: memref<1x128xf32, #tpu.memory_space<vmem>>, %arg4: memref<128x128xf32, #tpu.memory_space<vmem>>) attributes {dimension_semantics = [#tpu.dimension_semantics<parallel>], iteration_bounds = array<i64: 1>, scalar_prefetch = 0 : i64, scratch_operands = 0 : i64, tpu.core_type = #tpu.core_type<tc>, window_params = [{transform_indices = @transform_0, window_bounds = array<i64: 128, 128>}, {pipeline_mode = #tpu.pipeline_mode<synchronous>, transform_indices = @transform_1, window_bounds = array<i64: 1, 128>}, {pipeline_mode = #tpu.pipeline_mode<synchronous>, transform_indices = @transform_2, window_bounds = array<i64: 1, 128>}, {transform_indices = @transform_3, window_bounds = array<i64: 128, 128>}]} {
    %c0 = arith.constant 0 : index
    %c0_0 = arith.constant 0 : index
    %0 = vector.load %arg1[%c0, %c0_0] : memref<128x128xf32, #tpu.memory_space<vmem>>, vector<128x128xf32>
    %c0_1 = arith.constant 0 : index
    %c0_2 = arith.constant 0 : index
    %1 = vector.load %arg2[%c0_1, %c0_2] : memref<1x128xf32, #tpu.memory_space<vmem>>, vector<1x128xf32>
    %2 = vector.broadcast %1 : vector<1x128xf32> to vector<128x128xf32>
    %3 = arith.mulf %0, %2 : vector<128x128xf32>
    %c0_3 = arith.constant 0 : index
    %c0_4 = arith.constant 0 : index
    %4 = vector.load %arg3[%c0_3, %c0_4] : memref<1x128xf32, #tpu.memory_space<vmem>>, vector<1x128xf32>
    %5 = vector.broadcast %4 : vector<1x128xf32> to vector<128x128xf32>
    %6 = arith.addf %3, %5 : vector<128x128xf32>
    %cst = arith.constant 0.000000e+00 : f32
    %7 = vector.broadcast %cst : f32 to vector<128x128xf32>
    %8 = arith.cmpf ogt, %6, %7 : vector<128x128xf32>
    %cst_5 = arith.constant 2.000000e-01 : f32
    %9 = vector.broadcast %cst_5 : f32 to vector<128x128xf32>
    %10 = arith.mulf %9, %6 : vector<128x128xf32>
    %11 = arith.select %8, %6, %10 : vector<128x128xi1>, vector<128x128xf32>
    %c0_6 = arith.constant 0 : index
    %c0_7 = arith.constant 0 : index
    %12 = vector.load %arg4[%c0_6, %c0_7] : memref<128x128xf32, #tpu.memory_space<vmem>>, vector<128x128xf32>
    tpu.vector_store %arg4[%c0_6, %c0_7], %11 {strides = array<i32>} : memref<128x128xf32, #tpu.memory_space<vmem>>, vector<128x128xf32>,
    return
  }
  func.func @transform_0(%arg0: i32) -> (i32, i32) {
    %c0_i32 = arith.constant 0 : i32
    %c0_i32_0 = arith.constant 0 : i32
    return %arg0, %c0_i32 : i32, i32
  }
  func.func @transform_1(%arg0: i32) -> (i32, i32) {
    %c0_i32 = arith.constant 0 : i32
    %c0_i32_0 = arith.constant 0 : i32
    %c0_i32_1 = arith.constant 0 : i32
    return %c0_i32, %c0_i32_0 : i32, i32
  }
  func.func @transform_2(%arg0: i32) -> (i32, i32) {
    %c0_i32 = arith.constant 0 : i32
    %c0_i32_0 = arith.constant 0 : i32
    %c0_i32_1 = arith.constant 0 : i32
    return %c0_i32, %c0_i32_0 : i32, i32
  }
  func.func @transform_3(%arg0: i32) -> (i32, i32) {
    %c0_i32 = arith.constant 0 : i32
    %c0_i32_0 = arith.constant 0 : i32
    return %arg0, %c0_i32 : i32, i32
  }
}

module attributes {stable_mosaic.version = 11 : i64} {
  func.func @_matmul_stats_kernel(%arg0: i32, %arg1: memref<32x512xbf16, #tpu.memory_space<vmem>>, %arg2: memref<512x128xbf16, #tpu.memory_space<vmem>>, %arg3: memref<32x128xf32, #tpu.memory_space<vmem>>, %arg4: memref<8x128xf32, #tpu.memory_space<vmem>>, %arg5: memref<8x128xf32, #tpu.memory_space<vmem>>) attributes {dimension_semantics = [#tpu.dimension_semantics<arbitrary>], iteration_bounds = array<i64: 1>, scalar_prefetch = 0 : i64, scratch_operands = 0 : i64, tpu.core_type = #tpu.core_type<tc>, window_params = [{transform_indices = @transform_0, window_bounds = array<i64: 32, 512>}, {pipeline_mode = #tpu.pipeline_mode<synchronous>, transform_indices = @transform_1, window_bounds = array<i64: 512, 128>}, {transform_indices = @transform_2, window_bounds = array<i64: 32, 128>}, {pipeline_mode = #tpu.pipeline_mode<synchronous>, transform_indices = @transform_3, window_bounds = array<i64: 8, 128>}, {pipeline_mode = #tpu.pipeline_mode<synchronous>, transform_indices = @transform_4, window_bounds = array<i64: 8, 128>}]} {
    %c0 = arith.constant 0 : index
    %c0_0 = arith.constant 0 : index
    %0 = vector.load %arg1[%c0, %c0_0] : memref<32x512xbf16, #tpu.memory_space<vmem>>, vector<32x512xbf16>
    %c0_1 = arith.constant 0 : index
    %c0_2 = arith.constant 0 : index
    %1 = vector.load %arg2[%c0_1, %c0_2] : memref<512x128xbf16, #tpu.memory_space<vmem>>, vector<512x128xbf16>
    %cst = arith.constant dense<0.000000e+00> : vector<32x128xf32>
    %2 = tpu.matmul %0, %1, %cst {dimension_numbers = #tpu.dot_dimension_numbers<[1], [0], [0], [1], [0, 0, 1, 1], [], []>} : vector<32x512xbf16>, vector<512x128xbf16>, vector<32x128xf32> -> vector<32x128xf32>
    %c0_3 = arith.constant 0 : index
    %c0_4 = arith.constant 0 : index
    %3 = vector.load %arg3[%c0_3, %c0_4] : memref<32x128xf32, #tpu.memory_space<vmem>>, vector<32x128xf32>
    tpu.vector_store %arg3[%c0_3, %c0_4], %2 {strides = array<i32>} : memref<32x128xf32, #tpu.memory_space<vmem>>, vector<32x128xf32>,
    %c0_i32 = arith.constant 0 : i32
    %4 = arith.cmpi eq, %arg0, %c0_i32 : i32
    %5 = arith.extui %4 : i1 to i32
    %c0_i32_5 = arith.constant 0 : i32
    %6 = arith.cmpi ne, %5, %c0_i32_5 : i32
    scf.if %6 {
      %cst_16 = arith.constant 0.000000e+00 : f32
      %20 = vector.broadcast %cst_16 : f32 to vector<8x128xf32>
      %c0_17 = arith.constant 0 : index
      %c0_18 = arith.constant 0 : index
      %21 = vector.load %arg4[%c0_17, %c0_18] : memref<8x128xf32, #tpu.memory_space<vmem>>, vector<8x128xf32>
      tpu.vector_store %arg4[%c0_17, %c0_18], %20 {strides = array<i32>} : memref<8x128xf32, #tpu.memory_space<vmem>>, vector<8x128xf32>,
      %cst_19 = arith.constant 0.000000e+00 : f32
      %22 = vector.broadcast %cst_19 : f32 to vector<8x128xf32>
      %c0_20 = arith.constant 0 : index
      %c0_21 = arith.constant 0 : index
      %23 = vector.load %arg5[%c0_20, %c0_21] : memref<8x128xf32, #tpu.memory_space<vmem>>, vector<8x128xf32>
      tpu.vector_store %arg5[%c0_20, %c0_21], %22 {strides = array<i32>} : memref<8x128xf32, #tpu.memory_space<vmem>>, vector<8x128xf32>,
    } else {
    }
    %c0_6 = arith.constant 0 : index
    %c0_7 = arith.constant 0 : index
    %7 = vector.load %arg4[%c0_6, %c0_7] : memref<8x128xf32, #tpu.memory_space<vmem>>, vector<8x128xf32>
    %cst_8 = arith.constant dense<0.000000e+00> : vector<128xf32>
    %8 = vector.multi_reduction <add>, %2, %cst_8 [0] : vector<32x128xf32> to vector<128xf32>
    %9 = vector.shape_cast %8 : vector<128xf32> to vector<1x128xf32>
    %10 = vector.broadcast %9 : vector<1x128xf32> to vector<8x128xf32>
    %11 = arith.addf %7, %10 : vector<8x128xf32>
    %c0_9 = arith.constant 0 : index
    %c0_10 = arith.constant 0 : index
    %12 = vector.load %arg4[%c0_9, %c0_10] : memref<8x128xf32, #tpu.memory_space<vmem>>, vector<8x128xf32>
    tpu.vector_store %arg4[%c0_9, %c0_10], %11 {strides = array<i32>} : memref<8x128xf32, #tpu.memory_space<vmem>>, vector<8x128xf32>,
    %c0_11 = arith.constant 0 : index
    %c0_12 = arith.constant 0 : index
    %13 = vector.load %arg5[%c0_11, %c0_12] : memref<8x128xf32, #tpu.memory_space<vmem>>, vector<8x128xf32>
    %14 = arith.mulf %2, %2 : vector<32x128xf32>
    %cst_13 = arith.constant dense<0.000000e+00> : vector<128xf32>
    %15 = vector.multi_reduction <add>, %14, %cst_13 [0] : vector<32x128xf32> to vector<128xf32>
    %16 = vector.shape_cast %15 : vector<128xf32> to vector<1x128xf32>
    %17 = vector.broadcast %16 : vector<1x128xf32> to vector<8x128xf32>
    %18 = arith.addf %13, %17 : vector<8x128xf32>
    %c0_14 = arith.constant 0 : index
    %c0_15 = arith.constant 0 : index
    %19 = vector.load %arg5[%c0_14, %c0_15] : memref<8x128xf32, #tpu.memory_space<vmem>>, vector<8x128xf32>
    tpu.vector_store %arg5[%c0_14, %c0_15], %18 {strides = array<i32>} : memref<8x128xf32, #tpu.memory_space<vmem>>, vector<8x128xf32>,
    return
  }
  func.func @transform_0(%arg0: i32) -> (i32, i32) {
    %c0_i32 = arith.constant 0 : i32
    %c0_i32_0 = arith.constant 0 : i32
    return %arg0, %c0_i32 : i32, i32
  }
  func.func @transform_1(%arg0: i32) -> (i32, i32) {
    %c0_i32 = arith.constant 0 : i32
    %c0_i32_0 = arith.constant 0 : i32
    %c0_i32_1 = arith.constant 0 : i32
    return %c0_i32, %c0_i32_0 : i32, i32
  }
  func.func @transform_2(%arg0: i32) -> (i32, i32) {
    %c0_i32 = arith.constant 0 : i32
    %c0_i32_0 = arith.constant 0 : i32
    return %arg0, %c0_i32 : i32, i32
  }
  func.func @transform_3(%arg0: i32) -> (i32, i32) {
    %c0_i32 = arith.constant 0 : i32
    %c0_i32_0 = arith.constant 0 : i32
    %c0_i32_1 = arith.constant 0 : i32
    return %c0_i32, %c0_i32_0 : i32, i32
  }
  func.func @transform_4(%arg0: i32) -> (i32, i32) {
    %c0_i32 = arith.constant 0 : i32
    %c0_i32_0 = arith.constant 0 : i32
    %c0_i32_1 = arith.constant 0 : i32
    return %c0_i32, %c0_i32_0 : i32, i32
  }
}

module attributes {stable_mosaic.version = 11 : i64} {
  func.func @_scale_bias_lrelu_kernel(%arg0: i32, %arg1: memref<32x128xf32, #tpu.memory_space<vmem>>, %arg2: memref<1x128xf32, #tpu.memory_space<vmem>>, %arg3: memref<1x128xf32, #tpu.memory_space<vmem>>, %arg4: memref<32x128xf32, #tpu.memory_space<vmem>>) attributes {dimension_semantics = [#tpu.dimension_semantics<parallel>], iteration_bounds = array<i64: 1>, scalar_prefetch = 0 : i64, scratch_operands = 0 : i64, tpu.core_type = #tpu.core_type<tc>, window_params = [{transform_indices = @transform_0, window_bounds = array<i64: 32, 128>}, {pipeline_mode = #tpu.pipeline_mode<synchronous>, transform_indices = @transform_1, window_bounds = array<i64: 1, 128>}, {pipeline_mode = #tpu.pipeline_mode<synchronous>, transform_indices = @transform_2, window_bounds = array<i64: 1, 128>}, {transform_indices = @transform_3, window_bounds = array<i64: 32, 128>}]} {
    %c0 = arith.constant 0 : index
    %c0_0 = arith.constant 0 : index
    %0 = vector.load %arg1[%c0, %c0_0] : memref<32x128xf32, #tpu.memory_space<vmem>>, vector<32x128xf32>
    %c0_1 = arith.constant 0 : index
    %c0_2 = arith.constant 0 : index
    %1 = vector.load %arg2[%c0_1, %c0_2] : memref<1x128xf32, #tpu.memory_space<vmem>>, vector<1x128xf32>
    %2 = vector.broadcast %1 : vector<1x128xf32> to vector<32x128xf32>
    %3 = arith.mulf %0, %2 : vector<32x128xf32>
    %c0_3 = arith.constant 0 : index
    %c0_4 = arith.constant 0 : index
    %4 = vector.load %arg3[%c0_3, %c0_4] : memref<1x128xf32, #tpu.memory_space<vmem>>, vector<1x128xf32>
    %5 = vector.broadcast %4 : vector<1x128xf32> to vector<32x128xf32>
    %6 = arith.addf %3, %5 : vector<32x128xf32>
    %cst = arith.constant 0.000000e+00 : f32
    %7 = vector.broadcast %cst : f32 to vector<32x128xf32>
    %8 = arith.cmpf ogt, %6, %7 : vector<32x128xf32>
    %cst_5 = arith.constant 2.000000e-01 : f32
    %9 = vector.broadcast %cst_5 : f32 to vector<32x128xf32>
    %10 = arith.mulf %9, %6 : vector<32x128xf32>
    %11 = arith.select %8, %6, %10 : vector<32x128xi1>, vector<32x128xf32>
    %c0_6 = arith.constant 0 : index
    %c0_7 = arith.constant 0 : index
    %12 = vector.load %arg4[%c0_6, %c0_7] : memref<32x128xf32, #tpu.memory_space<vmem>>, vector<32x128xf32>
    tpu.vector_store %arg4[%c0_6, %c0_7], %11 {strides = array<i32>} : memref<32x128xf32, #tpu.memory_space<vmem>>, vector<32x128xf32>,
    return
  }
  func.func @transform_0(%arg0: i32) -> (i32, i32) {
    %c0_i32 = arith.constant 0 : i32
    %c0_i32_0 = arith.constant 0 : i32
    return %arg0, %c0_i32 : i32, i32
  }
  func.func @transform_1(%arg0: i32) -> (i32, i32) {
    %c0_i32 = arith.constant 0 : i32
    %c0_i32_0 = arith.constant 0 : i32
    %c0_i32_1 = arith.constant 0 : i32
    return %c0_i32, %c0_i32_0 : i32, i32
  }
  func.func @transform_2(%arg0: i32) -> (i32, i32) {
    %c0_i32 = arith.constant 0 : i32
    %c0_i32_0 = arith.constant 0 : i32
    %c0_i32_1 = arith.constant 0 : i32
    return %c0_i32, %c0_i32_0 : i32, i32
  }
  func.func @transform_3(%arg0: i32) -> (i32, i32) {
    %c0_i32 = arith.constant 0 : i32
    %c0_i32_0 = arith.constant 0 : i32
    return %arg0, %c0_i32 : i32, i32
  }
}

module attributes {stable_mosaic.version = 11 : i64} {
  func.func @_matmul_act_kernel(%arg0: i32, %arg1: memref<8x1024xbf16, #tpu.memory_space<vmem>>, %arg2: memref<1024x128xbf16, #tpu.memory_space<vmem>>, %arg3: memref<8x128xf32, #tpu.memory_space<vmem>>) attributes {dimension_semantics = [#tpu.dimension_semantics<parallel>], iteration_bounds = array<i64: 1>, scalar_prefetch = 0 : i64, scratch_operands = 0 : i64, tpu.core_type = #tpu.core_type<tc>, window_params = [{transform_indices = @transform_0, window_bounds = array<i64: 8, 1024>}, {pipeline_mode = #tpu.pipeline_mode<synchronous>, transform_indices = @transform_1, window_bounds = array<i64: 1024, 128>}, {transform_indices = @transform_2, window_bounds = array<i64: 8, 128>}]} {
    %c0 = arith.constant 0 : index
    %c0_0 = arith.constant 0 : index
    %0 = vector.load %arg1[%c0, %c0_0] : memref<8x1024xbf16, #tpu.memory_space<vmem>>, vector<8x1024xbf16>
    %c0_1 = arith.constant 0 : index
    %c0_2 = arith.constant 0 : index
    %1 = vector.load %arg2[%c0_1, %c0_2] : memref<1024x128xbf16, #tpu.memory_space<vmem>>, vector<1024x128xbf16>
    %cst = arith.constant dense<0.000000e+00> : vector<8x128xf32>
    %2 = tpu.matmul %0, %1, %cst {dimension_numbers = #tpu.dot_dimension_numbers<[1], [0], [0], [1], [0, 0, 1, 1], [], []>} : vector<8x1024xbf16>, vector<1024x128xbf16>, vector<8x128xf32> -> vector<8x128xf32>
    %3 = math.absf %2 : vector<8x128xf32>
    %cst_3 = arith.constant 0.000000e+00 : f32
    %4 = vector.broadcast %cst_3 : f32 to vector<8x128xf32>
    %5 = arith.subf %4, %3 : vector<8x128xf32>
    %6 = math.exp %5 : vector<8x128xf32>
    %cst_4 = arith.constant 0.000000e+00 : f32
    %7 = vector.broadcast %cst_4 : f32 to vector<8x128xf32>
    %8 = arith.cmpf oge, %2, %7 : vector<8x128xf32>
    %cst_5 = arith.constant 1.000000e+00 : f32
    %9 = vector.broadcast %cst_5 : f32 to vector<8x128xf32>
    %10 = arith.addf %9, %6 : vector<8x128xf32>
    %cst_6 = arith.constant 1.000000e+00 : f32
    %11 = vector.broadcast %cst_6 : f32 to vector<8x128xf32>
    %12 = arith.divf %11, %10 : vector<8x128xf32>
    %cst_7 = arith.constant 1.000000e+00 : f32
    %13 = vector.broadcast %cst_7 : f32 to vector<8x128xf32>
    %14 = arith.addf %13, %6 : vector<8x128xf32>
    %15 = arith.divf %6, %14 : vector<8x128xf32>
    %16 = arith.select %8, %12, %15 : vector<8x128xi1>, vector<8x128xf32>
    %c0_8 = arith.constant 0 : index
    %c0_9 = arith.constant 0 : index
    %17 = vector.load %arg3[%c0_8, %c0_9] : memref<8x128xf32, #tpu.memory_space<vmem>>, vector<8x128xf32>
    tpu.vector_store %arg3[%c0_8, %c0_9], %16 {strides = array<i32>} : memref<8x128xf32, #tpu.memory_space<vmem>>, vector<8x128xf32>,
    return
  }
  func.func @transform_0(%arg0: i32) -> (i32, i32) {
    %c0_i32 = arith.constant 0 : i32
    %c0_i32_0 = arith.constant 0 : i32
    return %arg0, %c0_i32 : i32, i32
  }
  func.func @transform_1(%arg0: i32) -> (i32, i32) {
    %c0_i32 = arith.constant 0 : i32
    %c0_i32_0 = arith.constant 0 : i32
    %c0_i32_1 = arith.constant 0 : i32
    return %c0_i32, %c0_i32_0 : i32, i32
  }
  func.func @transform_2(%arg0: i32) -> (i32, i32) {
    %c0_i32 = arith.constant 0 : i32
    %c0_i32_0 = arith.constant 0 : i32
    return %arg0, %c0_i32 : i32, i32
  }
}

</mosaic_0001>

<llo_original>
// kernel: _lambda_.8
$region0: #{_lambda_.8}
  #allocation0 [shape = 'u32[]', space=smem, size = 0x4, offset = 0x4, fixed_abs, tag = 'smem constant byte address 0x4 - core index']
  #allocation1 [shape = 'u32[144,128]{1,0:T(1,128)}', space=vmem, size = 0x12000, scoped, tag = 'internal scratch']
  %s0 = inlined_call_operand.vmem [shape: bf16[2048,128], index: 0, kind: input, shape index: {}]
  %s1 = inlined_call_operand.vmem [shape: bf16[128,128], index: 1, kind: input, shape index: {}]
  %s2 = inlined_call_operand.vmem [shape: f32[2048,128], index: 2, kind: output, shape index: {}]
  %s3 = sld [smem:[#allocation0]]
  $region41: #{_lambda_.8} parent=0
    _
  %s5 = ssub.s32 1, %s3
  %s6 = scalar_select 0, %s5, %s3
  loop: start=0, step=1, limit=6
  $region2: #{_lambda_.8} parent=0 // loop_pre_header
    _
  $region3: #{_lambda_.8} parent=0 // loop_header
    %s8 = sphi 0, %s12
    %p9 = scmp.ge.s32.totalorder %s8, 6
    %s18 = sphi 0, %s20
    %s21 = sphi 0, %s18
    %s22 = sphi 0, %s21
    %s38 = sphi 0, %s22
    %s42 = sphi 0, %s42
    %s44 = sphi 0, %s42
    %s45 = sphi 0, %s44
    %s59 = sphi 0, %s45
    %s65 = sphi 0, %s67
    %s68 = sphi 0, %s65
    %s69 = sphi 0, %s68
    %s85 = sphi 0, %s69
  $region4: #{_lambda_.8} parent=0 // loop_header_branch
    %11 = sbr.rel (%p9) target = $region8
  $region5: #{_lambda_.8} parent=0 // loop_body
    %s13 = ssub.s32 %s8, 1
    %s14 = ssub.s32 %s8, 2
    %s15 = sadd.s32 %s8, 1
    %s16 = ssub.s32 %s8, %s15
    %p17 = scmp.eq.s32.totalorder %s16, 0
    %s19 = sadd.s32 %s18, 1
    %s20 = scalar_select %p17, %s18, %s19
    %p23 = pneg %p17
    %p24 = scmp.eq.s32.totalorder %s8, 3
    %p25 = por %p23, %p24
    %p26 = scmp.ne.s32.totalorder %s18, %s21
    %p27 = scmp.eq.s32.totalorder %s8, 0
    %p28 = por %p26, %p27
    %p29 = scmp.ne.s32.totalorder %s18, %s21
    %p30 = scmp.eq.s32.totalorder %s13, 3
    %p31 = por %p29, %p30
    %p32 = scmp.ne.s32.totalorder %s21, %s22
    %p33 = scmp.eq.s32.totalorder %s13, 0
    %p34 = por %p32, %p33
    %p35 = scmp.ne.s32.totalorder %s21, %s22
    %p36 = scmp.eq.s32.totalorder %s14, 3
    %p37 = por %p35, %p36
    %p39 = scmp.ne.s32.totalorder %s22, %s38
    %p40 = scmp.eq.s32.totalorder %s14, 0
    %p41 = por %p39, %p40
    %s43 = sadd.s32 %s42, 1
    %p46 = scmp.eq.s32.totalorder %s8, 3
    %p47 = scmp.ne.s32.totalorder %s42, %s44
    %p48 = scmp.eq.s32.totalorder %s8, 0
    %p49 = por %p47, %p48
    %p50 = scmp.ne.s32.totalorder %s42, %s44
    %p51 = scmp.eq.s32.totalorder %s13, 3
    %p52 = por %p50, %p51
    %p53 = scmp.ne.s32.totalorder %s44, %s45
    %p54 = scmp.eq.s32.totalorder %s13, 0
    %p55 = por %p53, %p54
    %p56 = scmp.ne.s32.totalorder %s44, %s45
    %p57 = scmp.eq.s32.totalorder %s14, 3
    %p58 = por %p56, %p57
    %p60 = scmp.ne.s32.totalorder %s45, %s59
    %p61 = scmp.eq.s32.totalorder %s14, 0
    %p62 = por %p60, %p61
    %s63 = ssub.s32 %s8, %s15
    %p64 = scmp.eq.s32.totalorder %s63, 0
    %s66 = sadd.s32 %s65, 1
    %s67 = scalar_select %p64, %s65, %s66
    %p70 = pneg %p64
    %p71 = scmp.eq.s32.totalorder %s8, 3
    %p72 = por %p70, %p71
    %p73 = scmp.ne.s32.totalorder %s65, %s68
    %p74 = scmp.eq.s32.totalorder %s8, 0
    %p75 = por %p73, %p74
    %p76 = scmp.ne.s32.totalorder %s65, %s68
    %p77 = scmp.eq.s32.totalorder %s13, 3
    %p78 = por %p76, %p77
    %p79 = scmp.ne.s32.totalorder %s68, %s69
    %p80 = scmp.eq.s32.totalorder %s13, 0
    %p81 = por %p79, %p80
    %p82 = scmp.ne.s32.totalorder %s68, %s69
    %p83 = scmp.eq.s32.totalorder %s14, 3
    %p84 = por %p82, %p83
    %p86 = scmp.ne.s32.totalorder %s69, %s85
    %p87 = scmp.eq.s32.totalorder %s14, 0
    %p88 = por %p86, %p87
    %p89 = scmp.le.s32.totalorder 1, %s8
    %p90 = scmp.lt.s32.totalorder %s8, 5
    %p91 = pnand %p89, %p90
    %p92 = pneg %p91
    // Predicated region
    $region9: #{_lambda_.8} parent=5 // pred_check
      _
    $region10: #{_lambda_.8} parent=5 // pred_check_branch
      %94 = sbr.rel (%p91) target = $region12
    $region11: #{_lambda_.8} parent=5 // pred_region
      %s95 = ssub.s32 %s8, 1
      // Predicated region
      $region13: #{_lambda_.8} parent=11 // pred_check
        %p96 = pneg %p55
      $region14: #{_lambda_.8} parent=11 // pred_check_branch
        %98 = sbr.rel (%p96) target = $region16
      $region15: #{_lambda_.8} parent=11 // pred_region
        _
      $region16: #{_lambda_.8} parent=11 // pred_fallthru
        _
    $region12: #{_lambda_.8} parent=5 // pred_fallthru
      _
    %p99 = scmp.lt.s32.totalorder %s8, 4
    // Predicated region
    $region17: #{_lambda_.8} parent=5 // pred_check
      %p100 = pneg %p99
    $region18: #{_lambda_.8} parent=5 // pred_check_branch
      %102 = sbr.rel (%p100) target = $region20
    $region19: #{_lambda_.8} parent=5 // pred_region
      // Predicated region
      $region21: #{_lambda_.8} parent=19 // pred_check
        %p103 = pneg %p28
      $region22: #{_lambda_.8} parent=19 // pred_check_branch
        %105 = sbr.rel (%p103) target = $region24
      $region23: #{_lambda_.8} parent=19 // pred_region
        %s106 = smul.u32 64, %s8
        %p107 = scmp.lt.s32.totalorder %s106, 255
        %s108 = scalar_select %p107, %s106, 255
        %s109 = smul.addr %s108, 4
        %s110 = scalar_lea.vmem %s0, %s109
        %s111 = smul.u32 64, %s8
      $region24: #{_lambda_.8} parent=19 // pred_fallthru
        _
    $region20: #{_lambda_.8} parent=5 // pred_fallthru
      _
    %p112 = scmp.le.s32.totalorder 1, %s8
    %p113 = scmp.lt.s32.totalorder %s8, 5
    %p114 = pnand %p112, %p113
    %p115 = pneg %p114
    // Predicated region
    $region25: #{_lambda_.8} parent=5 // pred_check
      _
    $region26: #{_lambda_.8} parent=5 // pred_check_branch
      %117 = sbr.rel (%p114) target = $region28
    $region27: #{_lambda_.8} parent=5 // pred_region
      %s118 = ssub.s32 %s8, 1
      %s119 = smul.u32 64, %s13
      %p120 = scmp.lt.s32.totalorder %s119, 255
      %s121 = scalar_select %p120, %s119, 255
      %s122 = smul.addr %s121, 4
      %s123 = scalar_lea.vmem %s0, %s122
      %p124 = pneg %p34
      %p125 = pneg %p31
      %p126 = pneg %p55
      %p127 = pneg %p52
      %p128 = pneg %p81
      %p129 = pneg %p78
      %s130 = smul.u32 64, %s13
      %p131 = scmp.lt.s32.totalorder %s130, 255
      %s132 = scalar_select %p131, %s130, 255
      %s133 = smul.addr %s132, 8
      %s134 = scalar_lea.vmem %s2, %s133
      %s135 = smul.u32 64, %s13
      %p136 = scmp.lt.s32.totalorder %s135, 255
      %s137 = scalar_select %p136, %s135, 255
      %s138 = smul.addr %s137, 4
      %s139 = scalar_lea.vmem %s0, %s138
      %s140 = smul.u32 64, %s13
      %s141 = smul.u32 64, %s13
      %p142 = scmp.lt.s32.totalorder %s141, 255
      %s143 = scalar_select %p142, %s141, 255
      %s144 = smul.addr %s143, 8
      %s145 = scalar_lea.vmem %s2, %s144
      %s146 = smul.u32 64, %s13
      %v148 = vld [vmem:[%s139] sm:$0xf]
      %v149 = vld [vmem:[%s139 + $0x4] sm:$0xf]
      %v150 = vld [vmem:[%s139 + $0x8] sm:$0xf]
      %v151 = vld [vmem:[%s139 + $0xc] sm:$0xf]
      %v152 = vld [vmem:[%s139 + $0x10] sm:$0xf]
      %v153 = vld [vmem:[%s139 + $0x14] sm:$0xf]
      %v154 = vld [vmem:[%s139 + $0x18] sm:$0xf]
      %v155 = vld [vmem:[%s139 + $0x1c] sm:$0xf]
      %v156 = vld [vmem:[%s139 + $0x20] sm:$0xf]
      %v157 = vld [vmem:[%s139 + $0x24] sm:$0xf]
      %v158 = vld [vmem:[%s139 + $0x28] sm:$0xf]
      %v159 = vld [vmem:[%s139 + $0x2c] sm:$0xf]
      %v160 = vld [vmem:[%s139 + $0x30] sm:$0xf]
      %v161 = vld [vmem:[%s139 + $0x34] sm:$0xf]
      %v162 = vld [vmem:[%s139 + $0x38] sm:$0xf]
      %v163 = vld [vmem:[%s139 + $0x3c] sm:$0xf]
      %v164 = vld [vmem:[%s139 + $0x40] sm:$0xf]
      %v165 = vld [vmem:[%s139 + $0x44] sm:$0xf]
      %v166 = vld [vmem:[%s139 + $0x48] sm:$0xf]
      %v167 = vld [vmem:[%s139 + $0x4c] sm:$0xf]
      %v168 = vld [vmem:[%s139 + $0x50] sm:$0xf]
      %v169 = vld [vmem:[%s139 + $0x54] sm:$0xf]
      %v170 = vld [vmem:[%s139 + $0x58] sm:$0xf]
      %v171 = vld [vmem:[%s139 + $0x5c] sm:$0xf]
      %v172 = vld [vmem:[%s139 + $0x60] sm:$0xf]
      %v173 = vld [vmem:[%s139 + $0x64] sm:$0xf]
      %v174 = vld [vmem:[%s139 + $0x68] sm:$0xf]
      %v175 = vld [vmem:[%s139 + $0x6c] sm:$0xf]
      %v176 = vld [vmem:[%s139 + $0x70] sm:$0xf]
      %v177 = vld [vmem:[%s139 + $0x74] sm:$0xf]
      %v178 = vld [vmem:[%s139 + $0x78] sm:$0xf]
      %v179 = vld [vmem:[%s139 + $0x7c] sm:$0xf]
      %v180 = vld [vmem:[%s139 + $0x80] sm:$0xf]
      %v181 = vld [vmem:[%s139 + $0x84] sm:$0xf]
      %v182 = vld [vmem:[%s139 + $0x88] sm:$0xf]
      %v183 = vld [vmem:[%s139 + $0x8c] sm:$0xf]
      %v184 = vld [vmem:[%s139 + $0x90] sm:$0xf]
      %v185 = vld [vmem:[%s139 + $0x94] sm:$0xf]
      %v186 = vld [vmem:[%s139 + $0x98] sm:$0xf]
      %v187 = vld [vmem:[%s139 + $0x9c] sm:$0xf]
      %v188 = vld [vmem:[%s139 + $0xa0] sm:$0xf]
      %v189 = vld [vmem:[%s139 + $0xa4] sm:$0xf]
      %v190 = vld [vmem:[%s139 + $0xa8] sm:$0xf]
      %v191 = vld [vmem:[%s139 + $0xac] sm:$0xf]
      %v192 = vld [vmem:[%s139 + $0xb0] sm:$0xf]
      %v193 = vld [vmem:[%s139 + $0xb4] sm:$0xf]
      %v194 = vld [vmem:[%s139 + $0xb8] sm:$0xf]
      %v195 = vld [vmem:[%s139 + $0xbc] sm:$0xf]
      %v196 = vld [vmem:[%s139 + $0xc0] sm:$0xf]
      %v197 = vld [vmem:[%s139 + $0xc4] sm:$0xf]
      %v198 = vld [vmem:[%s139 + $0xc8] sm:$0xf]
      %v199 = vld [vmem:[%s139 + $0xcc] sm:$0xf]
      %v200 = vld [vmem:[%s139 + $0xd0] sm:$0xf]
      %v201 = vld [vmem:[%s139 + $0xd4] sm:$0xf]
      %v202 = vld [vmem:[%s139 + $0xd8] sm:$0xf]
      %v203 = vld [vmem:[%s139 + $0xdc] sm:$0xf]
      %v204 = vld [vmem:[%s139 + $0xe0] sm:$0xf]
      %v205 = vld [vmem:[%s139 + $0xe4] sm:$0xf]
      %v206 = vld [vmem:[%s139 + $0xe8] sm:$0xf]
      %v207 = vld [vmem:[%s139 + $0xec] sm:$0xf]
      %v208 = vld [vmem:[%s139 + $0xf0] sm:$0xf]
      %v209 = vld [vmem:[%s139 + $0xf4] sm:$0xf]
      %v210 = vld [vmem:[%s139 + $0xf8] sm:$0xf]
      %v211 = vld [vmem:[%s139 + $0xfc] sm:$0xf]
      %v212 = vld [vmem:[%s1] sm:$0xf]
      %v213 = vld [vmem:[%s1 + $0x4] sm:$0xf]
      %v214 = vld [vmem:[%s1 + $0x8] sm:$0xf]
      %v215 = vld [vmem:[%s1 + $0xc] sm:$0xf]
      %v216 = vld [vmem:[%s1 + $0x10] sm:$0xf]
      %v217 = vld [vmem:[%s1 + $0x14] sm:$0xf]
      %v218 = vld [vmem:[%s1 + $0x18] sm:$0xf]
      %v219 = vld [vmem:[%s1 + $0x1c] sm:$0xf]
      %v220 = vld [vmem:[%s1 + $0x20] sm:$0xf]
      %v221 = vld [vmem:[%s1 + $0x24] sm:$0xf]
      %v222 = vld [vmem:[%s1 + $0x28] sm:$0xf]
      %v223 = vld [vmem:[%s1 + $0x2c] sm:$0xf]
      %v224 = vld [vmem:[%s1 + $0x30] sm:$0xf]
      %v225 = vld [vmem:[%s1 + $0x34] sm:$0xf]
      %v226 = vld [vmem:[%s1 + $0x38] sm:$0xf]
      %v227 = vld [vmem:[%s1 + $0x3c] sm:$0xf]
      %v292 = vunpack.c.l.b16 %v148
      %v293 = vunpack.c.l.b16 %v149
      %v294 = vunpack.c.l.b16 %v150
      %v295 = vunpack.c.l.b16 %v151
      %v296 = vunpack.c.l.b16 %v152
      %v297 = vunpack.c.l.b16 %v153
      %v298 = vunpack.c.l.b16 %v154
      %v299 = vunpack.c.l.b16 %v155
      %v300 = vunpack.c.l.b16 %v156
      %v301 = vunpack.c.l.b16 %v157
      %v302 = vunpack.c.l.b16 %v158
      %v303 = vunpack.c.l.b16 %v159
      %v304 = vunpack.c.l.b16 %v160
      %v305 = vunpack.c.l.b16 %v161
      %v306 = vunpack.c.l.b16 %v162
      %v307 = vunpack.c.l.b16 %v163
      %v308 = vunpack.c.l.b16 %v164
      %v309 = vunpack.c.l.b16 %v165
      %v310 = vunpack.c.l.b16 %v166
      %v311 = vunpack.c.l.b16 %v167
      %v312 = vunpack.c.l.b16 %v168
      %v313 = vunpack.c.l.b16 %v169
      %v314 = vunpack.c.l.b16 %v170
      %v315 = vunpack.c.l.b16 %v171
      %v316 = vunpack.c.l.b16 %v172
      %v317 = vunpack.c.l.b16 %v173
      %v318 = vunpack.c.l.b16 %v174
      %v319 = vunpack.c.l.b16 %v175
      %v320 = vunpack.c.l.b16 %v176
      %v321 = vunpack.c.l.b16 %v177
      %v322 = vunpack.c.l.b16 %v178
      %v323 = vunpack.c.l.b16 %v179
      %v324 = vunpack.c.l.b16 %v180
      %v325 = vunpack.c.l.b16 %v181
      %v326 = vunpack.c.l.b16 %v182
      %v327 = vunpack.c.l.b16 %v183
      %v328 = vunpack.c.l.b16 %v184
      %v329 = vunpack.c.l.b16 %v185
      %v330 = vunpack.c.l.b16 %v186
      %v331 = vunpack.c.l.b16 %v187
      %v332 = vunpack.c.l.b16 %v188
      %v333 = vunpack.c.l.b16 %v189
      %v334 = vunpack.c.l.b16 %v190
      %v335 = vunpack.c.l.b16 %v191
      %v336 = vunpack.c.l.b16 %v192
      %v337 = vunpack.c.l.b16 %v193
      %v338 = vunpack.c.l.b16 %v194
      %v339 = vunpack.c.l.b16 %v195
      %v340 = vunpack.c.l.b16 %v196
      %v341 = vunpack.c.l.b16 %v197
      %v342 = vunpack.c.l.b16 %v198
      %v343 = vunpack.c.l.b16 %v199
      %v344 = vunpack.c.l.b16 %v200
      %v345 = vunpack.c.l.b16 %v201
      %v346 = vunpack.c.l.b16 %v202
      %v347 = vunpack.c.l.b16 %v203
      %v348 = vunpack.c.l.b16 %v204
      %v349 = vunpack.c.l.b16 %v205
      %v350 = vunpack.c.l.b16 %v206
      %v351 = vunpack.c.l.b16 %v207
      %v352 = vunpack.c.l.b16 %v208
      %v353 = vunpack.c.l.b16 %v209
      %v354 = vunpack.c.l.b16 %v210
      %v355 = vunpack.c.l.b16 %v211
      %v356 = vpack.c.b16 %v293, %v292
      %v357 = vpack.c.b16 %v295, %v294
      %v358 = vpack.c.b16 %v297, %v296
      %v359 = vpack.c.b16 %v299, %v298
      %v360 = vpack.c.b16 %v301, %v300
      %v361 = vpack.c.b16 %v303, %v302
      %v362 = vpack.c.b16 %v305, %v304
      %v363 = vpack.c.b16 %v307, %v306
      %v364 = vpack.c.b16 %v309, %v308
      %v365 = vpack.c.b16 %v311, %v310
      %v366 = vpack.c.b16 %v313, %v312
      %v367 = vpack.c.b16 %v315, %v314
      %v368 = vpack.c.b16 %v317, %v316
      %v369 = vpack.c.b16 %v319, %v318
      %v370 = vpack.c.b16 %v321, %v320
      %v371 = vpack.c.b16 %v323, %v322
      %v372 = vpack.c.b16 %v325, %v324
      %v373 = vpack.c.b16 %v327, %v326
      %v374 = vpack.c.b16 %v329, %v328
      %v375 = vpack.c.b16 %v331, %v330
      %v376 = vpack.c.b16 %v333, %v332
      %v377 = vpack.c.b16 %v335, %v334
      %v378 = vpack.c.b16 %v337, %v336
      %v379 = vpack.c.b16 %v339, %v338
      %v380 = vpack.c.b16 %v341, %v340
      %v381 = vpack.c.b16 %v343, %v342
      %v382 = vpack.c.b16 %v345, %v344
      %v383 = vpack.c.b16 %v347, %v346
      %v384 = vpack.c.b16 %v349, %v348
      %v385 = vpack.c.b16 %v351, %v350
      %v386 = vpack.c.b16 %v353, %v352
      %v387 = vpack.c.b16 %v355, %v354
      %v436 = vunpack.c.l.b16 %v212
      %v437 = vunpack.c.l.b16 %v213
      %v438 = vunpack.c.l.b16 %v214
      %v439 = vunpack.c.l.b16 %v215
      %v440 = vunpack.c.l.b16 %v216
      %v441 = vunpack.c.l.b16 %v217
      %v442 = vunpack.c.l.b16 %v218
      %v443 = vunpack.c.l.b16 %v219
      %v444 = vunpack.c.l.b16 %v220
      %v445 = vunpack.c.l.b16 %v221
      %v446 = vunpack.c.l.b16 %v222
      %v447 = vunpack.c.l.b16 %v223
      %v448 = vunpack.c.l.b16 %v224
      %v449 = vunpack.c.l.b16 %v225
      %v450 = vunpack.c.l.b16 %v226
      %v451 = vunpack.c.l.b16 %v227
      %v452 = vpack.c.b16 %v437, %v436
      %v453 = vpack.c.b16 %v439, %v438
      %v454 = vpack.c.b16 %v441, %v440
      %v455 = vpack.c.b16 %v443, %v442
      %v456 = vpack.c.b16 %v445, %v444
      %v457 = vpack.c.b16 %v447, %v446
      %v458 = vpack.c.b16 %v449, %v448
      %v459 = vpack.c.b16 %v451, %v450
      %468 = vmatprep.subr.bf16.mxu0 0
      %469 = vmatpush1.bf16.msra.mxu0 %v452
      %470 = vmatprep.subr.bf16.mxu0 0
      %471 = vmatpush1.bf16.msra.mxu0 %v453
      %472 = vmatprep.subr.bf16.mxu0 0
      %473 = vmatpush1.bf16.msra.mxu0 %v454
      %474 = vmatprep.subr.bf16.mxu0 0
      %475 = vmatpush1.bf16.msra.mxu0 %v455
      %476 = vmatprep.subr.bf16.mxu0 0
      %477 = vmatpush1.bf16.msra.mxu0 %v456
      %478 = vmatprep.subr.bf16.mxu0 0
      %479 = vmatpush1.bf16.msra.mxu0 %v457
      %480 = vmatprep.subr.bf16.mxu0 0
      %481 = vmatpush1.bf16.msra.mxu0 %v458
      %482 = vmatprep.subr.bf16.mxu0 0
      %483 = vmatpush1.bf16.msra.mxu0 %v459
      %484 = vmatprep.subr.bf16.mxu0 0
      %485 = vmatpush1.bf16.msra.mxu0 0
      %486 = vmatprep.subr.bf16.mxu0 0
      %487 = vmatpush1.bf16.msra.mxu0 0
      %488 = vmatprep.subr.bf16.mxu0 0
      %489 = vmatpush1.bf16.msra.mxu0 0
      %490 = vmatprep.subr.bf16.mxu0 0
      %491 = vmatpush1.bf16.msra.mxu0 0
      %492 = vmatprep.subr.bf16.mxu0 0
      %493 = vmatpush1.bf16.msra.mxu0 0
      %494 = vmatprep.subr.bf16.mxu0 0
      %495 = vmatpush1.bf16.msra.mxu0 0
      %496 = vmatprep.subr.bf16.mxu0 0
      %497 = vmatpush1.bf16.msra.mxu0 0
      %498 = vmatprep.subr.bf16.mxu0 0
      %499 = vmatpush1.bf16.msra.mxu0 0
      %500 = vmatprep.mubr.bf16.mxu0 0
      %501 = vmatmul.mubr.bf16.gmra.mrb[0].mxu0 %v356
      %v502 = vpop.f32.mrb[0].mxu0
      %v503 = vadd.f32 0.0, %v502
      %v504 = vpop.f32.mrb[0].mxu0
      %v505 = vpop.f32.mrb[0].mxu0
      %v506 = vadd.f32 0.0, %v505
      %v507 = vpop.f32.mrb[0].mxu0
      %508 = vmatprep.mubr.bf16.mxu0 0
      %509 = vmatmul.mubr.bf16.gmra.mrb[0].mxu0 %v357
      %v510 = vpop.f32.mrb[0].mxu0
      %v511 = vadd.f32 0.0, %v510
      %v512 = vpop.f32.mrb[0].mxu0
      %v513 = vpop.f32.mrb[0].mxu0
      %v514 = vadd.f32 0.0, %v513
      %v515 = vpop.f32.mrb[0].mxu0
      %516 = vmatprep.mubr.bf16.mxu0 0
      %517 = vmatmul.mubr.bf16.gmra.mrb[0].mxu0 %v358
      %v518 = vpop.f32.mrb[0].mxu0
      %v519 = vadd.f32 0.0, %v518
      %v520 = vpop.f32.mrb[0].mxu0
      %v521 = vpop.f32.mrb[0].mxu0
      %v522 = vadd.f32 0.0, %v521
      %v523 = vpop.f32.mrb[0].mxu0
      %524 = vmatprep.mubr.bf16.mxu0 0
      %525 = vmatmul.mubr.bf16.gmra.mrb[0].mxu0 %v359
      %v526 = vpop.f32.mrb[0].mxu0
      %v527 = vadd.f32 0.0, %v526
      %v528 = vpop.f32.mrb[0].mxu0
      %v529 = vpop.f32.mrb[0].mxu0
      %v530 = vadd.f32 0.0, %v529
      %v531 = vpop.f32.mrb[0].mxu0
      %532 = vmatprep.mubr.bf16.mxu0 0
      %533 = vmatmul.mubr.bf16.gmra.mrb[0].mxu0 %v360
      %v534 = vpop.f32.mrb[0].mxu0
      %v535 = vadd.f32 0.0, %v534
      %v536 = vpop.f32.mrb[0].mxu0
      %v537 = vpop.f32.mrb[0].mxu0
      %v538 = vadd.f32 0.0, %v537
      %v539 = vpop.f32.mrb[0].mxu0
      %540 = vmatprep.mubr.bf16.mxu0 0
      %541 = vmatmul.mubr.bf16.gmra.mrb[0].mxu0 %v361
      %v542 = vpop.f32.mrb[0].mxu0
      %v543 = vadd.f32 0.0, %v542
      %v544 = vpop.f32.mrb[0].mxu0
      %v545 = vpop.f32.mrb[0].mxu0
      %v546 = vadd.f32 0.0, %v545
      %v547 = vpop.f32.mrb[0].mxu0
      %548 = vmatprep.mubr.bf16.mxu0 0
      %549 = vmatmul.mubr.bf16.gmra.mrb[0].mxu0 %v362
      %v550 = vpop.f32.mrb[0].mxu0
      %v551 = vadd.f32 0.0, %v550
      %v552 = vpop.f32.mrb[0].mxu0
      %v553 = vpop.f32.mrb[0].mxu0
      %v554 = vadd.f32 0.0, %v553
      %v555 = vpop.f32.mrb[0].mxu0
      %556 = vmatprep.mubr.bf16.mxu0 0
      %557 = vmatmul.mubr.bf16.gmra.mrb[0].mxu0 %v363
      %v558 = vpop.f32.mrb[0].mxu0
      %v559 = vadd.f32 0.0, %v558
      %v560 = vpop.f32.mrb[0].mxu0
      %v561 = vpop.f32.mrb[0].mxu0
      %v562 = vadd.f32 0.0, %v561
      %v563 = vpop.f32.mrb[0].mxu0
      %564 = vmatprep.mubr.bf16.mxu0 0
      %565 = vmatmul.mubr.bf16.gmra.mrb[0].mxu0 %v364
      %v566 = vpop.f32.mrb[0].mxu0
      %v567 = vadd.f32 0.0, %v566
      %v568 = vpop.f32.mrb[0].mxu0
      %v569 = vpop.f32.mrb[0].mxu0
      %v570 = vadd.f32 0.0, %v569
      %v571 = vpop.f32.mrb[0].mxu0
      %572 = vmatprep.mubr.bf16.mxu0 0
      %573 = vmatmul.mubr.bf16.gmra.mrb[0].mxu0 %v365
      %v574 = vpop.f32.mrb[0].mxu0
      %v575 = vadd.f32 0.0, %v574
      %v576 = vpop.f32.mrb[0].mxu0
      %v577 = vpop.f32.mrb[0].mxu0
      %v578 = vadd.f32 0.0, %v577
      %v579 = vpop.f32.mrb[0].mxu0
      %580 = vmatprep.mubr.bf16.mxu0 0
      %581 = vmatmul.mubr.bf16.gmra.mrb[0].mxu0 %v366
      %v582 = vpop.f32.mrb[0].mxu0
      %v583 = vadd.f32 0.0, %v582
      %v584 = vpop.f32.mrb[0].mxu0
      %v585 = vpop.f32.mrb[0].mxu0
      %v586 = vadd.f32 0.0, %v585
      %v587 = vpop.f32.mrb[0].mxu0
      %588 = vmatprep.mubr.bf16.mxu0 0
      %589 = vmatmul.mubr.bf16.gmra.mrb[0].mxu0 %v367
      %v590 = vpop.f32.mrb[0].mxu0
      %v591 = vadd.f32 0.0, %v590
      %v592 = vpop.f32.mrb[0].mxu0
      %v593 = vpop.f32.mrb[0].mxu0
      %v594 = vadd.f32 0.0, %v593
      %v595 = vpop.f32.mrb[0].mxu0
      %596 = vmatprep.mubr.bf16.mxu0 0
      %597 = vmatmul.mubr.bf16.gmra.mrb[0].mxu0 %v368
      %v598 = vpop.f32.mrb[0].mxu0
      %v599 = vadd.f32 0.0, %v598
      %v600 = vpop.f32.mrb[0].mxu0
      %v601 = vpop.f32.mrb[0].mxu0
      %v602 = vadd.f32 0.0, %v601
      %v603 = vpop.f32.mrb[0].mxu0
      %604 = vmatprep.mubr.bf16.mxu0 0
      %605 = vmatmul.mubr.bf16.gmra.mrb[0].mxu0 %v369
      %v606 = vpop.f32.mrb[0].mxu0
      %v607 = vadd.f32 0.0, %v606
      %v608 = vpop.f32.mrb[0].mxu0
      %v609 = vpop.f32.mrb[0].mxu0
      %v610 = vadd.f32 0.0, %v609
      %v611 = vpop.f32.mrb[0].mxu0
      %612 = vmatprep.mubr.bf16.mxu0 0
      %613 = vmatmul.mubr.bf16.gmra.mrb[0].mxu0 %v370
      %v614 = vpop.f32.mrb[0].mxu0
      %v615 = vadd.f32 0.0, %v614
      %v616 = vpop.f32.mrb[0].mxu0
      %v617 = vpop.f32.mrb[0].mxu0
      %v618 = vadd.f32 0.0, %v617
      %v619 = vpop.f32.mrb[0].mxu0
      %620 = vmatprep.mubr.bf16.mxu0 0
      %621 = vmatmul.mubr.bf16.gmra.mrb[0].mxu0 %v371
      %v622 = vpop.f32.mrb[0].mxu0
      %v623 = vadd.f32 0.0, %v622
      %v624 = vpop.f32.mrb[0].mxu0
      %v625 = vpop.f32.mrb[0].mxu0
      %v626 = vadd.f32 0.0, %v625
      %v627 = vpop.f32.mrb[0].mxu0
      %628 = vmatprep.mubr.bf16.mxu0 0
      %629 = vmatmul.mubr.bf16.gmra.mrb[0].mxu0 %v372
      %v630 = vpop.f32.mrb[0].mxu0
      %v631 = vadd.f32 0.0, %v630
      %v632 = vpop.f32.mrb[0].mxu0
      %v633 = vpop.f32.mrb[0].mxu0
      %v634 = vadd.f32 0.0, %v633
      %v635 = vpop.f32.mrb[0].mxu0
      %636 = vmatprep.mubr.bf16.mxu0 0
      %637 = vmatmul.mubr.bf16.gmra.mrb[0].mxu0 %v373
      %v638 = vpop.f32.mrb[0].mxu0
      %v639 = vadd.f32 0.0, %v638
      %v640 = vpop.f32.mrb[0].mxu0
      %v641 = vpop.f32.mrb[0].mxu0
      %v642 = vadd.f32 0.0, %v641
      %v643 = vpop.f32.mrb[0].mxu0
      %644 = vmatprep.mubr.bf16.mxu0 0
      %645 = vmatmul.mubr.bf16.gmra.mrb[0].mxu0 %v374
      %v646 = vpop.f32.mrb[0].mxu0
      %v647 = vadd.f32 0.0, %v646
      %v648 = vpop.f32.mrb[0].mxu0
      %v649 = vpop.f32.mrb[0].mxu0
      %v650 = vadd.f32 0.0, %v649
      %v651 = vpop.f32.mrb[0].mxu0
      %652 = vmatprep.mubr.bf16.mxu0 0
      %653 = vmatmul.mubr.bf16.gmra.mrb[0].mxu0 %v375
      %v654 = vpop.f32.mrb[0].mxu0
      %v655 = vadd.f32 0.0, %v654
      %v656 = vpop.f32.mrb[0].mxu0
      %v657 = vpop.f32.mrb[0].mxu0
      %v658 = vadd.f32 0.0, %v657
      %v659 = vpop.f32.mrb[0].mxu0
      %660 = vmatprep.mubr.bf16.mxu0 0
      %661 = vmatmul.mubr.bf16.gmra.mrb[0].mxu0 %v376
      %v662 = vpop.f32.mrb[0].mxu0
      %v663 = vadd.f32 0.0, %v662
      %v664 = vpop.f32.mrb[0].mxu0
      %v665 = vpop.f32.mrb[0].mxu0
      %v666 = vadd.f32 0.0, %v665
      %v667 = vpop.f32.mrb[0].mxu0
      %668 = vmatprep.mubr.bf16.mxu0 0
      %669 = vmatmul.mubr.bf16.gmra.mrb[0].mxu0 %v377
      %v670 = vpop.f32.mrb[0].mxu0
      %v671 = vadd.f32 0.0, %v670
      %v672 = vpop.f32.mrb[0].mxu0
      %v673 = vpop.f32.mrb[0].mxu0
      %v674 = vadd.f32 0.0, %v673
      %v675 = vpop.f32.mrb[0].mxu0
      %676 = vmatprep.mubr.bf16.mxu0 0
      %677 = vmatmul.mubr.bf16.gmra.mrb[0].mxu0 %v378
      %v678 = vpop.f32.mrb[0].mxu0
      %v679 = vadd.f32 0.0, %v678
      %v680 = vpop.f32.mrb[0].mxu0
      %v681 = vpop.f32.mrb[0].mxu0
      %v682 = vadd.f32 0.0, %v681
      %v683 = vpop.f32.mrb[0].mxu0
      %684 = vmatprep.mubr.bf16.mxu0 0
      %685 = vmatmul.mubr.bf16.gmra.mrb[0].mxu0 %v379
      %v686 = vpop.f32.mrb[0].mxu0
      %v687 = vadd.f32 0.0, %v686
      %v688 = vpop.f32.mrb[0].mxu0
      %v689 = vpop.f32.mrb[0].mxu0
      %v690 = vadd.f32 0.0, %v689
      %v691 = vpop.f32.mrb[0].mxu0
      %692 = vmatprep.mubr.bf16.mxu0 0
      %693 = vmatmul.mubr.bf16.gmra.mrb[0].mxu0 %v380
      %v694 = vpop.f32.mrb[0].mxu0
      %v695 = vadd.f32 0.0, %v694
      %v696 = vpop.f32.mrb[0].mxu0
      %v697 = vpop.f32.mrb[0].mxu0
      %v698 = vadd.f32 0.0, %v697
      %v699 = vpop.f32.mrb[0].mxu0
      %700 = vmatprep.mubr.bf16.mxu0 0
      %701 = vmatmul.mubr.bf16.gmra.mrb[0].mxu0 %v381
      %v702 = vpop.f32.mrb[0].mxu0
      %v703 = vadd.f32 0.0, %v702
      %v704 = vpop.f32.mrb[0].mxu0
      %v705 = vpop.f32.mrb[0].mxu0
      %v706 = vadd.f32 0.0, %v705
      %v707 = vpop.f32.mrb[0].mxu0
      %708 = vmatprep.mubr.bf16.mxu0 0
      %709 = vmatmul.mubr.bf16.gmra.mrb[0].mxu0 %v382
      %v710 = vpop.f32.mrb[0].mxu0
      %v711 = vadd.f32 0.0, %v710
      %v712 = vpop.f32.mrb[0].mxu0
      %v713 = vpop.f32.mrb[0].mxu0
      %v714 = vadd.f32 0.0, %v713
      %v715 = vpop.f32.mrb[0].mxu0
      %716 = vmatprep.mubr.bf16.mxu0 0
      %717 = vmatmul.mubr.bf16.gmra.mrb[0].mxu0 %v383
      %v718 = vpop.f32.mrb[0].mxu0
      %v719 = vadd.f32 0.0, %v718
      %v720 = vpop.f32.mrb[0].mxu0
      %v721 = vpop.f32.mrb[0].mxu0
      %v722 = vadd.f32 0.0, %v721
      %v723 = vpop.f32.mrb[0].mxu0
      %724 = vmatprep.mubr.bf16.mxu0 0
      %725 = vmatmul.mubr.bf16.gmra.mrb[0].mxu0 %v384
      %v726 = vpop.f32.mrb[0].mxu0
      %v727 = vadd.f32 0.0, %v726
      %v728 = vpop.f32.mrb[0].mxu0
      %v729 = vpop.f32.mrb[0].mxu0
      %v730 = vadd.f32 0.0, %v729
      %v731 = vpop.f32.mrb[0].mxu0
      %732 = vmatprep.mubr.bf16.mxu0 0
      %733 = vmatmul.mubr.bf16.gmra.mrb[0].mxu0 %v385
      %v734 = vpop.f32.mrb[0].mxu0
      %v735 = vadd.f32 0.0, %v734
      %v736 = vpop.f32.mrb[0].mxu0
      %v737 = vpop.f32.mrb[0].mxu0
      %v738 = vadd.f32 0.0, %v737
      %v739 = vpop.f32.mrb[0].mxu0
      %740 = vmatprep.mubr.bf16.mxu0 0
      %741 = vmatmul.mubr.bf16.gmra.mrb[0].mxu0 %v386
      %v742 = vpop.f32.mrb[0].mxu0
      %v743 = vadd.f32 0.0, %v742
      %v744 = vpop.f32.mrb[0].mxu0
      %v745 = vpop.f32.mrb[0].mxu0
      %v746 = vadd.f32 0.0, %v745
      %v747 = vpop.f32.mrb[0].mxu0
      %748 = vmatprep.mubr.bf16.mxu0 0
      %749 = vmatmul.mubr.bf16.gmra.mrb[0].mxu0 %v387
      %v750 = vpop.f32.mrb[0].mxu0
      %v751 = vadd.f32 0.0, %v750
      %v752 = vpop.f32.mrb[0].mxu0
      %v753 = vpop.f32.mrb[0].mxu0
      %v754 = vadd.f32 0.0, %v753
      %v755 = vpop.f32.mrb[0].mxu0
      %756 = vdwg.mxu0
      %vm757 = vcmp.gt.f32.partialorder %v503, 0.0
      %vm758 = vcmp.gt.f32.partialorder %v506, 0.0
      %vm759 = vcmp.gt.f32.partialorder %v511, 0.0
      %vm760 = vcmp.gt.f32.partialorder %v514, 0.0
      %vm761 = vcmp.gt.f32.partialorder %v519, 0.0
      %vm762 = vcmp.gt.f32.partialorder %v522, 0.0
      %vm763 = vcmp.gt.f32.partialorder %v527, 0.0
      %vm764 = vcmp.gt.f32.partialorder %v530, 0.0
      %vm765 = vcmp.gt.f32.partialorder %v535, 0.0
      %vm766 = vcmp.gt.f32.partialorder %v538, 0.0
      %vm767 = vcmp.gt.f32.partialorder %v543, 0.0
      %vm768 = vcmp.gt.f32.partialorder %v546, 0.0
      %vm769 = vcmp.gt.f32.partialorder %v551, 0.0
      %vm770 = vcmp.gt.f32.partialorder %v554, 0.0
      %vm771 = vcmp.gt.f32.partialorder %v559, 0.0
      %vm772 = vcmp.gt.f32.partialorder %v562, 0.0
      %vm773 = vcmp.gt.f32.partialorder %v567, 0.0
      %vm774 = vcmp.gt.f32.partialorder %v570, 0.0
      %vm775 = vcmp.gt.f32.partialorder %v575, 0.0
      %vm776 = vcmp.gt.f32.partialorder %v578, 0.0
      %vm777 = vcmp.gt.f32.partialorder %v583, 0.0
      %vm778 = vcmp.gt.f32.partialorder %v586, 0.0
      %vm779 = vcmp.gt.f32.partialorder %v591, 0.0
      %vm780 = vcmp.gt.f32.partialorder %v594, 0.0
      %vm781 = vcmp.gt.f32.partialorder %v599, 0.0
      %vm782 = vcmp.gt.f32.partialorder %v602, 0.0
      %vm783 = vcmp.gt.f32.partialorder %v607, 0.0
      %vm784 = vcmp.gt.f32.partialorder %v610, 0.0
      %vm785 = vcmp.gt.f32.partialorder %v615, 0.0
      %vm786 = vcmp.gt.f32.partialorder %v618, 0.0
      %vm787 = vcmp.gt.f32.partialorder %v623, 0.0
      %vm788 = vcmp.gt.f32.partialorder %v626, 0.0
      %vm789 = vcmp.gt.f32.partialorder %v631, 0.0
      %vm790 = vcmp.gt.f32.partialorder %v634, 0.0
      %vm791 = vcmp.gt.f32.partialorder %v639, 0.0
      %vm792 = vcmp.gt.f32.partialorder %v642, 0.0
      %vm793 = vcmp.gt.f32.partialorder %v647, 0.0
      %vm794 = vcmp.gt.f32.partialorder %v650, 0.0
      %vm795 = vcmp.gt.f32.partialorder %v655, 0.0
      %vm796 = vcmp.gt.f32.partialorder %v658, 0.0
      %vm797 = vcmp.gt.f32.partialorder %v663, 0.0
      %vm798 = vcmp.gt.f32.partialorder %v666, 0.0
      %vm799 = vcmp.gt.f32.partialorder %v671, 0.0
      %vm800 = vcmp.gt.f32.partialorder %v674, 0.0
      %vm801 = vcmp.gt.f32.partialorder %v679, 0.0
      %vm802 = vcmp.gt.f32.partialorder %v682, 0.0
      %vm803 = vcmp.gt.f32.partialorder %v687, 0.0
      %vm804 = vcmp.gt.f32.partialorder %v690, 0.0
      %vm805 = vcmp.gt.f32.partialorder %v695, 0.0
      %vm806 = vcmp.gt.f32.partialorder %v698, 0.0
      %vm807 = vcmp.gt.f32.partialorder %v703, 0.0
      %vm808 = vcmp.gt.f32.partialorder %v706, 0.0
      %vm809 = vcmp.gt.f32.partialorder %v711, 0.0
      %vm810 = vcmp.gt.f32.partialorder %v714, 0.0
      %vm811 = vcmp.gt.f32.partialorder %v719, 0.0
      %vm812 = vcmp.gt.f32.partialorder %v722, 0.0
      %vm813 = vcmp.gt.f32.partialorder %v727, 0.0
      %vm814 = vcmp.gt.f32.partialorder %v730, 0.0
      %vm815 = vcmp.gt.f32.partialorder %v735, 0.0
      %vm816 = vcmp.gt.f32.partialorder %v738, 0.0
      %vm817 = vcmp.gt.f32.partialorder %v743, 0.0
      %vm818 = vcmp.gt.f32.partialorder %v746, 0.0
      %vm819 = vcmp.gt.f32.partialorder %v751, 0.0
      %vm820 = vcmp.gt.f32.partialorder %v754, 0.0
      %v821 = vmul.f32 %v503, 0.2
      %v822 = vmul.f32 %v506, 0.2
      %v823 = vmul.f32 %v511, 0.2
      %v824 = vmul.f32 %v514, 0.2
      %v825 = vmul.f32 %v519, 0.2
      %v826 = vmul.f32 %v522, 0.2
      %v827 = vmul.f32 %v527, 0.2
      %v828 = vmul.f32 %v530, 0.2
      %v829 = vmul.f32 %v535, 0.2
      %v830 = vmul.f32 %v538, 0.2
      %v831 = vmul.f32 %v543, 0.2
      %v832 = vmul.f32 %v546, 0.2
      %v833 = vmul.f32 %v551, 0.2
      %v834 = vmul.f32 %v554, 0.2
      %v835 = vmul.f32 %v559, 0.2
      %v836 = vmul.f32 %v562, 0.2
      %v837 = vmul.f32 %v567, 0.2
      %v838 = vmul.f32 %v570, 0.2
      %v839 = vmul.f32 %v575, 0.2
      %v840 = vmul.f32 %v578, 0.2
      %v841 = vmul.f32 %v583, 0.2
      %v842 = vmul.f32 %v586, 0.2
      %v843 = vmul.f32 %v591, 0.2
      %v844 = vmul.f32 %v594, 0.2
      %v845 = vmul.f32 %v599, 0.2
      %v846 = vmul.f32 %v602, 0.2
      %v847 = vmul.f32 %v607, 0.2
      %v848 = vmul.f32 %v610, 0.2
      %v849 = vmul.f32 %v615, 0.2
      %v850 = vmul.f32 %v618, 0.2
      %v851 = vmul.f32 %v623, 0.2
      %v852 = vmul.f32 %v626, 0.2
      %v853 = vmul.f32 %v631, 0.2
      %v854 = vmul.f32 %v634, 0.2
      %v855 = vmul.f32 %v639, 0.2
      %v856 = vmul.f32 %v642, 0.2
      %v857 = vmul.f32 %v647, 0.2
      %v858 = vmul.f32 %v650, 0.2
      %v859 = vmul.f32 %v655, 0.2
      %v860 = vmul.f32 %v658, 0.2
      %v861 = vmul.f32 %v663, 0.2
      %v862 = vmul.f32 %v666, 0.2
      %v863 = vmul.f32 %v671, 0.2
      %v864 = vmul.f32 %v674, 0.2
      %v865 = vmul.f32 %v679, 0.2
      %v866 = vmul.f32 %v682, 0.2
      %v867 = vmul.f32 %v687, 0.2
      %v868 = vmul.f32 %v690, 0.2
      %v869 = vmul.f32 %v695, 0.2
      %v870 = vmul.f32 %v698, 0.2
      %v871 = vmul.f32 %v703, 0.2
      %v872 = vmul.f32 %v706, 0.2
      %v873 = vmul.f32 %v711, 0.2
      %v874 = vmul.f32 %v714, 0.2
      %v875 = vmul.f32 %v719, 0.2
      %v876 = vmul.f32 %v722, 0.2
      %v877 = vmul.f32 %v727, 0.2
      %v878 = vmul.f32 %v730, 0.2
      %v879 = vmul.f32 %v735, 0.2
      %v880 = vmul.f32 %v738, 0.2
      %v881 = vmul.f32 %v743, 0.2
      %v882 = vmul.f32 %v746, 0.2
      %v883 = vmul.f32 %v751, 0.2
      %v884 = vmul.f32 %v754, 0.2
      %v885 = vsel %vm757, %v503, %v821
      %v886 = vsel %vm758, %v506, %v822
      %v887 = vsel %vm759, %v511, %v823
      %v888 = vsel %vm760, %v514, %v824
      %v889 = vsel %vm761, %v519, %v825
      %v890 = vsel %vm762, %v522, %v826
      %v891 = vsel %vm763, %v527, %v827
      %v892 = vsel %vm764, %v530, %v828
      %v893 = vsel %vm765, %v535, %v829
      %v894 = vsel %vm766, %v538, %v830
      %v895 = vsel %vm767, %v543, %v831
      %v896 = vsel %vm768, %v546, %v832
      %v897 = vsel %vm769, %v551, %v833
      %v898 = vsel %vm770, %v554, %v834
      %v899 = vsel %vm771, %v559, %v835
      %v900 = vsel %vm772, %v562, %v836
      %v901 = vsel %vm773, %v567, %v837
      %v902 = vsel %vm774, %v570, %v838
      %v903 = vsel %vm775, %v575, %v839
      %v904 = vsel %vm776, %v578, %v840
      %v905 = vsel %vm777, %v583, %v841
      %v906 = vsel %vm778, %v586, %v842
      %v907 = vsel %vm779, %v591, %v843
      %v908 = vsel %vm780, %v594, %v844
      %v909 = vsel %vm781, %v599, %v845
      %v910 = vsel %vm782, %v602, %v846
      %v911 = vsel %vm783, %v607, %v847
      %v912 = vsel %vm784, %v610, %v848
      %v913 = vsel %vm785, %v615, %v849
      %v914 = vsel %vm786, %v618, %v850
      %v915 = vsel %vm787, %v623, %v851
      %v916 = vsel %vm788, %v626, %v852
      %v917 = vsel %vm789, %v631, %v853
      %v918 = vsel %vm790, %v634, %v854
      %v919 = vsel %vm791, %v639, %v855
      %v920 = vsel %vm792, %v642, %v856
      %v921 = vsel %vm793, %v647, %v857
      %v922 = vsel %vm794, %v650, %v858
      %v923 = vsel %vm795, %v655, %v859
      %v924 = vsel %vm796, %v658, %v860
      %v925 = vsel %vm797, %v663, %v861
      %v926 = vsel %vm798, %v666, %v862
      %v927 = vsel %vm799, %v671, %v863
      %v928 = vsel %vm800, %v674, %v864
      %v929 = vsel %vm801, %v679, %v865
      %v930 = vsel %vm802, %v682, %v866
      %v931 = vsel %vm803, %v687, %v867
      %v932 = vsel %vm804, %v690, %v868
      %v933 = vsel %vm805, %v695, %v869
      %v934 = vsel %vm806, %v698, %v870
      %v935 = vsel %vm807, %v703, %v871
      %v936 = vsel %vm808, %v706, %v872
      %v937 = vsel %vm809, %v711, %v873
      %v938 = vsel %vm810, %v714, %v874
      %v939 = vsel %vm811, %v719, %v875
      %v940 = vsel %vm812, %v722, %v876
      %v941 = vsel %vm813, %v727, %v877
      %v942 = vsel %vm814, %v730, %v878
      %v943 = vsel %vm815, %v735, %v879
      %v944 = vsel %vm816, %v738, %v880
      %v945 = vsel %vm817, %v743, %v881
      %v946 = vsel %vm818, %v746, %v882
      %v947 = vsel %vm819, %v751, %v883
      %v948 = vsel %vm820, %v754, %v884
      %949 = vst [vmem:[%s145] sm:$0xff] %v885
      %950 = vst [vmem:[%s145 + $0x8] sm:$0xff] %v886
      %951 = vst [vmem:[%s145 + $0x10] sm:$0xff] %v887
      %952 = vst [vmem:[%s145 + $0x18] sm:$0xff] %v888
      %953 = vst [vmem:[%s145 + $0x20] sm:$0xff] %v889
      %954 = vst [vmem:[%s145 + $0x28] sm:$0xff] %v890
      %955 = vst [vmem:[%s145 + $0x30] sm:$0xff] %v891
      %956 = vst [vmem:[%s145 + $0x38] sm:$0xff] %v892
      %957 = vst [vmem:[%s145 + $0x40] sm:$0xff] %v893
      %958 = vst [vmem:[%s145 + $0x48] sm:$0xff] %v894
      %959 = vst [vmem:[%s145 + $0x50] sm:$0xff] %v895
      %960 = vst [vmem:[%s145 + $0x58] sm:$0xff] %v896
      %961 = vst [vmem:[%s145 + $0x60] sm:$0xff] %v897
      %962 = vst [vmem:[%s145 + $0x68] sm:$0xff] %v898
      %963 = vst [vmem:[%s145 + $0x70] sm:$0xff] %v899
      %964 = vst [vmem:[%s145 + $0x78] sm:$0xff] %v900
      %965 = vst [vmem:[%s145 + $0x80] sm:$0xff] %v901
      %966 = vst [vmem:[%s145 + $0x88] sm:$0xff] %v902
      %967 = vst [vmem:[%s145 + $0x90] sm:$0xff] %v903
      %968 = vst [vmem:[%s145 + $0x98] sm:$0xff] %v904
      %969 = vst [vmem:[%s145 + $0xa0] sm:$0xff] %v905
      %970 = vst [vmem:[%s145 + $0xa8] sm:$0xff] %v906
      %971 = vst [vmem:[%s145 + $0xb0] sm:$0xff] %v907
      %972 = vst [vmem:[%s145 + $0xb8] sm:$0xff] %v908
      %973 = vst [vmem:[%s145 + $0xc0] sm:$0xff] %v909
      %974 = vst [vmem:[%s145 + $0xc8] sm:$0xff] %v910
      %975 = vst [vmem:[%s145 + $0xd0] sm:$0xff] %v911
      %976 = vst [vmem:[%s145 + $0xd8] sm:$0xff] %v912
      %977 = vst [vmem:[%s145 + $0xe0] sm:$0xff] %v913
      %978 = vst [vmem:[%s145 + $0xe8] sm:$0xff] %v914
      %979 = vst [vmem:[%s145 + $0xf0] sm:$0xff] %v915
      %980 = vst [vmem:[%s145 + $0xf8] sm:$0xff] %v916
      %981 = vst [vmem:[%s145 + $0x100] sm:$0xff] %v917
      %982 = vst [vmem:[%s145 + $0x108] sm:$0xff] %v918
      %983 = vst [vmem:[%s145 + $0x110] sm:$0xff] %v919
      %984 = vst [vmem:[%s145 + $0x118] sm:$0xff] %v920
      %985 = vst [vmem:[%s145 + $0x120] sm:$0xff] %v921
      %986 = vst [vmem:[%s145 + $0x128] sm:$0xff] %v922
      %987 = vst [vmem:[%s145 + $0x130] sm:$0xff] %v923
      %988 = vst [vmem:[%s145 + $0x138] sm:$0xff] %v924
      %989 = vst [vmem:[%s145 + $0x140] sm:$0xff] %v925
      %990 = vst [vmem:[%s145 + $0x148] sm:$0xff] %v926
      %991 = vst [vmem:[%s145 + $0x150] sm:$0xff] %v927
      %992 = vst [vmem:[%s145 + $0x158] sm:$0xff] %v928
      %993 = vst [vmem:[%s145 + $0x160] sm:$0xff] %v929
      %994 = vst [vmem:[%s145 + $0x168] sm:$0xff] %v930
      %995 = vst [vmem:[%s145 + $0x170] sm:$0xff] %v931
      %996 = vst [vmem:[%s145 + $0x178] sm:$0xff] %v932
      %997 = vst [vmem:[%s145 + $0x180] sm:$0xff] %v933
      %998 = vst [vmem:[%s145 + $0x188] sm:$0xff] %v934
      %999 = vst [vmem:[%s145 + $0x190] sm:$0xff] %v935
      %1000 = vst [vmem:[%s145 + $0x198] sm:$0xff] %v936
      %1001 = vst [vmem:[%s145 + $0x1a0] sm:$0xff] %v937
      %1002 = vst [vmem:[%s145 + $0x1a8] sm:$0xff] %v938
      %1003 = vst [vmem:[%s145 + $0x1b0] sm:$0xff] %v939
      %1004 = vst [vmem:[%s145 + $0x1b8] sm:$0xff] %v940
      %1005 = vst [vmem:[%s145 + $0x1c0] sm:$0xff] %v941
      %1006 = vst [vmem:[%s145 + $0x1c8] sm:$0xff] %v942
      %1007 = vst [vmem:[%s145 + $0x1d0] sm:$0xff] %v943
      %1008 = vst [vmem:[%s145 + $0x1d8] sm:$0xff] %v944
      %1009 = vst [vmem:[%s145 + $0x1e0] sm:$0xff] %v945
      %1010 = vst [vmem:[%s145 + $0x1e8] sm:$0xff] %v946
      %1011 = vst [vmem:[%s145 + $0x1f0] sm:$0xff] %v947
      %1012 = vst [vmem:[%s145 + $0x1f8] sm:$0xff] %v948
      %s1013 = smul.u32 64, %s13
      %p1014 = scmp.lt.s32.totalorder %s1013, 255
      %s1015 = scalar_select %p1014, %s1013, 255
      %s1016 = smul.addr %s1015, 8
      %s1017 = scalar_lea.vmem %s2, %s1016
      // Predicated region
      $region29: #{_lambda_.8} parent=27 // pred_check
        %p1018 = pneg %p78
      $region30: #{_lambda_.8} parent=27 // pred_check_branch
        %1020 = sbr.rel (%p1018) target = $region32
      $region31: #{_lambda_.8} parent=27 // pred_region
        %s1021 = smul.u32 64, %s13
      $region32: #{_lambda_.8} parent=27 // pred_fallthru
        _
    $region28: #{_lambda_.8} parent=5 // pred_fallthru
      _
    %p1022 = scmp.le.s32.totalorder 2, %s8
    // Predicated region
    $region33: #{_lambda_.8} parent=5 // pred_check
      %p1023 = pneg %p1022
    $region34: #{_lambda_.8} parent=5 // pred_check_branch
      %1025 = sbr.rel (%p1023) target = $region36
    $region35: #{_lambda_.8} parent=5 // pred_region
      %s1026 = ssub.s32 %s8, 2
      // Predicated region
      $region37: #{_lambda_.8} parent=35 // pred_check
        %p1027 = pneg %p84
      $region38: #{_lambda_.8} parent=35 // pred_check_branch
        %1029 = sbr.rel (%p1027) target = $region40
      $region39: #{_lambda_.8} parent=35 // pred_region
        %s1030 = smul.u32 64, %s14
        %p1031 = scmp.lt.s32.totalorder %s1030, 255
        %s1032 = scalar_select %p1031, %s1030, 255
        %s1033 = smul.addr %s1032, 8
        %s1034 = scalar_lea.vmem %s2, %s1033
      $region40: #{_lambda_.8} parent=35 // pred_fallthru
        _
    $region36: #{_lambda_.8} parent=5 // pred_fallthru
      _
  $region6: #{_lambda_.8} parent=0 // loop_footer
    %s12 = sadd.s32 1, %s8
  $region7: #{_lambda_.8} parent=0 // loop_footer_branch
    %7 = sbr.rel target = $region3
  $region8: #{_lambda_.8} parent=0 // loop_exit
    _

// kernel: _lambda_.9
$region0: #{_lambda_.9}
  #allocation0 [shape = 'u32[]', space=smem, size = 0x4, offset = 0x4, fixed_abs, tag = 'smem constant byte address 0x4 - core index']
  #allocation1 [shape = 'u32[144,128]{1,0:T(1,128)}', space=vmem, size = 0x12000, scoped, tag = 'internal scratch']
  %s0 = inlined_call_operand.vmem [shape: bf16[512,128], index: 0, kind: input, shape index: {}]
  %s1 = inlined_call_operand.vmem [shape: bf16[128,128], index: 1, kind: input, shape index: {}]
  %s2 = inlined_call_operand.vmem [shape: f32[512,128], index: 2, kind: output, shape index: {0}]
  %s3 = inlined_call_operand.vmem [shape: f32[8,128], index: 3, kind: output, shape index: {1}]
  %s4 = inlined_call_operand.vmem [shape: f32[8,128], index: 4, kind: output, shape index: {2}]
  %5 = xla_tuple %s2, %s3, %s4
  %s6 = sld [smem:[#allocation0]]
  $region38: #{_lambda_.9} parent=0
    _
  %s8 = ssub.s32 1, %s6
  %s9 = scalar_select 0, %s8, %s6
  // Predicated region
  $region2: #{_lambda_.9} parent=0 // pred_check
    _
  $region3: #{_lambda_.9} parent=0 // pred_check_branch
    %11 = sbr.rel (0) target = $region5
  $region4: #{_lambda_.9} parent=0 // pred_region
    _
  $region5: #{_lambda_.9} parent=0 // pred_fallthru
    _
  // Predicated region
  $region6: #{_lambda_.9} parent=0 // pred_check
    _
  $region7: #{_lambda_.9} parent=0 // pred_check_branch
    %13 = sbr.rel (0) target = $region9
  $region8: #{_lambda_.9} parent=0 // pred_region
    _
  $region9: #{_lambda_.9} parent=0 // pred_fallthru
    _
  %v15 = vld [vmem:[%s0] sm:$0xf]
  %v16 = vld [vmem:[%s0 + $0x4] sm:$0xf]
  %v17 = vld [vmem:[%s0 + $0x8] sm:$0xf]
  %v18 = vld [vmem:[%s0 + $0xc] sm:$0xf]
  %v19 = vld [vmem:[%s0 + $0x10] sm:$0xf]
  %v20 = vld [vmem:[%s0 + $0x14] sm:$0xf]
  %v21 = vld [vmem:[%s0 + $0x18] sm:$0xf]
  %v22 = vld [vmem:[%s0 + $0x1c] sm:$0xf]
  %v23 = vld [vmem:[%s0 + $0x20] sm:$0xf]
  %v24 = vld [vmem:[%s0 + $0x24] sm:$0xf]
  %v25 = vld [vmem:[%s0 + $0x28] sm:$0xf]
  %v26 = vld [vmem:[%s0 + $0x2c] sm:$0xf]
  %v27 = vld [vmem:[%s0 + $0x30] sm:$0xf]
  %v28 = vld [vmem:[%s0 + $0x34] sm:$0xf]
  %v29 = vld [vmem:[%s0 + $0x38] sm:$0xf]
  %v30 = vld [vmem:[%s0 + $0x3c] sm:$0xf]
  %v31 = vld [vmem:[%s0 + $0x40] sm:$0xf]
  %v32 = vld [vmem:[%s0 + $0x44] sm:$0xf]
  %v33 = vld [vmem:[%s0 + $0x48] sm:$0xf]
  %v34 = vld [vmem:[%s0 + $0x4c] sm:$0xf]
  %v35 = vld [vmem:[%s0 + $0x50] sm:$0xf]
  %v36 = vld [vmem:[%s0 + $0x54] sm:$0xf]
  %v37 = vld [vmem:[%s0 + $0x58] sm:$0xf]
  %v38 = vld [vmem:[%s0 + $0x5c] sm:$0xf]
  %v39 = vld [vmem:[%s0 + $0x60] sm:$0xf]
  %v40 = vld [vmem:[%s0 + $0x64] sm:$0xf]
  %v41 = vld [vmem:[%s0 + $0x68] sm:$0xf]
  %v42 = vld [vmem:[%s0 + $0x6c] sm:$0xf]
  %v43 = vld [vmem:[%s0 + $0x70] sm:$0xf]
  %v44 = vld [vmem:[%s0 + $0x74] sm:$0xf]
  %v45 = vld [vmem:[%s0 + $0x78] sm:$0xf]
  %v46 = vld [vmem:[%s0 + $0x7c] sm:$0xf]
  %v47 = vld [vmem:[%s0 + $0x80] sm:$0xf]
  %v48 = vld [vmem:[%s0 + $0x84] sm:$0xf]
  %v49 = vld [vmem:[%s0 + $0x88] sm:$0xf]
  %v50 = vld [vmem:[%s0 + $0x8c] sm:$0xf]
  %v51 = vld [vmem:[%s0 + $0x90] sm:$0xf]
  %v52 = vld [vmem:[%s0 + $0x94] sm:$0xf]
  %v53 = vld [vmem:[%s0 + $0x98] sm:$0xf]
  %v54 = vld [vmem:[%s0 + $0x9c] sm:$0xf]
  %v55 = vld [vmem:[%s0 + $0xa0] sm:$0xf]
  %v56 = vld [vmem:[%s0 + $0xa4] sm:$0xf]
  %v57 = vld [vmem:[%s0 + $0xa8] sm:$0xf]
  %v58 = vld [vmem:[%s0 + $0xac] sm:$0xf]
  %v59 = vld [vmem:[%s0 + $0xb0] sm:$0xf]
  %v60 = vld [vmem:[%s0 + $0xb4] sm:$0xf]
  %v61 = vld [vmem:[%s0 + $0xb8] sm:$0xf]
  %v62 = vld [vmem:[%s0 + $0xbc] sm:$0xf]
  %v63 = vld [vmem:[%s0 + $0xc0] sm:$0xf]
  %v64 = vld [vmem:[%s0 + $0xc4] sm:$0xf]
  %v65 = vld [vmem:[%s0 + $0xc8] sm:$0xf]
  %v66 = vld [vmem:[%s0 + $0xcc] sm:$0xf]
  %v67 = vld [vmem:[%s0 + $0xd0] sm:$0xf]
  %v68 = vld [vmem:[%s0 + $0xd4] sm:$0xf]
  %v69 = vld [vmem:[%s0 + $0xd8] sm:$0xf]
  %v70 = vld [vmem:[%s0 + $0xdc] sm:$0xf]
  %v71 = vld [vmem:[%s0 + $0xe0] sm:$0xf]
  %v72 = vld [vmem:[%s0 + $0xe4] sm:$0xf]
  %v73 = vld [vmem:[%s0 + $0xe8] sm:$0xf]
  %v74 = vld [vmem:[%s0 + $0xec] sm:$0xf]
  %v75 = vld [vmem:[%s0 + $0xf0] sm:$0xf]
  %v76 = vld [vmem:[%s0 + $0xf4] sm:$0xf]
  %v77 = vld [vmem:[%s0 + $0xf8] sm:$0xf]
  %v78 = vld [vmem:[%s0 + $0xfc] sm:$0xf]
  %v79 = vld [vmem:[%s1] sm:$0xf]
  %v80 = vld [vmem:[%s1 + $0x4] sm:$0xf]
  %v81 = vld [vmem:[%s1 + $0x8] sm:$0xf]
  %v82 = vld [vmem:[%s1 + $0xc] sm:$0xf]
  %v83 = vld [vmem:[%s1 + $0x10] sm:$0xf]
  %v84 = vld [vmem:[%s1 + $0x14] sm:$0xf]
  %v85 = vld [vmem:[%s1 + $0x18] sm:$0xf]
  %v86 = vld [vmem:[%s1 + $0x1c] sm:$0xf]
  %v87 = vld [vmem:[%s1 + $0x20] sm:$0xf]
  %v88 = vld [vmem:[%s1 + $0x24] sm:$0xf]
  %v89 = vld [vmem:[%s1 + $0x28] sm:$0xf]
  %v90 = vld [vmem:[%s1 + $0x2c] sm:$0xf]
  %v91 = vld [vmem:[%s1 + $0x30] sm:$0xf]
  %v92 = vld [vmem:[%s1 + $0x34] sm:$0xf]
  %v93 = vld [vmem:[%s1 + $0x38] sm:$0xf]
  %v94 = vld [vmem:[%s1 + $0x3c] sm:$0xf]
  %v159 = vunpack.c.l.b16 %v15
  %v160 = vunpack.c.l.b16 %v16
  %v161 = vunpack.c.l.b16 %v17
  %v162 = vunpack.c.l.b16 %v18
  %v163 = vunpack.c.l.b16 %v19
  %v164 = vunpack.c.l.b16 %v20
  %v165 = vunpack.c.l.b16 %v21
  %v166 = vunpack.c.l.b16 %v22
  %v167 = vunpack.c.l.b16 %v23
  %v168 = vunpack.c.l.b16 %v24
  %v169 = vunpack.c.l.b16 %v25
  %v170 = vunpack.c.l.b16 %v26
  %v171 = vunpack.c.l.b16 %v27
  %v172 = vunpack.c.l.b16 %v28
  %v173 = vunpack.c.l.b16 %v29
  %v174 = vunpack.c.l.b16 %v30
  %v175 = vunpack.c.l.b16 %v31
  %v176 = vunpack.c.l.b16 %v32
  %v177 = vunpack.c.l.b16 %v33
  %v178 = vunpack.c.l.b16 %v34
  %v179 = vunpack.c.l.b16 %v35
  %v180 = vunpack.c.l.b16 %v36
  %v181 = vunpack.c.l.b16 %v37
  %v182 = vunpack.c.l.b16 %v38
  %v183 = vunpack.c.l.b16 %v39
  %v184 = vunpack.c.l.b16 %v40
  %v185 = vunpack.c.l.b16 %v41
  %v186 = vunpack.c.l.b16 %v42
  %v187 = vunpack.c.l.b16 %v43
  %v188 = vunpack.c.l.b16 %v44
  %v189 = vunpack.c.l.b16 %v45
  %v190 = vunpack.c.l.b16 %v46
  %v191 = vunpack.c.l.b16 %v47
  %v192 = vunpack.c.l.b16 %v48
  %v193 = vunpack.c.l.b16 %v49
  %v194 = vunpack.c.l.b16 %v50
  %v195 = vunpack.c.l.b16 %v51
  %v196 = vunpack.c.l.b16 %v52
  %v197 = vunpack.c.l.b16 %v53
  %v198 = vunpack.c.l.b16 %v54
  %v199 = vunpack.c.l.b16 %v55
  %v200 = vunpack.c.l.b16 %v56
  %v201 = vunpack.c.l.b16 %v57
  %v202 = vunpack.c.l.b16 %v58
  %v203 = vunpack.c.l.b16 %v59
  %v204 = vunpack.c.l.b16 %v60
  %v205 = vunpack.c.l.b16 %v61
  %v206 = vunpack.c.l.b16 %v62
  %v207 = vunpack.c.l.b16 %v63
  %v208 = vunpack.c.l.b16 %v64
  %v209 = vunpack.c.l.b16 %v65
  %v210 = vunpack.c.l.b16 %v66
  %v211 = vunpack.c.l.b16 %v67
  %v212 = vunpack.c.l.b16 %v68
  %v213 = vunpack.c.l.b16 %v69
  %v214 = vunpack.c.l.b16 %v70
  %v215 = vunpack.c.l.b16 %v71
  %v216 = vunpack.c.l.b16 %v72
  %v217 = vunpack.c.l.b16 %v73
  %v218 = vunpack.c.l.b16 %v74
  %v219 = vunpack.c.l.b16 %v75
  %v220 = vunpack.c.l.b16 %v76
  %v221 = vunpack.c.l.b16 %v77
  %v222 = vunpack.c.l.b16 %v78
  %v223 = vpack.c.b16 %v160, %v159
  %v224 = vpack.c.b16 %v162, %v161
  %v225 = vpack.c.b16 %v164, %v163
  %v226 = vpack.c.b16 %v166, %v165
  %v227 = vpack.c.b16 %v168, %v167
  %v228 = vpack.c.b16 %v170, %v169
  %v229 = vpack.c.b16 %v172, %v171
  %v230 = vpack.c.b16 %v174, %v173
  %v231 = vpack.c.b16 %v176, %v175
  %v232 = vpack.c.b16 %v178, %v177
  %v233 = vpack.c.b16 %v180, %v179
  %v234 = vpack.c.b16 %v182, %v181
  %v235 = vpack.c.b16 %v184, %v183
  %v236 = vpack.c.b16 %v186, %v185
  %v237 = vpack.c.b16 %v188, %v187
  %v238 = vpack.c.b16 %v190, %v189
  %v239 = vpack.c.b16 %v192, %v191
  %v240 = vpack.c.b16 %v194, %v193
  %v241 = vpack.c.b16 %v196, %v195
  %v242 = vpack.c.b16 %v198, %v197
  %v243 = vpack.c.b16 %v200, %v199
  %v244 = vpack.c.b16 %v202, %v201
  %v245 = vpack.c.b16 %v204, %v203
  %v246 = vpack.c.b16 %v206, %v205
  %v247 = vpack.c.b16 %v208, %v207
  %v248 = vpack.c.b16 %v210, %v209
  %v249 = vpack.c.b16 %v212, %v211
  %v250 = vpack.c.b16 %v214, %v213
  %v251 = vpack.c.b16 %v216, %v215
  %v252 = vpack.c.b16 %v218, %v217
  %v253 = vpack.c.b16 %v220, %v219
  %v254 = vpack.c.b16 %v222, %v221
  %v303 = vunpack.c.l.b16 %v79
  %v304 = vunpack.c.l.b16 %v80
  %v305 = vunpack.c.l.b16 %v81
  %v306 = vunpack.c.l.b16 %v82
  %v307 = vunpack.c.l.b16 %v83
  %v308 = vunpack.c.l.b16 %v84
  %v309 = vunpack.c.l.b16 %v85
  %v310 = vunpack.c.l.b16 %v86
  %v311 = vunpack.c.l.b16 %v87
  %v312 = vunpack.c.l.b16 %v88
  %v313 = vunpack.c.l.b16 %v89
  %v314 = vunpack.c.l.b16 %v90
  %v315 = vunpack.c.l.b16 %v91
  %v316 = vunpack.c.l.b16 %v92
  %v317 = vunpack.c.l.b16 %v93
  %v318 = vunpack.c.l.b16 %v94
  %v319 = vpack.c.b16 %v304, %v303
  %v320 = vpack.c.b16 %v306, %v305
  %v321 = vpack.c.b16 %v308, %v307
  %v322 = vpack.c.b16 %v310, %v309
  %v323 = vpack.c.b16 %v312, %v311
  %v324 = vpack.c.b16 %v314, %v313
  %v325 = vpack.c.b16 %v316, %v315
  %v326 = vpack.c.b16 %v318, %v317
  %335 = vmatprep.subr.bf16.mxu0 0
  %336 = vmatpush1.bf16.msra.mxu0 %v319
  %337 = vmatprep.subr.bf16.mxu0 0
  %338 = vmatpush1.bf16.msra.mxu0 %v320
  %339 = vmatprep.subr.bf16.mxu0 0
  %340 = vmatpush1.bf16.msra.mxu0 %v321
  %341 = vmatprep.subr.bf16.mxu0 0
  %342 = vmatpush1.bf16.msra.mxu0 %v322
  %343 = vmatprep.subr.bf16.mxu0 0
  %344 = vmatpush1.bf16.msra.mxu0 %v323
  %345 = vmatprep.subr.bf16.mxu0 0
  %346 = vmatpush1.bf16.msra.mxu0 %v324
  %347 = vmatprep.subr.bf16.mxu0 0
  %348 = vmatpush1.bf16.msra.mxu0 %v325
  %349 = vmatprep.subr.bf16.mxu0 0
  %350 = vmatpush1.bf16.msra.mxu0 %v326
  %351 = vmatprep.subr.bf16.mxu0 0
  %352 = vmatpush1.bf16.msra.mxu0 0
  %353 = vmatprep.subr.bf16.mxu0 0
  %354 = vmatpush1.bf16.msra.mxu0 0
  %355 = vmatprep.subr.bf16.mxu0 0
  %356 = vmatpush1.bf16.msra.mxu0 0
  %357 = vmatprep.subr.bf16.mxu0 0
  %358 = vmatpush1.bf16.msra.mxu0 0
  %359 = vmatprep.subr.bf16.mxu0 0
  %360 = vmatpush1.bf16.msra.mxu0 0
  %361 = vmatprep.subr.bf16.mxu0 0
  %362 = vmatpush1.bf16.msra.mxu0 0
  %363 = vmatprep.subr.bf16.mxu0 0
  %364 = vmatpush1.bf16.msra.mxu0 0
  %365 = vmatprep.subr.bf16.mxu0 0
  %366 = vmatpush1.bf16.msra.mxu0 0
  %367 = vmatprep.mubr.bf16.mxu0 0
  %368 = vmatmul.mubr.bf16.gmra.mrb[0].mxu0 %v223
  %v369 = vpop.f32.mrb[0].mxu0
  %v370 = vadd.f32 0.0, %v369
  %v371 = vpop.f32.mrb[0].mxu0
  %v372 = vpop.f32.mrb[0].mxu0
  %v373 = vadd.f32 0.0, %v372
  %v374 = vpop.f32.mrb[0].mxu0
  %375 = vmatprep.mubr.bf16.mxu0 0
  %376 = vmatmul.mubr.bf16.gmra.mrb[0].mxu0 %v224
  %v377 = vpop.f32.mrb[0].mxu0
  %v378 = vadd.f32 0.0, %v377
  %v379 = vpop.f32.mrb[0].mxu0
  %v380 = vpop.f32.mrb[0].mxu0
  %v381 = vadd.f32 0.0, %v380
  %v382 = vpop.f32.mrb[0].mxu0
  %383 = vmatprep.mubr.bf16.mxu0 0
  %384 = vmatmul.mubr.bf16.gmra.mrb[0].mxu0 %v225
  %v385 = vpop.f32.mrb[0].mxu0
  %v386 = vadd.f32 0.0, %v385
  %v387 = vpop.f32.mrb[0].mxu0
  %v388 = vpop.f32.mrb[0].mxu0
  %v389 = vadd.f32 0.0, %v388
  %v390 = vpop.f32.mrb[0].mxu0
  %391 = vmatprep.mubr.bf16.mxu0 0
  %392 = vmatmul.mubr.bf16.gmra.mrb[0].mxu0 %v226
  %v393 = vpop.f32.mrb[0].mxu0
  %v394 = vadd.f32 0.0, %v393
  %v395 = vpop.f32.mrb[0].mxu0
  %v396 = vpop.f32.mrb[0].mxu0
  %v397 = vadd.f32 0.0, %v396
  %v398 = vpop.f32.mrb[0].mxu0
  %399 = vmatprep.mubr.bf16.mxu0 0
  %400 = vmatmul.mubr.bf16.gmra.mrb[0].mxu0 %v227
  %v401 = vpop.f32.mrb[0].mxu0
  %v402 = vadd.f32 0.0, %v401
  %v403 = vpop.f32.mrb[0].mxu0
  %v404 = vpop.f32.mrb[0].mxu0
  %v405 = vadd.f32 0.0, %v404
  %v406 = vpop.f32.mrb[0].mxu0
  %407 = vmatprep.mubr.bf16.mxu0 0
  %408 = vmatmul.mubr.bf16.gmra.mrb[0].mxu0 %v228
  %v409 = vpop.f32.mrb[0].mxu0
  %v410 = vadd.f32 0.0, %v409
  %v411 = vpop.f32.mrb[0].mxu0
  %v412 = vpop.f32.mrb[0].mxu0
  %v413 = vadd.f32 0.0, %v412
  %v414 = vpop.f32.mrb[0].mxu0
  %415 = vmatprep.mubr.bf16.mxu0 0
  %416 = vmatmul.mubr.bf16.gmra.mrb[0].mxu0 %v229
  %v417 = vpop.f32.mrb[0].mxu0
  %v418 = vadd.f32 0.0, %v417
  %v419 = vpop.f32.mrb[0].mxu0
  %v420 = vpop.f32.mrb[0].mxu0
  %v421 = vadd.f32 0.0, %v420
  %v422 = vpop.f32.mrb[0].mxu0
  %423 = vmatprep.mubr.bf16.mxu0 0
  %424 = vmatmul.mubr.bf16.gmra.mrb[0].mxu0 %v230
  %v425 = vpop.f32.mrb[0].mxu0
  %v426 = vadd.f32 0.0, %v425
  %v427 = vpop.f32.mrb[0].mxu0
  %v428 = vpop.f32.mrb[0].mxu0
  %v429 = vadd.f32 0.0, %v428
  %v430 = vpop.f32.mrb[0].mxu0
  %431 = vmatprep.mubr.bf16.mxu0 0
  %432 = vmatmul.mubr.bf16.gmra.mrb[0].mxu0 %v231
  %v433 = vpop.f32.mrb[0].mxu0
  %v434 = vadd.f32 0.0, %v433
  %v435 = vpop.f32.mrb[0].mxu0
  %v436 = vpop.f32.mrb[0].mxu0
  %v437 = vadd.f32 0.0, %v436
  %v438 = vpop.f32.mrb[0].mxu0
  %439 = vmatprep.mubr.bf16.mxu0 0
  %440 = vmatmul.mubr.bf16.gmra.mrb[0].mxu0 %v232
  %v441 = vpop.f32.mrb[0].mxu0
  %v442 = vadd.f32 0.0, %v441
  %v443 = vpop.f32.mrb[0].mxu0
  %v444 = vpop.f32.mrb[0].mxu0
  %v445 = vadd.f32 0.0, %v444
  %v446 = vpop.f32.mrb[0].mxu0
  %447 = vmatprep.mubr.bf16.mxu0 0
  %448 = vmatmul.mubr.bf16.gmra.mrb[0].mxu0 %v233
  %v449 = vpop.f32.mrb[0].mxu0
  %v450 = vadd.f32 0.0, %v449
  %v451 = vpop.f32.mrb[0].mxu0
  %v452 = vpop.f32.mrb[0].mxu0
  %v453 = vadd.f32 0.0, %v452
  %v454 = vpop.f32.mrb[0].mxu0
  %455 = vmatprep.mubr.bf16.mxu0 0
  %456 = vmatmul.mubr.bf16.gmra.mrb[0].mxu0 %v234
  %v457 = vpop.f32.mrb[0].mxu0
  %v458 = vadd.f32 0.0, %v457
  %v459 = vpop.f32.mrb[0].mxu0
  %v460 = vpop.f32.mrb[0].mxu0
  %v461 = vadd.f32 0.0, %v460
  %v462 = vpop.f32.mrb[0].mxu0
  %463 = vmatprep.mubr.bf16.mxu0 0
  %464 = vmatmul.mubr.bf16.gmra.mrb[0].mxu0 %v235
  %v465 = vpop.f32.mrb[0].mxu0
  %v466 = vadd.f32 0.0, %v465
  %v467 = vpop.f32.mrb[0].mxu0
  %v468 = vpop.f32.mrb[0].mxu0
  %v469 = vadd.f32 0.0, %v468
  %v470 = vpop.f32.mrb[0].mxu0
  %471 = vmatprep.mubr.bf16.mxu0 0
  %472 = vmatmul.mubr.bf16.gmra.mrb[0].mxu0 %v236
  %v473 = vpop.f32.mrb[0].mxu0
  %v474 = vadd.f32 0.0, %v473
  %v475 = vpop.f32.mrb[0].mxu0
  %v476 = vpop.f32.mrb[0].mxu0
  %v477 = vadd.f32 0.0, %v476
  %v478 = vpop.f32.mrb[0].mxu0
  %479 = vmatprep.mubr.bf16.mxu0 0
  %480 = vmatmul.mubr.bf16.gmra.mrb[0].mxu0 %v237
  %v481 = vpop.f32.mrb[0].mxu0
  %v482 = vadd.f32 0.0, %v481
  %v483 = vpop.f32.mrb[0].mxu0
  %v484 = vpop.f32.mrb[0].mxu0
  %v485 = vadd.f32 0.0, %v484
  %v486 = vpop.f32.mrb[0].mxu0
  %487 = vmatprep.mubr.bf16.mxu0 0
  %488 = vmatmul.mubr.bf16.gmra.mrb[0].mxu0 %v238
  %v489 = vpop.f32.mrb[0].mxu0
  %v490 = vadd.f32 0.0, %v489
  %v491 = vpop.f32.mrb[0].mxu0
  %v492 = vpop.f32.mrb[0].mxu0
  %v493 = vadd.f32 0.0, %v492
  %v494 = vpop.f32.mrb[0].mxu0
  %495 = vmatprep.mubr.bf16.mxu0 0
  %496 = vmatmul.mubr.bf16.gmra.mrb[0].mxu0 %v239
  %v497 = vpop.f32.mrb[0].mxu0
  %v498 = vadd.f32 0.0, %v497
  %v499 = vpop.f32.mrb[0].mxu0
  %v500 = vpop.f32.mrb[0].mxu0
  %v501 = vadd.f32 0.0, %v500
  %v502 = vpop.f32.mrb[0].mxu0
  %503 = vmatprep.mubr.bf16.mxu0 0
  %504 = vmatmul.mubr.bf16.gmra.mrb[0].mxu0 %v240
  %v505 = vpop.f32.mrb[0].mxu0
  %v506 = vadd.f32 0.0, %v505
  %v507 = vpop.f32.mrb[0].mxu0
  %v508 = vpop.f32.mrb[0].mxu0
  %v509 = vadd.f32 0.0, %v508
  %v510 = vpop.f32.mrb[0].mxu0
  %511 = vmatprep.mubr.bf16.mxu0 0
  %512 = vmatmul.mubr.bf16.gmra.mrb[0].mxu0 %v241
  %v513 = vpop.f32.mrb[0].mxu0
  %v514 = vadd.f32 0.0, %v513
  %v515 = vpop.f32.mrb[0].mxu0
  %v516 = vpop.f32.mrb[0].mxu0
  %v517 = vadd.f32 0.0, %v516
  %v518 = vpop.f32.mrb[0].mxu0
  %519 = vmatprep.mubr.bf16.mxu0 0
  %520 = vmatmul.mubr.bf16.gmra.mrb[0].mxu0 %v242
  %v521 = vpop.f32.mrb[0].mxu0
  %v522 = vadd.f32 0.0, %v521
  %v523 = vpop.f32.mrb[0].mxu0
  %v524 = vpop.f32.mrb[0].mxu0
  %v525 = vadd.f32 0.0, %v524
  %v526 = vpop.f32.mrb[0].mxu0
  %527 = vmatprep.mubr.bf16.mxu0 0
  %528 = vmatmul.mubr.bf16.gmra.mrb[0].mxu0 %v243
  %v529 = vpop.f32.mrb[0].mxu0
  %v530 = vadd.f32 0.0, %v529
  %v531 = vpop.f32.mrb[0].mxu0
  %v532 = vpop.f32.mrb[0].mxu0
  %v533 = vadd.f32 0.0, %v532
  %v534 = vpop.f32.mrb[0].mxu0
  %535 = vmatprep.mubr.bf16.mxu0 0
  %536 = vmatmul.mubr.bf16.gmra.mrb[0].mxu0 %v244
  %v537 = vpop.f32.mrb[0].mxu0
  %v538 = vadd.f32 0.0, %v537
  %v539 = vpop.f32.mrb[0].mxu0
  %v540 = vpop.f32.mrb[0].mxu0
  %v541 = vadd.f32 0.0, %v540
  %v542 = vpop.f32.mrb[0].mxu0
  %543 = vmatprep.mubr.bf16.mxu0 0
  %544 = vmatmul.mubr.bf16.gmra.mrb[0].mxu0 %v245
  %v545 = vpop.f32.mrb[0].mxu0
  %v546 = vadd.f32 0.0, %v545
  %v547 = vpop.f32.mrb[0].mxu0
  %v548 = vpop.f32.mrb[0].mxu0
  %v549 = vadd.f32 0.0, %v548
  %v550 = vpop.f32.mrb[0].mxu0
  %551 = vmatprep.mubr.bf16.mxu0 0
  %552 = vmatmul.mubr.bf16.gmra.mrb[0].mxu0 %v246
  %v553 = vpop.f32.mrb[0].mxu0
  %v554 = vadd.f32 0.0, %v553
  %v555 = vpop.f32.mrb[0].mxu0
  %v556 = vpop.f32.mrb[0].mxu0
  %v557 = vadd.f32 0.0, %v556
  %v558 = vpop.f32.mrb[0].mxu0
  %559 = vmatprep.mubr.bf16.mxu0 0
  %560 = vmatmul.mubr.bf16.gmra.mrb[0].mxu0 %v247
  %v561 = vpop.f32.mrb[0].mxu0
  %v562 = vadd.f32 0.0, %v561
  %v563 = vpop.f32.mrb[0].mxu0
  %v564 = vpop.f32.mrb[0].mxu0
  %v565 = vadd.f32 0.0, %v564
  %v566 = vpop.f32.mrb[0].mxu0
  %567 = vmatprep.mubr.bf16.mxu0 0
  %568 = vmatmul.mubr.bf16.gmra.mrb[0].mxu0 %v248
  %v569 = vpop.f32.mrb[0].mxu0
  %v570 = vadd.f32 0.0, %v569
  %v571 = vpop.f32.mrb[0].mxu0
  %v572 = vpop.f32.mrb[0].mxu0
  %v573 = vadd.f32 0.0, %v572
  %v574 = vpop.f32.mrb[0].mxu0
  %575 = vmatprep.mubr.bf16.mxu0 0
  %576 = vmatmul.mubr.bf16.gmra.mrb[0].mxu0 %v249
  %v577 = vpop.f32.mrb[0].mxu0
  %v578 = vadd.f32 0.0, %v577
  %v579 = vpop.f32.mrb[0].mxu0
  %v580 = vpop.f32.mrb[0].mxu0
  %v581 = vadd.f32 0.0, %v580
  %v582 = vpop.f32.mrb[0].mxu0
  %583 = vmatprep.mubr.bf16.mxu0 0
  %584 = vmatmul.mubr.bf16.gmra.mrb[0].mxu0 %v250
  %v585 = vpop.f32.mrb[0].mxu0
  %v586 = vadd.f32 0.0, %v585
  %v587 = vpop.f32.mrb[0].mxu0
  %v588 = vpop.f32.mrb[0].mxu0
  %v589 = vadd.f32 0.0, %v588
  %v590 = vpop.f32.mrb[0].mxu0
  %591 = vmatprep.mubr.bf16.mxu0 0
  %592 = vmatmul.mubr.bf16.gmra.mrb[0].mxu0 %v251
  %v593 = vpop.f32.mrb[0].mxu0
  %v594 = vadd.f32 0.0, %v593
  %v595 = vpop.f32.mrb[0].mxu0
  %v596 = vpop.f32.mrb[0].mxu0
  %v597 = vadd.f32 0.0, %v596
  %v598 = vpop.f32.mrb[0].mxu0
  %599 = vmatprep.mubr.bf16.mxu0 0
  %600 = vmatmul.mubr.bf16.gmra.mrb[0].mxu0 %v252
  %v601 = vpop.f32.mrb[0].mxu0
  %v602 = vadd.f32 0.0, %v601
  %v603 = vpop.f32.mrb[0].mxu0
  %v604 = vpop.f32.mrb[0].mxu0
  %v605 = vadd.f32 0.0, %v604
  %v606 = vpop.f32.mrb[0].mxu0
  %607 = vmatprep.mubr.bf16.mxu0 0
  %608 = vmatmul.mubr.bf16.gmra.mrb[0].mxu0 %v253
  %v609 = vpop.f32.mrb[0].mxu0
  %v610 = vadd.f32 0.0, %v609
  %v611 = vpop.f32.mrb[0].mxu0
  %v612 = vpop.f32.mrb[0].mxu0
  %v613 = vadd.f32 0.0, %v612
  %v614 = vpop.f32.mrb[0].mxu0
  %615 = vmatprep.mubr.bf16.mxu0 0
  %616 = vmatmul.mubr.bf16.gmra.mrb[0].mxu0 %v254
  %v617 = vpop.f32.mrb[0].mxu0
  %v618 = vadd.f32 0.0, %v617
  %v619 = vpop.f32.mrb[0].mxu0
  %v620 = vpop.f32.mrb[0].mxu0
  %v621 = vadd.f32 0.0, %v620
  %v622 = vpop.f32.mrb[0].mxu0
  %623 = vdwg.mxu0
  %624 = vst [vmem:[%s2] sm:$0xff] %v370
  %625 = vst [vmem:[%s2 + $0x8] sm:$0xff] %v373
  %626 = vst [vmem:[%s2 + $0x10] sm:$0xff] %v378
  %627 = vst [vmem:[%s2 + $0x18] sm:$0xff] %v381
  %628 = vst [vmem:[%s2 + $0x20] sm:$0xff] %v386
  %629 = vst [vmem:[%s2 + $0x28] sm:$0xff] %v389
  %630 = vst [vmem:[%s2 + $0x30] sm:$0xff] %v394
  %631 = vst [vmem:[%s2 + $0x38] sm:$0xff] %v397
  %632 = vst [vmem:[%s2 + $0x40] sm:$0xff] %v402
  %633 = vst [vmem:[%s2 + $0x48] sm:$0xff] %v405
  %634 = vst [vmem:[%s2 + $0x50] sm:$0xff] %v410
  %635 = vst [vmem:[%s2 + $0x58] sm:$0xff] %v413
  %636 = vst [vmem:[%s2 + $0x60] sm:$0xff] %v418
  %637 = vst [vmem:[%s2 + $0x68] sm:$0xff] %v421
  %638 = vst [vmem:[%s2 + $0x70] sm:$0xff] %v426
  %639 = vst [vmem:[%s2 + $0x78] sm:$0xff] %v429
  %640 = vst [vmem:[%s2 + $0x80] sm:$0xff] %v434
  %641 = vst [vmem:[%s2 + $0x88] sm:$0xff] %v437
  %642 = vst [vmem:[%s2 + $0x90] sm:$0xff] %v442
  %643 = vst [vmem:[%s2 + $0x98] sm:$0xff] %v445
  %644 = vst [vmem:[%s2 + $0xa0] sm:$0xff] %v450
  %645 = vst [vmem:[%s2 + $0xa8] sm:$0xff] %v453
  %646 = vst [vmem:[%s2 + $0xb0] sm:$0xff] %v458
  %647 = vst [vmem:[%s2 + $0xb8] sm:$0xff] %v461
  %648 = vst [vmem:[%s2 + $0xc0] sm:$0xff] %v466
  %649 = vst [vmem:[%s2 + $0xc8] sm:$0xff] %v469
  %650 = vst [vmem:[%s2 + $0xd0] sm:$0xff] %v474
  %651 = vst [vmem:[%s2 + $0xd8] sm:$0xff] %v477
  %652 = vst [vmem:[%s2 + $0xe0] sm:$0xff] %v482
  %653 = vst [vmem:[%s2 + $0xe8] sm:$0xff] %v485
  %654 = vst [vmem:[%s2 + $0xf0] sm:$0xff] %v490
  %655 = vst [vmem:[%s2 + $0xf8] sm:$0xff] %v493
  %656 = vst [vmem:[%s2 + $0x100] sm:$0xff] %v498
  %657 = vst [vmem:[%s2 + $0x108] sm:$0xff] %v501
  %658 = vst [vmem:[%s2 + $0x110] sm:$0xff] %v506
  %659 = vst [vmem:[%s2 + $0x118] sm:$0xff] %v509
  %660 = vst [vmem:[%s2 + $0x120] sm:$0xff] %v514
  %661 = vst [vmem:[%s2 + $0x128] sm:$0xff] %v517
  %662 = vst [vmem:[%s2 + $0x130] sm:$0xff] %v522
  %663 = vst [vmem:[%s2 + $0x138] sm:$0xff] %v525
  %664 = vst [vmem:[%s2 + $0x140] sm:$0xff] %v530
  %665 = vst [vmem:[%s2 + $0x148] sm:$0xff] %v533
  %666 = vst [vmem:[%s2 + $0x150] sm:$0xff] %v538
  %667 = vst [vmem:[%s2 + $0x158] sm:$0xff] %v541
  %668 = vst [vmem:[%s2 + $0x160] sm:$0xff] %v546
  %669 = vst [vmem:[%s2 + $0x168] sm:$0xff] %v549
  %670 = vst [vmem:[%s2 + $0x170] sm:$0xff] %v554
  %671 = vst [vmem:[%s2 + $0x178] sm:$0xff] %v557
  %672 = vst [vmem:[%s2 + $0x180] sm:$0xff] %v562
  %673 = vst [vmem:[%s2 + $0x188] sm:$0xff] %v565
  %674 = vst [vmem:[%s2 + $0x190] sm:$0xff] %v570
  %675 = vst [vmem:[%s2 + $0x198] sm:$0xff] %v573
  %676 = vst [vmem:[%s2 + $0x1a0] sm:$0xff] %v578
  %677 = vst [vmem:[%s2 + $0x1a8] sm:$0xff] %v581
  %678 = vst [vmem:[%s2 + $0x1b0] sm:$0xff] %v586
  %679 = vst [vmem:[%s2 + $0x1b8] sm:$0xff] %v589
  %680 = vst [vmem:[%s2 + $0x1c0] sm:$0xff] %v594
  %681 = vst [vmem:[%s2 + $0x1c8] sm:$0xff] %v597
  %682 = vst [vmem:[%s2 + $0x1d0] sm:$0xff] %v602
  %683 = vst [vmem:[%s2 + $0x1d8] sm:$0xff] %v605
  %684 = vst [vmem:[%s2 + $0x1e0] sm:$0xff] %v610
  %685 = vst [vmem:[%s2 + $0x1e8] sm:$0xff] %v613
  %686 = vst [vmem:[%s2 + $0x1f0] sm:$0xff] %v618
  %687 = vst [vmem:[%s2 + $0x1f8] sm:$0xff] %v621
  %p688 = scmp.eq.s32.totalorder 0, 0
  // Predicated region
  $region10: #{_lambda_.9} parent=0 // pred_check
    %p689 = pneg %p688
  $region11: #{_lambda_.9} parent=0 // pred_check_branch
    %691 = sbr.rel (%p689) target = $region13
  $region12: #{_lambda_.9} parent=0 // pred_region
    %692 = vst [vmem:[%s3] sm:$0xff] 0.0
    %693 = vst [vmem:[%s4] sm:$0xff] 0.0
  $region13: #{_lambda_.9} parent=0 // pred_fallthru
    _
  %v694 = vld [vmem:[%s3] sm:$0xff]
  %v695 = vadd.f32 %v370, %v373
  %v696 = vadd.f32 %v695, %v378
  %v697 = vadd.f32 %v696, %v381
  %v698 = vadd.f32 %v697, %v386
  %v699 = vadd.f32 %v698, %v389
  %v700 = vadd.f32 %v699, %v394
  %v701 = vadd.f32 %v700, %v397
  %v702 = vadd.f32 %v701, %v402
  %v703 = vadd.f32 %v702, %v405
  %v704 = vadd.f32 %v703, %v410
  %v705 = vadd.f32 %v704, %v413
  %v706 = vadd.f32 %v705, %v418
  %v707 = vadd.f32 %v706, %v421
  %v708 = vadd.f32 %v707, %v426
  %v709 = vadd.f32 %v708, %v429
  %v710 = vadd.f32 %v709, %v434
  %v711 = vadd.f32 %v710, %v437
  %v712 = vadd.f32 %v711, %v442
  %v713 = vadd.f32 %v712, %v445
  %v714 = vadd.f32 %v713, %v450
  %v715 = vadd.f32 %v714, %v453
  %v716 = vadd.f32 %v715, %v458
  %v717 = vadd.f32 %v716, %v461
  %v718 = vadd.f32 %v717, %v466
  %v719 = vadd.f32 %v718, %v469
  %v720 = vadd.f32 %v719, %v474
  %v721 = vadd.f32 %v720, %v477
  %v722 = vadd.f32 %v721, %v482
  %v723 = vadd.f32 %v722, %v485
  %v724 = vadd.f32 %v723, %v490
  %v725 = vadd.f32 %v724, %v493
  %v726 = vadd.f32 %v725, %v498
  %v727 = vadd.f32 %v726, %v501
  %v728 = vadd.f32 %v727, %v506
  %v729 = vadd.f32 %v728, %v509
  %v730 = vadd.f32 %v729, %v514
  %v731 = vadd.f32 %v730, %v517
  %v732 = vadd.f32 %v731, %v522
  %v733 = vadd.f32 %v732, %v525
  %v734 = vadd.f32 %v733, %v530
  %v735 = vadd.f32 %v734, %v533
  %v736 = vadd.f32 %v735, %v538
  %v737 = vadd.f32 %v736, %v541
  %v738 = vadd.f32 %v737, %v546
  %v739 = vadd.f32 %v738, %v549
  %v740 = vadd.f32 %v739, %v554
  %v741 = vadd.f32 %v740, %v557
  %v742 = vadd.f32 %v741, %v562
  %v743 = vadd.f32 %v742, %v565
  %v744 = vadd.f32 %v743, %v570
  %v745 = vadd.f32 %v744, %v573
  %v746 = vadd.f32 %v745, %v578
  %v747 = vadd.f32 %v746, %v581
  %v748 = vadd.f32 %v747, %v586
  %v749 = vadd.f32 %v748, %v589
  %v750 = vadd.f32 %v749, %v594
  %v751 = vadd.f32 %v750, %v597
  %v752 = vadd.f32 %v751, %v602
  %v753 = vadd.f32 %v752, %v605
  %v754 = vadd.f32 %v753, %v610
  %v755 = vadd.f32 %v754, %v613
  %v756 = vadd.f32 %v755, %v618
  %v757 = vadd.f32 %v756, %v621
  %v758 = vrot.slane %v757, 4
  %v759 = vadd.f32 %v757, %v758
  %v760 = vrot.slane %v759, 2
  %v761 = vadd.f32 %v759, %v760
  %v762 = vrot.slane %v761, 1
  %v763 = vadd.f32 %v761, %v762
  %v764 = vadd.f32 %v694, %v763
  %765 = vst [vmem:[%s3] sm:$0xff] %v764
  %v766 = vld [vmem:[%s4] sm:$0xff]
  %v767 = vmul.f32 %v370, %v370
  %v768 = vmul.f32 %v373, %v373
  %v769 = vmul.f32 %v378, %v378
  %v770 = vmul.f32 %v381, %v381
  %v771 = vmul.f32 %v386, %v386
  %v772 = vmul.f32 %v389, %v389
  %v773 = vmul.f32 %v394, %v394
  %v774 = vmul.f32 %v397, %v397
  %v775 = vmul.f32 %v402, %v402
  %v776 = vmul.f32 %v405, %v405
  %v777 = vmul.f32 %v410, %v410
  %v778 = vmul.f32 %v413, %v413
  %v779 = vmul.f32 %v418, %v418
  %v780 = vmul.f32 %v421, %v421
  %v781 = vmul.f32 %v426, %v426
  %v782 = vmul.f32 %v429, %v429
  %v783 = vmul.f32 %v434, %v434
  %v784 = vmul.f32 %v437, %v437
  %v785 = vmul.f32 %v442, %v442
  %v786 = vmul.f32 %v445, %v445
  %v787 = vmul.f32 %v450, %v450
  %v788 = vmul.f32 %v453, %v453
  %v789 = vmul.f32 %v458, %v458
  %v790 = vmul.f32 %v461, %v461
  %v791 = vmul.f32 %v466, %v466
  %v792 = vmul.f32 %v469, %v469
  %v793 = vmul.f32 %v474, %v474
  %v794 = vmul.f32 %v477, %v477
  %v795 = vmul.f32 %v482, %v482
  %v796 = vmul.f32 %v485, %v485
  %v797 = vmul.f32 %v490, %v490
  %v798 = vmul.f32 %v493, %v493
  %v799 = vmul.f32 %v498, %v498
  %v800 = vmul.f32 %v501, %v501
  %v801 = vmul.f32 %v506, %v506
  %v802 = vmul.f32 %v509, %v509
  %v803 = vmul.f32 %v514, %v514
  %v804 = vmul.f32 %v517, %v517
  %v805 = vmul.f32 %v522, %v522
  %v806 = vmul.f32 %v525, %v525
  %v807 = vmul.f32 %v530, %v530
  %v808 = vmul.f32 %v533, %v533
  %v809 = vmul.f32 %v538, %v538
  %v810 = vmul.f32 %v541, %v541
  %v811 = vmul.f32 %v546, %v546
  %v812 = vmul.f32 %v549, %v549
  %v813 = vmul.f32 %v554, %v554
  %v814 = vmul.f32 %v557, %v557
  %v815 = vmul.f32 %v562, %v562
  %v816 = vmul.f32 %v565, %v565
  %v817 = vmul.f32 %v570, %v570
  %v818 = vmul.f32 %v573, %v573
  %v819 = vmul.f32 %v578, %v578
  %v820 = vmul.f32 %v581, %v581
  %v821 = vmul.f32 %v586, %v586
  %v822 = vmul.f32 %v589, %v589
  %v823 = vmul.f32 %v594, %v594
  %v824 = vmul.f32 %v597, %v597
  %v825 = vmul.f32 %v602, %v602
  %v826 = vmul.f32 %v605, %v605
  %v827 = vmul.f32 %v610, %v610
  %v828 = vmul.f32 %v613, %v613
  %v829 = vmul.f32 %v618, %v618
  %v830 = vmul.f32 %v621, %v621
  %v831 = vadd.f32 %v767, %v768
  %v832 = vadd.f32 %v831, %v769
  %v833 = vadd.f32 %v832, %v770
  %v834 = vadd.f32 %v833, %v771
  %v835 = vadd.f32 %v834, %v772
  %v836 = vadd.f32 %v835, %v773
  %v837 = vadd.f32 %v836, %v774
  %v838 = vadd.f32 %v837, %v775
  %v839 = vadd.f32 %v838, %v776
  %v840 = vadd.f32 %v839, %v777
  %v841 = vadd.f32 %v840, %v778
  %v842 = vadd.f32 %v841, %v779
  %v843 = vadd.f32 %v842, %v780
  %v844 = vadd.f32 %v843, %v781
  %v845 = vadd.f32 %v844, %v782
  %v846 = vadd.f32 %v845, %v783
  %v847 = vadd.f32 %v846, %v784
  %v848 = vadd.f32 %v847, %v785
  %v849 = vadd.f32 %v848, %v786
  %v850 = vadd.f32 %v849, %v787
  %v851 = vadd.f32 %v850, %v788
  %v852 = vadd.f32 %v851, %v789
  %v853 = vadd.f32 %v852, %v790
  %v854 = vadd.f32 %v853, %v791
  %v855 = vadd.f32 %v854, %v792
  %v856 = vadd.f32 %v855, %v793
  %v857 = vadd.f32 %v856, %v794
  %v858 = vadd.f32 %v857, %v795
  %v859 = vadd.f32 %v858, %v796
  %v860 = vadd.f32 %v859, %v797
  %v861 = vadd.f32 %v860, %v798
  %v862 = vadd.f32 %v861, %v799
  %v863 = vadd.f32 %v862, %v800
  %v864 = vadd.f32 %v863, %v801
  %v865 = vadd.f32 %v864, %v802
  %v866 = vadd.f32 %v865, %v803
  %v867 = vadd.f32 %v866, %v804
  %v868 = vadd.f32 %v867, %v805
  %v869 = vadd.f32 %v868, %v806
  %v870 = vadd.f32 %v869, %v807
  %v871 = vadd.f32 %v870, %v808
  %v872 = vadd.f32 %v871, %v809
  %v873 = vadd.f32 %v872, %v810
  %v874 = vadd.f32 %v873, %v811
  %v875 = vadd.f32 %v874, %v812
  %v876 = vadd.f32 %v875, %v813
  %v877 = vadd.f32 %v876, %v814
  %v878 = vadd.f32 %v877, %v815
  %v879 = vadd.f32 %v878, %v816
  %v880 = vadd.f32 %v879, %v817
  %v881 = vadd.f32 %v880, %v818
  %v882 = vadd.f32 %v881, %v819
  %v883 = vadd.f32 %v882, %v820
  %v884 = vadd.f32 %v883, %v821
  %v885 = vadd.f32 %v884, %v822
  %v886 = vadd.f32 %v885, %v823
  %v887 = vadd.f32 %v886, %v824
  %v888 = vadd.f32 %v887, %v825
  %v889 = vadd.f32 %v888, %v826
  %v890 = vadd.f32 %v889, %v827
  %v891 = vadd.f32 %v890, %v828
  %v892 = vadd.f32 %v891, %v829
  %v893 = vadd.f32 %v892, %v830
  %v894 = vrot.slane %v893, 4
  %v895 = vadd.f32 %v893, %v894
  %v896 = vrot.slane %v895, 2
  %v897 = vadd.f32 %v895, %v896
  %v898 = vrot.slane %v897, 1
  %v899 = vadd.f32 %v897, %v898
  %v900 = vadd.f32 %v766, %v899
  %901 = vst [vmem:[%s4] sm:$0xff] %v900
  // Predicated region
  $region14: #{_lambda_.9} parent=0 // pred_check
    _
  $region15: #{_lambda_.9} parent=0 // pred_check_branch
    %903 = sbr.rel (0) target = $region17
  $region16: #{_lambda_.9} parent=0 // pred_region
    _
  $region17: #{_lambda_.9} parent=0 // pred_fallthru
    _
  // Predicated region
  $region18: #{_lambda_.9} parent=0 // pred_check
    _
  $region19: #{_lambda_.9} parent=0 // pred_check_branch
    %905 = sbr.rel (0) target = $region21
  $region20: #{_lambda_.9} parent=0 // pred_region
    _
  $region21: #{_lambda_.9} parent=0 // pred_fallthru
    _
  // Predicated region
  $region22: #{_lambda_.9} parent=0 // pred_check
    _
  $region23: #{_lambda_.9} parent=0 // pred_check_branch
    %907 = sbr.rel (0) target = $region25
  $region24: #{_lambda_.9} parent=0 // pred_region
    _
  $region25: #{_lambda_.9} parent=0 // pred_fallthru
    _
  // Predicated region
  $region26: #{_lambda_.9} parent=0 // pred_check
    _
  $region27: #{_lambda_.9} parent=0 // pred_check_branch
    %909 = sbr.rel (0) target = $region29
  $region28: #{_lambda_.9} parent=0 // pred_region
    _
  $region29: #{_lambda_.9} parent=0 // pred_fallthru
    _
  // Predicated region
  $region30: #{_lambda_.9} parent=0 // pred_check
    _
  $region31: #{_lambda_.9} parent=0 // pred_check_branch
    %911 = sbr.rel (0) target = $region33
  $region32: #{_lambda_.9} parent=0 // pred_region
    _
  $region33: #{_lambda_.9} parent=0 // pred_fallthru
    _
  // Predicated region
  $region34: #{_lambda_.9} parent=0 // pred_check
    _
  $region35: #{_lambda_.9} parent=0 // pred_check_branch
    %913 = sbr.rel (0) target = $region37
  $region36: #{_lambda_.9} parent=0 // pred_region
    _
  $region37: #{_lambda_.9} parent=0 // pred_fallthru
    _

// kernel: _lambda_.10
$region0: #{_lambda_.10}
  #allocation0 [shape = 'u32[]', space=smem, size = 0x4, offset = 0x4, fixed_abs, tag = 'smem constant byte address 0x4 - core index']
  #allocation1 [shape = 'u32[144,128]{1,0:T(1,128)}', space=vmem, size = 0x12000, scoped, tag = 'internal scratch']
  %s0 = inlined_call_operand.vmem [shape: f32[512,128], index: 0, kind: input, shape index: {}]
  %s1 = inlined_call_operand.vmem [shape: f32[1,128], index: 1, kind: input, shape index: {}]
  %s2 = inlined_call_operand.vmem [shape: f32[1,128], index: 2, kind: input, shape index: {}]
  %s3 = inlined_call_operand.vmem [shape: f32[512,128], index: 3, kind: output, shape index: {}]
  %s4 = sld [smem:[#allocation0]]
  $region22: #{_lambda_.10} parent=0
    _
  %s6 = ssub.s32 1, %s4
  %s7 = scalar_select 0, %s6, %s4
  // Predicated region
  $region2: #{_lambda_.10} parent=0 // pred_check
    _
  $region3: #{_lambda_.10} parent=0 // pred_check_branch
    %9 = sbr.rel (0) target = $region5
  $region4: #{_lambda_.10} parent=0 // pred_region
    _
  $region5: #{_lambda_.10} parent=0 // pred_fallthru
    _
  // Predicated region
  $region6: #{_lambda_.10} parent=0 // pred_check
    _
  $region7: #{_lambda_.10} parent=0 // pred_check_branch
    %11 = sbr.rel (0) target = $region9
  $region8: #{_lambda_.10} parent=0 // pred_region
    _
  $region9: #{_lambda_.10} parent=0 // pred_fallthru
    _
  // Predicated region
  $region10: #{_lambda_.10} parent=0 // pred_check
    _
  $region11: #{_lambda_.10} parent=0 // pred_check_branch
    %13 = sbr.rel (0) target = $region13
  $region12: #{_lambda_.10} parent=0 // pred_region
    _
  $region13: #{_lambda_.10} parent=0 // pred_fallthru
    _
  %v14 = vld [vmem:[%s0] sm:$0xff]
  %v15 = vld [vmem:[%s0 + $0x8] sm:$0xff]
  %v16 = vld [vmem:[%s0 + $0x10] sm:$0xff]
  %v17 = vld [vmem:[%s0 + $0x18] sm:$0xff]
  %v18 = vld [vmem:[%s0 + $0x20] sm:$0xff]
  %v19 = vld [vmem:[%s0 + $0x28] sm:$0xff]
  %v20 = vld [vmem:[%s0 + $0x30] sm:$0xff]
  %v21 = vld [vmem:[%s0 + $0x38] sm:$0xff]
  %v22 = vld [vmem:[%s0 + $0x40] sm:$0xff]
  %v23 = vld [vmem:[%s0 + $0x48] sm:$0xff]
  %v24 = vld [vmem:[%s0 + $0x50] sm:$0xff]
  %v25 = vld [vmem:[%s0 + $0x58] sm:$0xff]
  %v26 = vld [vmem:[%s0 + $0x60] sm:$0xff]
  %v27 = vld [vmem:[%s0 + $0x68] sm:$0xff]
  %v28 = vld [vmem:[%s0 + $0x70] sm:$0xff]
  %v29 = vld [vmem:[%s0 + $0x78] sm:$0xff]
  %v30 = vld [vmem:[%s0 + $0x80] sm:$0xff]
  %v31 = vld [vmem:[%s0 + $0x88] sm:$0xff]
  %v32 = vld [vmem:[%s0 + $0x90] sm:$0xff]
  %v33 = vld [vmem:[%s0 + $0x98] sm:$0xff]
  %v34 = vld [vmem:[%s0 + $0xa0] sm:$0xff]
  %v35 = vld [vmem:[%s0 + $0xa8] sm:$0xff]
  %v36 = vld [vmem:[%s0 + $0xb0] sm:$0xff]
  %v37 = vld [vmem:[%s0 + $0xb8] sm:$0xff]
  %v38 = vld [vmem:[%s0 + $0xc0] sm:$0xff]
  %v39 = vld [vmem:[%s0 + $0xc8] sm:$0xff]
  %v40 = vld [vmem:[%s0 + $0xd0] sm:$0xff]
  %v41 = vld [vmem:[%s0 + $0xd8] sm:$0xff]
  %v42 = vld [vmem:[%s0 + $0xe0] sm:$0xff]
  %v43 = vld [vmem:[%s0 + $0xe8] sm:$0xff]
  %v44 = vld [vmem:[%s0 + $0xf0] sm:$0xff]
  %v45 = vld [vmem:[%s0 + $0xf8] sm:$0xff]
  %v46 = vld [vmem:[%s0 + $0x100] sm:$0xff]
  %v47 = vld [vmem:[%s0 + $0x108] sm:$0xff]
  %v48 = vld [vmem:[%s0 + $0x110] sm:$0xff]
  %v49 = vld [vmem:[%s0 + $0x118] sm:$0xff]
  %v50 = vld [vmem:[%s0 + $0x120] sm:$0xff]
  %v51 = vld [vmem:[%s0 + $0x128] sm:$0xff]
  %v52 = vld [vmem:[%s0 + $0x130] sm:$0xff]
  %v53 = vld [vmem:[%s0 + $0x138] sm:$0xff]
  %v54 = vld [vmem:[%s0 + $0x140] sm:$0xff]
  %v55 = vld [vmem:[%s0 + $0x148] sm:$0xff]
  %v56 = vld [vmem:[%s0 + $0x150] sm:$0xff]
  %v57 = vld [vmem:[%s0 + $0x158] sm:$0xff]
  %v58 = vld [vmem:[%s0 + $0x160] sm:$0xff]
  %v59 = vld [vmem:[%s0 + $0x168] sm:$0xff]
  %v60 = vld [vmem:[%s0 + $0x170] sm:$0xff]
  %v61 = vld [vmem:[%s0 + $0x178] sm:$0xff]
  %v62 = vld [vmem:[%s0 + $0x180] sm:$0xff]
  %v63 = vld [vmem:[%s0 + $0x188] sm:$0xff]
  %v64 = vld [vmem:[%s0 + $0x190] sm:$0xff]
  %v65 = vld [vmem:[%s0 + $0x198] sm:$0xff]
  %v66 = vld [vmem:[%s0 + $0x1a0] sm:$0xff]
  %v67 = vld [vmem:[%s0 + $0x1a8] sm:$0xff]
  %v68 = vld [vmem:[%s0 + $0x1b0] sm:$0xff]
  %v69 = vld [vmem:[%s0 + $0x1b8] sm:$0xff]
  %v70 = vld [vmem:[%s0 + $0x1c0] sm:$0xff]
  %v71 = vld [vmem:[%s0 + $0x1c8] sm:$0xff]
  %v72 = vld [vmem:[%s0 + $0x1d0] sm:$0xff]
  %v73 = vld [vmem:[%s0 + $0x1d8] sm:$0xff]
  %v74 = vld [vmem:[%s0 + $0x1e0] sm:$0xff]
  %v75 = vld [vmem:[%s0 + $0x1e8] sm:$0xff]
  %v76 = vld [vmem:[%s0 + $0x1f0] sm:$0xff]
  %v77 = vld [vmem:[%s0 + $0x1f8] sm:$0xff]
  %v78 = vld [vmem:[%s1] sm:$0x1]
  %v80 = vlaneseq
  %v81 = vshrl.u32 %v80, 7
  %v82 = vsub.s32 0, %v81
  %v83 = vrot.slane %v78, %v82
  %v85 = vmul.f32 %v14, %v83
  %v86 = vmul.f32 %v15, %v83
  %v87 = vmul.f32 %v16, %v83
  %v88 = vmul.f32 %v17, %v83
  %v89 = vmul.f32 %v18, %v83
  %v90 = vmul.f32 %v19, %v83
  %v91 = vmul.f32 %v20, %v83
  %v92 = vmul.f32 %v21, %v83
  %v93 = vmul.f32 %v22, %v83
  %v94 = vmul.f32 %v23, %v83
  %v95 = vmul.f32 %v24, %v83
  %v96 = vmul.f32 %v25, %v83
  %v97 = vmul.f32 %v26, %v83
  %v98 = vmul.f32 %v27, %v83
  %v99 = vmul.f32 %v28, %v83
  %v100 = vmul.f32 %v29, %v83
  %v101 = vmul.f32 %v30, %v83
  %v102 = vmul.f32 %v31, %v83
  %v103 = vmul.f32 %v32, %v83
  %v104 = vmul.f32 %v33, %v83
  %v105 = vmul.f32 %v34, %v83
  %v106 = vmul.f32 %v35, %v83
  %v107 = vmul.f32 %v36, %v83
  %v108 = vmul.f32 %v37, %v83
  %v109 = vmul.f32 %v38, %v83
  %v110 = vmul.f32 %v39, %v83
  %v111 = vmul.f32 %v40, %v83
  %v112 = vmul.f32 %v41, %v83
  %v113 = vmul.f32 %v42, %v83
  %v114 = vmul.f32 %v43, %v83
  %v115 = vmul.f32 %v44, %v83
  %v116 = vmul.f32 %v45, %v83
  %v117 = vmul.f32 %v46, %v83
  %v118 = vmul.f32 %v47, %v83
  %v119 = vmul.f32 %v48, %v83
  %v120 = vmul.f32 %v49, %v83
  %v121 = vmul.f32 %v50, %v83
  %v122 = vmul.f32 %v51, %v83
  %v123 = vmul.f32 %v52, %v83
  %v124 = vmul.f32 %v53, %v83
  %v125 = vmul.f32 %v54, %v83
  %v126 = vmul.f32 %v55, %v83
  %v127 = vmul.f32 %v56, %v83
  %v128 = vmul.f32 %v57, %v83
  %v129 = vmul.f32 %v58, %v83
  %v130 = vmul.f32 %v59, %v83
  %v131 = vmul.f32 %v60, %v83
  %v132 = vmul.f32 %v61, %v83
  %v133 = vmul.f32 %v62, %v83
  %v134 = vmul.f32 %v63, %v83
  %v135 = vmul.f32 %v64, %v83
  %v136 = vmul.f32 %v65, %v83
  %v137 = vmul.f32 %v66, %v83
  %v138 = vmul.f32 %v67, %v83
  %v139 = vmul.f32 %v68, %v83
  %v140 = vmul.f32 %v69, %v83
  %v141 = vmul.f32 %v70, %v83
  %v142 = vmul.f32 %v71, %v83
  %v143 = vmul.f32 %v72, %v83
  %v144 = vmul.f32 %v73, %v83
  %v145 = vmul.f32 %v74, %v83
  %v146 = vmul.f32 %v75, %v83
  %v147 = vmul.f32 %v76, %v83
  %v148 = vmul.f32 %v77, %v83
  %v149 = vld [vmem:[%s2] sm:$0x1]
  %v151 = vlaneseq
  %v152 = vshrl.u32 %v151, 7
  %v153 = vsub.s32 0, %v152
  %v154 = vrot.slane %v149, %v153
  %v156 = vadd.f32 %v85, %v154
  %v157 = vadd.f32 %v86, %v154
  %v158 = vadd.f32 %v87, %v154
  %v159 = vadd.f32 %v88, %v154
  %v160 = vadd.f32 %v89, %v154
  %v161 = vadd.f32 %v90, %v154
  %v162 = vadd.f32 %v91, %v154
  %v163 = vadd.f32 %v92, %v154
  %v164 = vadd.f32 %v93, %v154
  %v165 = vadd.f32 %v94, %v154
  %v166 = vadd.f32 %v95, %v154
  %v167 = vadd.f32 %v96, %v154
  %v168 = vadd.f32 %v97, %v154
  %v169 = vadd.f32 %v98, %v154
  %v170 = vadd.f32 %v99, %v154
  %v171 = vadd.f32 %v100, %v154
  %v172 = vadd.f32 %v101, %v154
  %v173 = vadd.f32 %v102, %v154
  %v174 = vadd.f32 %v103, %v154
  %v175 = vadd.f32 %v104, %v154
  %v176 = vadd.f32 %v105, %v154
  %v177 = vadd.f32 %v106, %v154
  %v178 = vadd.f32 %v107, %v154
  %v179 = vadd.f32 %v108, %v154
  %v180 = vadd.f32 %v109, %v154
  %v181 = vadd.f32 %v110, %v154
  %v182 = vadd.f32 %v111, %v154
  %v183 = vadd.f32 %v112, %v154
  %v184 = vadd.f32 %v113, %v154
  %v185 = vadd.f32 %v114, %v154
  %v186 = vadd.f32 %v115, %v154
  %v187 = vadd.f32 %v116, %v154
  %v188 = vadd.f32 %v117, %v154
  %v189 = vadd.f32 %v118, %v154
  %v190 = vadd.f32 %v119, %v154
  %v191 = vadd.f32 %v120, %v154
  %v192 = vadd.f32 %v121, %v154
  %v193 = vadd.f32 %v122, %v154
  %v194 = vadd.f32 %v123, %v154
  %v195 = vadd.f32 %v124, %v154
  %v196 = vadd.f32 %v125, %v154
  %v197 = vadd.f32 %v126, %v154
  %v198 = vadd.f32 %v127, %v154
  %v199 = vadd.f32 %v128, %v154
  %v200 = vadd.f32 %v129, %v154
  %v201 = vadd.f32 %v130, %v154
  %v202 = vadd.f32 %v131, %v154
  %v203 = vadd.f32 %v132, %v154
  %v204 = vadd.f32 %v133, %v154
  %v205 = vadd.f32 %v134, %v154
  %v206 = vadd.f32 %v135, %v154
  %v207 = vadd.f32 %v136, %v154
  %v208 = vadd.f32 %v137, %v154
  %v209 = vadd.f32 %v138, %v154
  %v210 = vadd.f32 %v139, %v154
  %v211 = vadd.f32 %v140, %v154
  %v212 = vadd.f32 %v141, %v154
  %v213 = vadd.f32 %v142, %v154
  %v214 = vadd.f32 %v143, %v154
  %v215 = vadd.f32 %v144, %v154
  %v216 = vadd.f32 %v145, %v154
  %v217 = vadd.f32 %v146, %v154
  %v218 = vadd.f32 %v147, %v154
  %v219 = vadd.f32 %v148, %v154
  %vm220 = vcmp.gt.f32.partialorder %v156, 0.0
  %vm221 = vcmp.gt.f32.partialorder %v157, 0.0
  %vm222 = vcmp.gt.f32.partialorder %v158, 0.0
  %vm223 = vcmp.gt.f32.partialorder %v159, 0.0
  %vm224 = vcmp.gt.f32.partialorder %v160, 0.0
  %vm225 = vcmp.gt.f32.partialorder %v161, 0.0
  %vm226 = vcmp.gt.f32.partialorder %v162, 0.0
  %vm227 = vcmp.gt.f32.partialorder %v163, 0.0
  %vm228 = vcmp.gt.f32.partialorder %v164, 0.0
  %vm229 = vcmp.gt.f32.partialorder %v165, 0.0
  %vm230 = vcmp.gt.f32.partialorder %v166, 0.0
  %vm231 = vcmp.gt.f32.partialorder %v167, 0.0
  %vm232 = vcmp.gt.f32.partialorder %v168, 0.0
  %vm233 = vcmp.gt.f32.partialorder %v169, 0.0
  %vm234 = vcmp.gt.f32.partialorder %v170, 0.0
  %vm235 = vcmp.gt.f32.partialorder %v171, 0.0
  %vm236 = vcmp.gt.f32.partialorder %v172, 0.0
  %vm237 = vcmp.gt.f32.partialorder %v173, 0.0
  %vm238 = vcmp.gt.f32.partialorder %v174, 0.0
  %vm239 = vcmp.gt.f32.partialorder %v175, 0.0
  %vm240 = vcmp.gt.f32.partialorder %v176, 0.0
  %vm241 = vcmp.gt.f32.partialorder %v177, 0.0
  %vm242 = vcmp.gt.f32.partialorder %v178, 0.0
  %vm243 = vcmp.gt.f32.partialorder %v179, 0.0
  %vm244 = vcmp.gt.f32.partialorder %v180, 0.0
  %vm245 = vcmp.gt.f32.partialorder %v181, 0.0
  %vm246 = vcmp.gt.f32.partialorder %v182, 0.0
  %vm247 = vcmp.gt.f32.partialorder %v183, 0.0
  %vm248 = vcmp.gt.f32.partialorder %v184, 0.0
  %vm249 = vcmp.gt.f32.partialorder %v185, 0.0
  %vm250 = vcmp.gt.f32.partialorder %v186, 0.0
  %vm251 = vcmp.gt.f32.partialorder %v187, 0.0
  %vm252 = vcmp.gt.f32.partialorder %v188, 0.0
  %vm253 = vcmp.gt.f32.partialorder %v189, 0.0
  %vm254 = vcmp.gt.f32.partialorder %v190, 0.0
  %vm255 = vcmp.gt.f32.partialorder %v191, 0.0
  %vm256 = vcmp.gt.f32.partialorder %v192, 0.0
  %vm257 = vcmp.gt.f32.partialorder %v193, 0.0
  %vm258 = vcmp.gt.f32.partialorder %v194, 0.0
  %vm259 = vcmp.gt.f32.partialorder %v195, 0.0
  %vm260 = vcmp.gt.f32.partialorder %v196, 0.0
  %vm261 = vcmp.gt.f32.partialorder %v197, 0.0
  %vm262 = vcmp.gt.f32.partialorder %v198, 0.0
  %vm263 = vcmp.gt.f32.partialorder %v199, 0.0
  %vm264 = vcmp.gt.f32.partialorder %v200, 0.0
  %vm265 = vcmp.gt.f32.partialorder %v201, 0.0
  %vm266 = vcmp.gt.f32.partialorder %v202, 0.0
  %vm267 = vcmp.gt.f32.partialorder %v203, 0.0
  %vm268 = vcmp.gt.f32.partialorder %v204, 0.0
  %vm269 = vcmp.gt.f32.partialorder %v205, 0.0
  %vm270 = vcmp.gt.f32.partialorder %v206, 0.0
  %vm271 = vcmp.gt.f32.partialorder %v207, 0.0
  %vm272 = vcmp.gt.f32.partialorder %v208, 0.0
  %vm273 = vcmp.gt.f32.partialorder %v209, 0.0
  %vm274 = vcmp.gt.f32.partialorder %v210, 0.0
  %vm275 = vcmp.gt.f32.partialorder %v211, 0.0
  %vm276 = vcmp.gt.f32.partialorder %v212, 0.0
  %vm277 = vcmp.gt.f32.partialorder %v213, 0.0
  %vm278 = vcmp.gt.f32.partialorder %v214, 0.0
  %vm279 = vcmp.gt.f32.partialorder %v215, 0.0
  %vm280 = vcmp.gt.f32.partialorder %v216, 0.0
  %vm281 = vcmp.gt.f32.partialorder %v217, 0.0
  %vm282 = vcmp.gt.f32.partialorder %v218, 0.0
  %vm283 = vcmp.gt.f32.partialorder %v219, 0.0
  %v284 = vmul.f32 %v156, 0.2
  %v285 = vmul.f32 %v157, 0.2
  %v286 = vmul.f32 %v158, 0.2
  %v287 = vmul.f32 %v159, 0.2
  %v288 = vmul.f32 %v160, 0.2
  %v289 = vmul.f32 %v161, 0.2
  %v290 = vmul.f32 %v162, 0.2
  %v291 = vmul.f32 %v163, 0.2
  %v292 = vmul.f32 %v164, 0.2
  %v293 = vmul.f32 %v165, 0.2
  %v294 = vmul.f32 %v166, 0.2
  %v295 = vmul.f32 %v167, 0.2
  %v296 = vmul.f32 %v168, 0.2
  %v297 = vmul.f32 %v169, 0.2
  %v298 = vmul.f32 %v170, 0.2
  %v299 = vmul.f32 %v171, 0.2
  %v300 = vmul.f32 %v172, 0.2
  %v301 = vmul.f32 %v173, 0.2
  %v302 = vmul.f32 %v174, 0.2
  %v303 = vmul.f32 %v175, 0.2
  %v304 = vmul.f32 %v176, 0.2
  %v305 = vmul.f32 %v177, 0.2
  %v306 = vmul.f32 %v178, 0.2
  %v307 = vmul.f32 %v179, 0.2
  %v308 = vmul.f32 %v180, 0.2
  %v309 = vmul.f32 %v181, 0.2
  %v310 = vmul.f32 %v182, 0.2
  %v311 = vmul.f32 %v183, 0.2
  %v312 = vmul.f32 %v184, 0.2
  %v313 = vmul.f32 %v185, 0.2
  %v314 = vmul.f32 %v186, 0.2
  %v315 = vmul.f32 %v187, 0.2
  %v316 = vmul.f32 %v188, 0.2
  %v317 = vmul.f32 %v189, 0.2
  %v318 = vmul.f32 %v190, 0.2
  %v319 = vmul.f32 %v191, 0.2
  %v320 = vmul.f32 %v192, 0.2
  %v321 = vmul.f32 %v193, 0.2
  %v322 = vmul.f32 %v194, 0.2
  %v323 = vmul.f32 %v195, 0.2
  %v324 = vmul.f32 %v196, 0.2
  %v325 = vmul.f32 %v197, 0.2
  %v326 = vmul.f32 %v198, 0.2
  %v327 = vmul.f32 %v199, 0.2
  %v328 = vmul.f32 %v200, 0.2
  %v329 = vmul.f32 %v201, 0.2
  %v330 = vmul.f32 %v202, 0.2
  %v331 = vmul.f32 %v203, 0.2
  %v332 = vmul.f32 %v204, 0.2
  %v333 = vmul.f32 %v205, 0.2
  %v334 = vmul.f32 %v206, 0.2
  %v335 = vmul.f32 %v207, 0.2
  %v336 = vmul.f32 %v208, 0.2
  %v337 = vmul.f32 %v209, 0.2
  %v338 = vmul.f32 %v210, 0.2
  %v339 = vmul.f32 %v211, 0.2
  %v340 = vmul.f32 %v212, 0.2
  %v341 = vmul.f32 %v213, 0.2
  %v342 = vmul.f32 %v214, 0.2
  %v343 = vmul.f32 %v215, 0.2
  %v344 = vmul.f32 %v216, 0.2
  %v345 = vmul.f32 %v217, 0.2
  %v346 = vmul.f32 %v218, 0.2
  %v347 = vmul.f32 %v219, 0.2
  %v348 = vsel %vm220, %v156, %v284
  %v349 = vsel %vm221, %v157, %v285
  %v350 = vsel %vm222, %v158, %v286
  %v351 = vsel %vm223, %v159, %v287
  %v352 = vsel %vm224, %v160, %v288
  %v353 = vsel %vm225, %v161, %v289
  %v354 = vsel %vm226, %v162, %v290
  %v355 = vsel %vm227, %v163, %v291
  %v356 = vsel %vm228, %v164, %v292
  %v357 = vsel %vm229, %v165, %v293
  %v358 = vsel %vm230, %v166, %v294
  %v359 = vsel %vm231, %v167, %v295
  %v360 = vsel %vm232, %v168, %v296
  %v361 = vsel %vm233, %v169, %v297
  %v362 = vsel %vm234, %v170, %v298
  %v363 = vsel %vm235, %v171, %v299
  %v364 = vsel %vm236, %v172, %v300
  %v365 = vsel %vm237, %v173, %v301
  %v366 = vsel %vm238, %v174, %v302
  %v367 = vsel %vm239, %v175, %v303
  %v368 = vsel %vm240, %v176, %v304
  %v369 = vsel %vm241, %v177, %v305
  %v370 = vsel %vm242, %v178, %v306
  %v371 = vsel %vm243, %v179, %v307
  %v372 = vsel %vm244, %v180, %v308
  %v373 = vsel %vm245, %v181, %v309
  %v374 = vsel %vm246, %v182, %v310
  %v375 = vsel %vm247, %v183, %v311
  %v376 = vsel %vm248, %v184, %v312
  %v377 = vsel %vm249, %v185, %v313
  %v378 = vsel %vm250, %v186, %v314
  %v379 = vsel %vm251, %v187, %v315
  %v380 = vsel %vm252, %v188, %v316
  %v381 = vsel %vm253, %v189, %v317
  %v382 = vsel %vm254, %v190, %v318
  %v383 = vsel %vm255, %v191, %v319
  %v384 = vsel %vm256, %v192, %v320
  %v385 = vsel %vm257, %v193, %v321
  %v386 = vsel %vm258, %v194, %v322
  %v387 = vsel %vm259, %v195, %v323
  %v388 = vsel %vm260, %v196, %v324
  %v389 = vsel %vm261, %v197, %v325
  %v390 = vsel %vm262, %v198, %v326
  %v391 = vsel %vm263, %v199, %v327
  %v392 = vsel %vm264, %v200, %v328
  %v393 = vsel %vm265, %v201, %v329
  %v394 = vsel %vm266, %v202, %v330
  %v395 = vsel %vm267, %v203, %v331
  %v396 = vsel %vm268, %v204, %v332
  %v397 = vsel %vm269, %v205, %v333
  %v398 = vsel %vm270, %v206, %v334
  %v399 = vsel %vm271, %v207, %v335
  %v400 = vsel %vm272, %v208, %v336
  %v401 = vsel %vm273, %v209, %v337
  %v402 = vsel %vm274, %v210, %v338
  %v403 = vsel %vm275, %v211, %v339
  %v404 = vsel %vm276, %v212, %v340
  %v405 = vsel %vm277, %v213, %v341
  %v406 = vsel %vm278, %v214, %v342
  %v407 = vsel %vm279, %v215, %v343
  %v408 = vsel %vm280, %v216, %v344
  %v409 = vsel %vm281, %v217, %v345
  %v410 = vsel %vm282, %v218, %v346
  %v411 = vsel %vm283, %v219, %v347
  %412 = vst [vmem:[%s3] sm:$0xff] %v348
  %413 = vst [vmem:[%s3 + $0x8] sm:$0xff] %v349
  %414 = vst [vmem:[%s3 + $0x10] sm:$0xff] %v350
  %415 = vst [vmem:[%s3 + $0x18] sm:$0xff] %v351
  %416 = vst [vmem:[%s3 + $0x20] sm:$0xff] %v352
  %417 = vst [vmem:[%s3 + $0x28] sm:$0xff] %v353
  %418 = vst [vmem:[%s3 + $0x30] sm:$0xff] %v354
  %419 = vst [vmem:[%s3 + $0x38] sm:$0xff] %v355
  %420 = vst [vmem:[%s3 + $0x40] sm:$0xff] %v356
  %421 = vst [vmem:[%s3 + $0x48] sm:$0xff] %v357
  %422 = vst [vmem:[%s3 + $0x50] sm:$0xff] %v358
  %423 = vst [vmem:[%s3 + $0x58] sm:$0xff] %v359
  %424 = vst [vmem:[%s3 + $0x60] sm:$0xff] %v360
  %425 = vst [vmem:[%s3 + $0x68] sm:$0xff] %v361
  %426 = vst [vmem:[%s3 + $0x70] sm:$0xff] %v362
  %427 = vst [vmem:[%s3 + $0x78] sm:$0xff] %v363
  %428 = vst [vmem:[%s3 + $0x80] sm:$0xff] %v364
  %429 = vst [vmem:[%s3 + $0x88] sm:$0xff] %v365
  %430 = vst [vmem:[%s3 + $0x90] sm:$0xff] %v366
  %431 = vst [vmem:[%s3 + $0x98] sm:$0xff] %v367
  %432 = vst [vmem:[%s3 + $0xa0] sm:$0xff] %v368
  %433 = vst [vmem:[%s3 + $0xa8] sm:$0xff] %v369
  %434 = vst [vmem:[%s3 + $0xb0] sm:$0xff] %v370
  %435 = vst [vmem:[%s3 + $0xb8] sm:$0xff] %v371
  %436 = vst [vmem:[%s3 + $0xc0] sm:$0xff] %v372
  %437 = vst [vmem:[%s3 + $0xc8] sm:$0xff] %v373
  %438 = vst [vmem:[%s3 + $0xd0] sm:$0xff] %v374
  %439 = vst [vmem:[%s3 + $0xd8] sm:$0xff] %v375
  %440 = vst [vmem:[%s3 + $0xe0] sm:$0xff] %v376
  %441 = vst [vmem:[%s3 + $0xe8] sm:$0xff] %v377
  %442 = vst [vmem:[%s3 + $0xf0] sm:$0xff] %v378
  %443 = vst [vmem:[%s3 + $0xf8] sm:$0xff] %v379
  %444 = vst [vmem:[%s3 + $0x100] sm:$0xff] %v380
  %445 = vst [vmem:[%s3 + $0x108] sm:$0xff] %v381
  %446 = vst [vmem:[%s3 + $0x110] sm:$0xff] %v382
  %447 = vst [vmem:[%s3 + $0x118] sm:$0xff] %v383
  %448 = vst [vmem:[%s3 + $0x120] sm:$0xff] %v384
  %449 = vst [vmem:[%s3 + $0x128] sm:$0xff] %v385
  %450 = vst [vmem:[%s3 + $0x130] sm:$0xff] %v386
  %451 = vst [vmem:[%s3 + $0x138] sm:$0xff] %v387
  %452 = vst [vmem:[%s3 + $0x140] sm:$0xff] %v388
  %453 = vst [vmem:[%s3 + $0x148] sm:$0xff] %v389
  %454 = vst [vmem:[%s3 + $0x150] sm:$0xff] %v390
  %455 = vst [vmem:[%s3 + $0x158] sm:$0xff] %v391
  %456 = vst [vmem:[%s3 + $0x160] sm:$0xff] %v392
  %457 = vst [vmem:[%s3 + $0x168] sm:$0xff] %v393
  %458 = vst [vmem:[%s3 + $0x170] sm:$0xff] %v394
  %459 = vst [vmem:[%s3 + $0x178] sm:$0xff] %v395
  %460 = vst [vmem:[%s3 + $0x180] sm:$0xff] %v396
  %461 = vst [vmem:[%s3 + $0x188] sm:$0xff] %v397
  %462 = vst [vmem:[%s3 + $0x190] sm:$0xff] %v398
  %463 = vst [vmem:[%s3 + $0x198] sm:$0xff] %v399
  %464 = vst [vmem:[%s3 + $0x1a0] sm:$0xff] %v400
  %465 = vst [vmem:[%s3 + $0x1a8] sm:$0xff] %v401
  %466 = vst [vmem:[%s3 + $0x1b0] sm:$0xff] %v402
  %467 = vst [vmem:[%s3 + $0x1b8] sm:$0xff] %v403
  %468 = vst [vmem:[%s3 + $0x1c0] sm:$0xff] %v404
  %469 = vst [vmem:[%s3 + $0x1c8] sm:$0xff] %v405
  %470 = vst [vmem:[%s3 + $0x1d0] sm:$0xff] %v406
  %471 = vst [vmem:[%s3 + $0x1d8] sm:$0xff] %v407
  %472 = vst [vmem:[%s3 + $0x1e0] sm:$0xff] %v408
  %473 = vst [vmem:[%s3 + $0x1e8] sm:$0xff] %v409
  %474 = vst [vmem:[%s3 + $0x1f0] sm:$0xff] %v410
  %475 = vst [vmem:[%s3 + $0x1f8] sm:$0xff] %v411
  // Predicated region
  $region14: #{_lambda_.10} parent=0 // pred_check
    _
  $region15: #{_lambda_.10} parent=0 // pred_check_branch
    %477 = sbr.rel (0) target = $region17
  $region16: #{_lambda_.10} parent=0 // pred_region
    _
  $region17: #{_lambda_.10} parent=0 // pred_fallthru
    _
  // Predicated region
  $region18: #{_lambda_.10} parent=0 // pred_check
    _
  $region19: #{_lambda_.10} parent=0 // pred_check_branch
    %479 = sbr.rel (0) target = $region21
  $region20: #{_lambda_.10} parent=0 // pred_region
    _
  $region21: #{_lambda_.10} parent=0 // pred_fallthru
    _

// kernel: _lambda_.11
$region0: #{_lambda_.11}
  #allocation0 [shape = 'u32[]', space=smem, size = 0x4, offset = 0x4, fixed_abs, tag = 'smem constant byte address 0x4 - core index']
  #allocation1 [shape = 'u32[144,128]{1,0:T(1,128)}', space=vmem, size = 0x12000, scoped, tag = 'internal scratch']
  %s0 = inlined_call_operand.vmem [shape: bf16[128,256], index: 0, kind: input, shape index: {}]
  %s1 = inlined_call_operand.vmem [shape: bf16[256,128], index: 1, kind: input, shape index: {}]
  %s2 = inlined_call_operand.vmem [shape: f32[128,128], index: 2, kind: output, shape index: {0}]
  %s3 = inlined_call_operand.vmem [shape: f32[8,128], index: 3, kind: output, shape index: {1}]
  %s4 = inlined_call_operand.vmem [shape: f32[8,128], index: 4, kind: output, shape index: {2}]
  %5 = xla_tuple %s2, %s3, %s4
  %s6 = sld [smem:[#allocation0]]
  $region38: #{_lambda_.11} parent=0
    _
  %s8 = ssub.s32 1, %s6
  %s9 = scalar_select 0, %s8, %s6
  // Predicated region
  $region2: #{_lambda_.11} parent=0 // pred_check
    _
  $region3: #{_lambda_.11} parent=0 // pred_check_branch
    %11 = sbr.rel (0) target = $region5
  $region4: #{_lambda_.11} parent=0 // pred_region
    _
  $region5: #{_lambda_.11} parent=0 // pred_fallthru
    _
  // Predicated region
  $region6: #{_lambda_.11} parent=0 // pred_check
    _
  $region7: #{_lambda_.11} parent=0 // pred_check_branch
    %13 = sbr.rel (0) target = $region9
  $region8: #{_lambda_.11} parent=0 // pred_region
    _
  $region9: #{_lambda_.11} parent=0 // pred_fallthru
    _
  %v15 = vld [vmem:[%s0] sm:$0xff]
  %v16 = vld [vmem:[%s0 + $0x8] sm:$0xff]
  %v17 = vld [vmem:[%s0 + $0x10] sm:$0xff]
  %v18 = vld [vmem:[%s0 + $0x18] sm:$0xff]
  %v19 = vld [vmem:[%s0 + $0x20] sm:$0xff]
  %v20 = vld [vmem:[%s0 + $0x28] sm:$0xff]
  %v21 = vld [vmem:[%s0 + $0x30] sm:$0xff]
  %v22 = vld [vmem:[%s0 + $0x38] sm:$0xff]
  %v23 = vld [vmem:[%s0 + $0x40] sm:$0xff]
  %v24 = vld [vmem:[%s0 + $0x48] sm:$0xff]
  %v25 = vld [vmem:[%s0 + $0x50] sm:$0xff]
  %v26 = vld [vmem:[%s0 + $0x58] sm:$0xff]
  %v27 = vld [vmem:[%s0 + $0x60] sm:$0xff]
  %v28 = vld [vmem:[%s0 + $0x68] sm:$0xff]
  %v29 = vld [vmem:[%s0 + $0x70] sm:$0xff]
  %v30 = vld [vmem:[%s0 + $0x78] sm:$0xff]
  %v31 = vld [vmem:[%s1] sm:$0xf]
  %v32 = vld [vmem:[%s1 + $0x4] sm:$0xf]
  %v33 = vld [vmem:[%s1 + $0x8] sm:$0xf]
  %v34 = vld [vmem:[%s1 + $0xc] sm:$0xf]
  %v35 = vld [vmem:[%s1 + $0x10] sm:$0xf]
  %v36 = vld [vmem:[%s1 + $0x14] sm:$0xf]
  %v37 = vld [vmem:[%s1 + $0x18] sm:$0xf]
  %v38 = vld [vmem:[%s1 + $0x1c] sm:$0xf]
  %v39 = vld [vmem:[%s1 + $0x20] sm:$0xf]
  %v40 = vld [vmem:[%s1 + $0x24] sm:$0xf]
  %v41 = vld [vmem:[%s1 + $0x28] sm:$0xf]
  %v42 = vld [vmem:[%s1 + $0x2c] sm:$0xf]
  %v43 = vld [vmem:[%s1 + $0x30] sm:$0xf]
  %v44 = vld [vmem:[%s1 + $0x34] sm:$0xf]
  %v45 = vld [vmem:[%s1 + $0x38] sm:$0xf]
  %v46 = vld [vmem:[%s1 + $0x3c] sm:$0xf]
  %v47 = vld [vmem:[%s1 + $0x40] sm:$0xf]
  %v48 = vld [vmem:[%s1 + $0x44] sm:$0xf]
  %v49 = vld [vmem:[%s1 + $0x48] sm:$0xf]
  %v50 = vld [vmem:[%s1 + $0x4c] sm:$0xf]
  %v51 = vld [vmem:[%s1 + $0x50] sm:$0xf]
  %v52 = vld [vmem:[%s1 + $0x54] sm:$0xf]
  %v53 = vld [vmem:[%s1 + $0x58] sm:$0xf]
  %v54 = vld [vmem:[%s1 + $0x5c] sm:$0xf]
  %v55 = vld [vmem:[%s1 + $0x60] sm:$0xf]
  %v56 = vld [vmem:[%s1 + $0x64] sm:$0xf]
  %v57 = vld [vmem:[%s1 + $0x68] sm:$0xf]
  %v58 = vld [vmem:[%s1 + $0x6c] sm:$0xf]
  %v59 = vld [vmem:[%s1 + $0x70] sm:$0xf]
  %v60 = vld [vmem:[%s1 + $0x74] sm:$0xf]
  %v61 = vld [vmem:[%s1 + $0x78] sm:$0xf]
  %v62 = vld [vmem:[%s1 + $0x7c] sm:$0xf]
  %v79 = vunpack.c.l.b16 %v15
  %v80 = vunpack.c.h.b16 %v15
  %v81 = vunpack.c.l.b16 %v16
  %v82 = vunpack.c.h.b16 %v16
  %v83 = vunpack.c.l.b16 %v17
  %v84 = vunpack.c.h.b16 %v17
  %v85 = vunpack.c.l.b16 %v18
  %v86 = vunpack.c.h.b16 %v18
  %v87 = vunpack.c.l.b16 %v19
  %v88 = vunpack.c.h.b16 %v19
  %v89 = vunpack.c.l.b16 %v20
  %v90 = vunpack.c.h.b16 %v20
  %v91 = vunpack.c.l.b16 %v21
  %v92 = vunpack.c.h.b16 %v21
  %v93 = vunpack.c.l.b16 %v22
  %v94 = vunpack.c.h.b16 %v22
  %v95 = vunpack.c.l.b16 %v23
  %v96 = vunpack.c.h.b16 %v23
  %v97 = vunpack.c.l.b16 %v24
  %v98 = vunpack.c.h.b16 %v24
  %v99 = vunpack.c.l.b16 %v25
  %v100 = vunpack.c.h.b16 %v25
  %v101 = vunpack.c.l.b16 %v26
  %v102 = vunpack.c.h.b16 %v26
  %v103 = vunpack.c.l.b16 %v27
  %v104 = vunpack.c.h.b16 %v27
  %v105 = vunpack.c.l.b16 %v28
  %v106 = vunpack.c.h.b16 %v28
  %v107 = vunpack.c.l.b16 %v29
  %v108 = vunpack.c.h.b16 %v29
  %v109 = vunpack.c.l.b16 %v30
  %v110 = vunpack.c.h.b16 %v30
  %v111 = vpack.c.b16 %v81, %v79
  %v112 = vpack.c.b16 %v82, %v80
  %v113 = vpack.c.b16 %v85, %v83
  %v114 = vpack.c.b16 %v86, %v84
  %v115 = vpack.c.b16 %v89, %v87
  %v116 = vpack.c.b16 %v90, %v88
  %v117 = vpack.c.b16 %v93, %v91
  %v118 = vpack.c.b16 %v94, %v92
  %v119 = vpack.c.b16 %v97, %v95
  %v120 = vpack.c.b16 %v98, %v96
  %v121 = vpack.c.b16 %v101, %v99
  %v122 = vpack.c.b16 %v102, %v100
  %v123 = vpack.c.b16 %v105, %v103
  %v124 = vpack.c.b16 %v106, %v104
  %v125 = vpack.c.b16 %v109, %v107
  %v126 = vpack.c.b16 %v110, %v108
  %v175 = vunpack.c.l.b16 %v31
  %v176 = vunpack.c.l.b16 %v32
  %v177 = vunpack.c.l.b16 %v33
  %v178 = vunpack.c.l.b16 %v34
  %v179 = vunpack.c.l.b16 %v35
  %v180 = vunpack.c.l.b16 %v36
  %v181 = vunpack.c.l.b16 %v37
  %v182 = vunpack.c.l.b16 %v38
  %v183 = vunpack.c.l.b16 %v39
  %v184 = vunpack.c.l.b16 %v40
  %v185 = vunpack.c.l.b16 %v41
  %v186 = vunpack.c.l.b16 %v42
  %v187 = vunpack.c.l.b16 %v43
  %v188 = vunpack.c.l.b16 %v44
  %v189 = vunpack.c.l.b16 %v45
  %v190 = vunpack.c.l.b16 %v46
  %v191 = vunpack.c.l.b16 %v47
  %v192 = vunpack.c.l.b16 %v48
  %v193 = vunpack.c.l.b16 %v49
  %v194 = vunpack.c.l.b16 %v50
  %v195 = vunpack.c.l.b16 %v51
  %v196 = vunpack.c.l.b16 %v52
  %v197 = vunpack.c.l.b16 %v53
  %v198 = vunpack.c.l.b16 %v54
  %v199 = vunpack.c.l.b16 %v55
  %v200 = vunpack.c.l.b16 %v56
  %v201 = vunpack.c.l.b16 %v57
  %v202 = vunpack.c.l.b16 %v58
  %v203 = vunpack.c.l.b16 %v59
  %v204 = vunpack.c.l.b16 %v60
  %v205 = vunpack.c.l.b16 %v61
  %v206 = vunpack.c.l.b16 %v62
  %v207 = vpack.c.b16 %v176, %v175
  %v208 = vpack.c.b16 %v178, %v177
  %v209 = vpack.c.b16 %v180, %v179
  %v210 = vpack.c.b16 %v182, %v181
  %v211 = vpack.c.b16 %v184, %v183
  %v212 = vpack.c.b16 %v186, %v185
  %v213 = vpack.c.b16 %v188, %v187
  %v214 = vpack.c.b16 %v190, %v189
  %v215 = vpack.c.b16 %v192, %v191
  %v216 = vpack.c.b16 %v194, %v193
  %v217 = vpack.c.b16 %v196, %v195
  %v218 = vpack.c.b16 %v198, %v197
  %v219 = vpack.c.b16 %v200, %v199
  %v220 = vpack.c.b16 %v202, %v201
  %v221 = vpack.c.b16 %v204, %v203
  %v222 = vpack.c.b16 %v206, %v205
  %239 = vmatprep.subr.bf16.mxu0 0
  %240 = vmatpush1.bf16.msra.mxu0 %v207
  %241 = vmatprep.subr.bf16.mxu0 0
  %242 = vmatpush1.bf16.msra.mxu0 %v208
  %243 = vmatprep.subr.bf16.mxu0 0
  %244 = vmatpush1.bf16.msra.mxu0 %v209
  %245 = vmatprep.subr.bf16.mxu0 0
  %246 = vmatpush1.bf16.msra.mxu0 %v210
  %247 = vmatprep.subr.bf16.mxu0 0
  %248 = vmatpush1.bf16.msra.mxu0 %v211
  %249 = vmatprep.subr.bf16.mxu0 0
  %250 = vmatpush1.bf16.msra.mxu0 %v212
  %251 = vmatprep.subr.bf16.mxu0 0
  %252 = vmatpush1.bf16.msra.mxu0 %v213
  %253 = vmatprep.subr.bf16.mxu0 0
  %254 = vmatpush1.bf16.msra.mxu0 %v214
  %255 = vmatprep.subr.bf16.mxu0 0
  %256 = vmatpush1.bf16.msra.mxu0 %v215
  %257 = vmatprep.subr.bf16.mxu0 0
  %258 = vmatpush1.bf16.msra.mxu0 %v216
  %259 = vmatprep.subr.bf16.mxu0 0
  %260 = vmatpush1.bf16.msra.mxu0 %v217
  %261 = vmatprep.subr.bf16.mxu0 0
  %262 = vmatpush1.bf16.msra.mxu0 %v218
  %263 = vmatprep.subr.bf16.mxu0 0
  %264 = vmatpush1.bf16.msra.mxu0 %v219
  %265 = vmatprep.subr.bf16.mxu0 0
  %266 = vmatpush1.bf16.msra.mxu0 %v220
  %267 = vmatprep.subr.bf16.mxu0 0
  %268 = vmatpush1.bf16.msra.mxu0 %v221
  %269 = vmatprep.subr.bf16.mxu0 0
  %270 = vmatpush1.bf16.msra.mxu0 %v222
  %271 = vmatprep.mubr.bf16.mxu0 %v112
  %272 = vmatmul.mubr.bf16.gmra.mrb[0].mxu0 %v111
  %v273 = vpop.f32.mrb[0].mxu0
  %v274 = vadd.f32 0.0, %v273
  %v275 = vpop.f32.mrb[0].mxu0
  %v276 = vpop.f32.mrb[0].mxu0
  %v277 = vadd.f32 0.0, %v276
  %v278 = vpop.f32.mrb[0].mxu0
  %279 = vmatprep.mubr.bf16.mxu0 %v114
  %280 = vmatmul.mubr.bf16.gmra.mrb[0].mxu0 %v113
  %v281 = vpop.f32.mrb[0].mxu0
  %v282 = vadd.f32 0.0, %v281
  %v283 = vpop.f32.mrb[0].mxu0
  %v284 = vpop.f32.mrb[0].mxu0
  %v285 = vadd.f32 0.0, %v284
  %v286 = vpop.f32.mrb[0].mxu0
  %287 = vmatprep.mubr.bf16.mxu0 %v116
  %288 = vmatmul.mubr.bf16.gmra.mrb[0].mxu0 %v115
  %v289 = vpop.f32.mrb[0].mxu0
  %v290 = vadd.f32 0.0, %v289
  %v291 = vpop.f32.mrb[0].mxu0
  %v292 = vpop.f32.mrb[0].mxu0
  %v293 = vadd.f32 0.0, %v292
  %v294 = vpop.f32.mrb[0].mxu0
  %295 = vmatprep.mubr.bf16.mxu0 %v118
  %296 = vmatmul.mubr.bf16.gmra.mrb[0].mxu0 %v117
  %v297 = vpop.f32.mrb[0].mxu0
  %v298 = vadd.f32 0.0, %v297
  %v299 = vpop.f32.mrb[0].mxu0
  %v300 = vpop.f32.mrb[0].mxu0
  %v301 = vadd.f32 0.0, %v300
  %v302 = vpop.f32.mrb[0].mxu0
  %303 = vmatprep.mubr.bf16.mxu0 %v120
  %304 = vmatmul.mubr.bf16.gmra.mrb[0].mxu0 %v119
  %v305 = vpop.f32.mrb[0].mxu0
  %v306 = vadd.f32 0.0, %v305
  %v307 = vpop.f32.mrb[0].mxu0
  %v308 = vpop.f32.mrb[0].mxu0
  %v309 = vadd.f32 0.0, %v308
  %v310 = vpop.f32.mrb[0].mxu0
  %311 = vmatprep.mubr.bf16.mxu0 %v122
  %312 = vmatmul.mubr.bf16.gmra.mrb[0].mxu0 %v121
  %v313 = vpop.f32.mrb[0].mxu0
  %v314 = vadd.f32 0.0, %v313
  %v315 = vpop.f32.mrb[0].mxu0
  %v316 = vpop.f32.mrb[0].mxu0
  %v317 = vadd.f32 0.0, %v316
  %v318 = vpop.f32.mrb[0].mxu0
  %319 = vmatprep.mubr.bf16.mxu0 %v124
  %320 = vmatmul.mubr.bf16.gmra.mrb[0].mxu0 %v123
  %v321 = vpop.f32.mrb[0].mxu0
  %v322 = vadd.f32 0.0, %v321
  %v323 = vpop.f32.mrb[0].mxu0
  %v324 = vpop.f32.mrb[0].mxu0
  %v325 = vadd.f32 0.0, %v324
  %v326 = vpop.f32.mrb[0].mxu0
  %327 = vmatprep.mubr.bf16.mxu0 %v126
  %328 = vmatmul.mubr.bf16.gmra.mrb[0].mxu0 %v125
  %v329 = vpop.f32.mrb[0].mxu0
  %v330 = vadd.f32 0.0, %v329
  %v331 = vpop.f32.mrb[0].mxu0
  %v332 = vpop.f32.mrb[0].mxu0
  %v333 = vadd.f32 0.0, %v332
  %v334 = vpop.f32.mrb[0].mxu0
  %335 = vdwg.mxu0
  %336 = vst [vmem:[%s2] sm:$0xff] %v274
  %337 = vst [vmem:[%s2 + $0x8] sm:$0xff] %v277
  %338 = vst [vmem:[%s2 + $0x10] sm:$0xff] %v282
  %339 = vst [vmem:[%s2 + $0x18] sm:$0xff] %v285
  %340 = vst [vmem:[%s2 + $0x20] sm:$0xff] %v290
  %341 = vst [vmem:[%s2 + $0x28] sm:$0xff] %v293
  %342 = vst [vmem:[%s2 + $0x30] sm:$0xff] %v298
  %343 = vst [vmem:[%s2 + $0x38] sm:$0xff] %v301
  %344 = vst [vmem:[%s2 + $0x40] sm:$0xff] %v306
  %345 = vst [vmem:[%s2 + $0x48] sm:$0xff] %v309
  %346 = vst [vmem:[%s2 + $0x50] sm:$0xff] %v314
  %347 = vst [vmem:[%s2 + $0x58] sm:$0xff] %v317
  %348 = vst [vmem:[%s2 + $0x60] sm:$0xff] %v322
  %349 = vst [vmem:[%s2 + $0x68] sm:$0xff] %v325
  %350 = vst [vmem:[%s2 + $0x70] sm:$0xff] %v330
  %351 = vst [vmem:[%s2 + $0x78] sm:$0xff] %v333
  %p352 = scmp.eq.s32.totalorder 0, 0
  // Predicated region
  $region10: #{_lambda_.11} parent=0 // pred_check
    %p353 = pneg %p352
  $region11: #{_lambda_.11} parent=0 // pred_check_branch
    %355 = sbr.rel (%p353) target = $region13
  $region12: #{_lambda_.11} parent=0 // pred_region
    %356 = vst [vmem:[%s3] sm:$0xff] 0.0
    %357 = vst [vmem:[%s4] sm:$0xff] 0.0
  $region13: #{_lambda_.11} parent=0 // pred_fallthru
    _
  %v358 = vld [vmem:[%s3] sm:$0xff]
  %v359 = vadd.f32 %v274, %v277
  %v360 = vadd.f32 %v359, %v282
  %v361 = vadd.f32 %v360, %v285
  %v362 = vadd.f32 %v361, %v290
  %v363 = vadd.f32 %v362, %v293
  %v364 = vadd.f32 %v363, %v298
  %v365 = vadd.f32 %v364, %v301
  %v366 = vadd.f32 %v365, %v306
  %v367 = vadd.f32 %v366, %v309
  %v368 = vadd.f32 %v367, %v314
  %v369 = vadd.f32 %v368, %v317
  %v370 = vadd.f32 %v369, %v322
  %v371 = vadd.f32 %v370, %v325
  %v372 = vadd.f32 %v371, %v330
  %v373 = vadd.f32 %v372, %v333
  %v374 = vrot.slane %v373, 4
  %v375 = vadd.f32 %v373, %v374
  %v376 = vrot.slane %v375, 2
  %v377 = vadd.f32 %v375, %v376
  %v378 = vrot.slane %v377, 1
  %v379 = vadd.f32 %v377, %v378
  %v380 = vadd.f32 %v358, %v379
  %381 = vst [vmem:[%s3] sm:$0xff] %v380
  %v382 = vld [vmem:[%s4] sm:$0xff]
  %v383 = vmul.f32 %v274, %v274
  %v384 = vmul.f32 %v277, %v277
  %v385 = vmul.f32 %v282, %v282
  %v386 = vmul.f32 %v285, %v285
  %v387 = vmul.f32 %v290, %v290
  %v388 = vmul.f32 %v293, %v293
  %v389 = vmul.f32 %v298, %v298
  %v390 = vmul.f32 %v301, %v301
  %v391 = vmul.f32 %v306, %v306
  %v392 = vmul.f32 %v309, %v309
  %v393 = vmul.f32 %v314, %v314
  %v394 = vmul.f32 %v317, %v317
  %v395 = vmul.f32 %v322, %v322
  %v396 = vmul.f32 %v325, %v325
  %v397 = vmul.f32 %v330, %v330
  %v398 = vmul.f32 %v333, %v333
  %v399 = vadd.f32 %v383, %v384
  %v400 = vadd.f32 %v399, %v385
  %v401 = vadd.f32 %v400, %v386
  %v402 = vadd.f32 %v401, %v387
  %v403 = vadd.f32 %v402, %v388
  %v404 = vadd.f32 %v403, %v389
  %v405 = vadd.f32 %v404, %v390
  %v406 = vadd.f32 %v405, %v391
  %v407 = vadd.f32 %v406, %v392
  %v408 = vadd.f32 %v407, %v393
  %v409 = vadd.f32 %v408, %v394
  %v410 = vadd.f32 %v409, %v395
  %v411 = vadd.f32 %v410, %v396
  %v412 = vadd.f32 %v411, %v397
  %v413 = vadd.f32 %v412, %v398
  %v414 = vrot.slane %v413, 4
  %v415 = vadd.f32 %v413, %v414
  %v416 = vrot.slane %v415, 2
  %v417 = vadd.f32 %v415, %v416
  %v418 = vrot.slane %v417, 1
  %v419 = vadd.f32 %v417, %v418
  %v420 = vadd.f32 %v382, %v419
  %421 = vst [vmem:[%s4] sm:$0xff] %v420
  // Predicated region
  $region14: #{_lambda_.11} parent=0 // pred_check
    _
  $region15: #{_lambda_.11} parent=0 // pred_check_branch
    %423 = sbr.rel (0) target = $region17
  $region16: #{_lambda_.11} parent=0 // pred_region
    _
  $region17: #{_lambda_.11} parent=0 // pred_fallthru
    _
  // Predicated region
  $region18: #{_lambda_.11} parent=0 // pred_check
    _
  $region19: #{_lambda_.11} parent=0 // pred_check_branch
    %425 = sbr.rel (0) target = $region21
  $region20: #{_lambda_.11} parent=0 // pred_region
    _
  $region21: #{_lambda_.11} parent=0 // pred_fallthru
    _
  // Predicated region
  $region22: #{_lambda_.11} parent=0 // pred_check
    _
  $region23: #{_lambda_.11} parent=0 // pred_check_branch
    %427 = sbr.rel (0) target = $region25
  $region24: #{_lambda_.11} parent=0 // pred_region
    _
  $region25: #{_lambda_.11} parent=0 // pred_fallthru
    _
  // Predicated region
  $region26: #{_lambda_.11} parent=0 // pred_check
    _
  $region27: #{_lambda_.11} parent=0 // pred_check_branch
    %429 = sbr.rel (0) target = $region29
  $region28: #{_lambda_.11} parent=0 // pred_region
    _
  $region29: #{_lambda_.11} parent=0 // pred_fallthru
    _
  // Predicated region
  $region30: #{_lambda_.11} parent=0 // pred_check
    _
  $region31: #{_lambda_.11} parent=0 // pred_check_branch
    %431 = sbr.rel (0) target = $region33
  $region32: #{_lambda_.11} parent=0 // pred_region
    _
  $region33: #{_lambda_.11} parent=0 // pred_fallthru
    _
  // Predicated region
  $region34: #{_lambda_.11} parent=0 // pred_check
    _
  $region35: #{_lambda_.11} parent=0 // pred_check_branch
    %433 = sbr.rel (0) target = $region37
  $region36: #{_lambda_.11} parent=0 // pred_region
    _
  $region37: #{_lambda_.11} parent=0 // pred_fallthru
    _

// kernel: _lambda_.12
$region0: #{_lambda_.12}
  #allocation0 [shape = 'u32[]', space=smem, size = 0x4, offset = 0x4, fixed_abs, tag = 'smem constant byte address 0x4 - core index']
  #allocation1 [shape = 'u32[144,128]{1,0:T(1,128)}', space=vmem, size = 0x12000, scoped, tag = 'internal scratch']
  %s0 = inlined_call_operand.vmem [shape: f32[128,128], index: 0, kind: input, shape index: {}]
  %s1 = inlined_call_operand.vmem [shape: f32[1,128], index: 1, kind: input, shape index: {}]
  %s2 = inlined_call_operand.vmem [shape: f32[1,128], index: 2, kind: input, shape index: {}]
  %s3 = inlined_call_operand.vmem [shape: f32[128,128], index: 3, kind: output, shape index: {}]
  %s4 = sld [smem:[#allocation0]]
  $region22: #{_lambda_.12} parent=0
    _
  %s6 = ssub.s32 1, %s4
  %s7 = scalar_select 0, %s6, %s4
  // Predicated region
  $region2: #{_lambda_.12} parent=0 // pred_check
    _
  $region3: #{_lambda_.12} parent=0 // pred_check_branch
    %9 = sbr.rel (0) target = $region5
  $region4: #{_lambda_.12} parent=0 // pred_region
    _
  $region5: #{_lambda_.12} parent=0 // pred_fallthru
    _
  // Predicated region
  $region6: #{_lambda_.12} parent=0 // pred_check
    _
  $region7: #{_lambda_.12} parent=0 // pred_check_branch
    %11 = sbr.rel (0) target = $region9
  $region8: #{_lambda_.12} parent=0 // pred_region
    _
  $region9: #{_lambda_.12} parent=0 // pred_fallthru
    _
  // Predicated region
  $region10: #{_lambda_.12} parent=0 // pred_check
    _
  $region11: #{_lambda_.12} parent=0 // pred_check_branch
    %13 = sbr.rel (0) target = $region13
  $region12: #{_lambda_.12} parent=0 // pred_region
    _
  $region13: #{_lambda_.12} parent=0 // pred_fallthru
    _
  %v14 = vld [vmem:[%s0] sm:$0xff]
  %v15 = vld [vmem:[%s0 + $0x8] sm:$0xff]
  %v16 = vld [vmem:[%s0 + $0x10] sm:$0xff]
  %v17 = vld [vmem:[%s0 + $0x18] sm:$0xff]
  %v18 = vld [vmem:[%s0 + $0x20] sm:$0xff]
  %v19 = vld [vmem:[%s0 + $0x28] sm:$0xff]
  %v20 = vld [vmem:[%s0 + $0x30] sm:$0xff]
  %v21 = vld [vmem:[%s0 + $0x38] sm:$0xff]
  %v22 = vld [vmem:[%s0 + $0x40] sm:$0xff]
  %v23 = vld [vmem:[%s0 + $0x48] sm:$0xff]
  %v24 = vld [vmem:[%s0 + $0x50] sm:$0xff]
  %v25 = vld [vmem:[%s0 + $0x58] sm:$0xff]
  %v26 = vld [vmem:[%s0 + $0x60] sm:$0xff]
  %v27 = vld [vmem:[%s0 + $0x68] sm:$0xff]
  %v28 = vld [vmem:[%s0 + $0x70] sm:$0xff]
  %v29 = vld [vmem:[%s0 + $0x78] sm:$0xff]
  %v30 = vld [vmem:[%s1] sm:$0x1]
  %v32 = vlaneseq
  %v33 = vshrl.u32 %v32, 7
  %v34 = vsub.s32 0, %v33
  %v35 = vrot.slane %v30, %v34
  %v37 = vmul.f32 %v14, %v35
  %v38 = vmul.f32 %v15, %v35
  %v39 = vmul.f32 %v16, %v35
  %v40 = vmul.f32 %v17, %v35
  %v41 = vmul.f32 %v18, %v35
  %v42 = vmul.f32 %v19, %v35
  %v43 = vmul.f32 %v20, %v35
  %v44 = vmul.f32 %v21, %v35
  %v45 = vmul.f32 %v22, %v35
  %v46 = vmul.f32 %v23, %v35
  %v47 = vmul.f32 %v24, %v35
  %v48 = vmul.f32 %v25, %v35
  %v49 = vmul.f32 %v26, %v35
  %v50 = vmul.f32 %v27, %v35
  %v51 = vmul.f32 %v28, %v35
  %v52 = vmul.f32 %v29, %v35
  %v53 = vld [vmem:[%s2] sm:$0x1]
  %v55 = vlaneseq
  %v56 = vshrl.u32 %v55, 7
  %v57 = vsub.s32 0, %v56
  %v58 = vrot.slane %v53, %v57
  %v60 = vadd.f32 %v37, %v58
  %v61 = vadd.f32 %v38, %v58
  %v62 = vadd.f32 %v39, %v58
  %v63 = vadd.f32 %v40, %v58
  %v64 = vadd.f32 %v41, %v58
  %v65 = vadd.f32 %v42, %v58
  %v66 = vadd.f32 %v43, %v58
  %v67 = vadd.f32 %v44, %v58
  %v68 = vadd.f32 %v45, %v58
  %v69 = vadd.f32 %v46, %v58
  %v70 = vadd.f32 %v47, %v58
  %v71 = vadd.f32 %v48, %v58
  %v72 = vadd.f32 %v49, %v58
  %v73 = vadd.f32 %v50, %v58
  %v74 = vadd.f32 %v51, %v58
  %v75 = vadd.f32 %v52, %v58
  %vm76 = vcmp.gt.f32.partialorder %v60, 0.0
  %vm77 = vcmp.gt.f32.partialorder %v61, 0.0
  %vm78 = vcmp.gt.f32.partialorder %v62, 0.0
  %vm79 = vcmp.gt.f32.partialorder %v63, 0.0
  %vm80 = vcmp.gt.f32.partialorder %v64, 0.0
  %vm81 = vcmp.gt.f32.partialorder %v65, 0.0
  %vm82 = vcmp.gt.f32.partialorder %v66, 0.0
  %vm83 = vcmp.gt.f32.partialorder %v67, 0.0
  %vm84 = vcmp.gt.f32.partialorder %v68, 0.0
  %vm85 = vcmp.gt.f32.partialorder %v69, 0.0
  %vm86 = vcmp.gt.f32.partialorder %v70, 0.0
  %vm87 = vcmp.gt.f32.partialorder %v71, 0.0
  %vm88 = vcmp.gt.f32.partialorder %v72, 0.0
  %vm89 = vcmp.gt.f32.partialorder %v73, 0.0
  %vm90 = vcmp.gt.f32.partialorder %v74, 0.0
  %vm91 = vcmp.gt.f32.partialorder %v75, 0.0
  %v92 = vmul.f32 %v60, 0.2
  %v93 = vmul.f32 %v61, 0.2
  %v94 = vmul.f32 %v62, 0.2
  %v95 = vmul.f32 %v63, 0.2
  %v96 = vmul.f32 %v64, 0.2
  %v97 = vmul.f32 %v65, 0.2
  %v98 = vmul.f32 %v66, 0.2
  %v99 = vmul.f32 %v67, 0.2
  %v100 = vmul.f32 %v68, 0.2
  %v101 = vmul.f32 %v69, 0.2
  %v102 = vmul.f32 %v70, 0.2
  %v103 = vmul.f32 %v71, 0.2
  %v104 = vmul.f32 %v72, 0.2
  %v105 = vmul.f32 %v73, 0.2
  %v106 = vmul.f32 %v74, 0.2
  %v107 = vmul.f32 %v75, 0.2
  %v108 = vsel %vm76, %v60, %v92
  %v109 = vsel %vm77, %v61, %v93
  %v110 = vsel %vm78, %v62, %v94
  %v111 = vsel %vm79, %v63, %v95
  %v112 = vsel %vm80, %v64, %v96
  %v113 = vsel %vm81, %v65, %v97
  %v114 = vsel %vm82, %v66, %v98
  %v115 = vsel %vm83, %v67, %v99
  %v116 = vsel %vm84, %v68, %v100
  %v117 = vsel %vm85, %v69, %v101
  %v118 = vsel %vm86, %v70, %v102
  %v119 = vsel %vm87, %v71, %v103
  %v120 = vsel %vm88, %v72, %v104
  %v121 = vsel %vm89, %v73, %v105
  %v122 = vsel %vm90, %v74, %v106
  %v123 = vsel %vm91, %v75, %v107
  %124 = vst [vmem:[%s3] sm:$0xff] %v108
  %125 = vst [vmem:[%s3 + $0x8] sm:$0xff] %v109
  %126 = vst [vmem:[%s3 + $0x10] sm:$0xff] %v110
  %127 = vst [vmem:[%s3 + $0x18] sm:$0xff] %v111
  %128 = vst [vmem:[%s3 + $0x20] sm:$0xff] %v112
  %129 = vst [vmem:[%s3 + $0x28] sm:$0xff] %v113
  %130 = vst [vmem:[%s3 + $0x30] sm:$0xff] %v114
  %131 = vst [vmem:[%s3 + $0x38] sm:$0xff] %v115
  %132 = vst [vmem:[%s3 + $0x40] sm:$0xff] %v116
  %133 = vst [vmem:[%s3 + $0x48] sm:$0xff] %v117
  %134 = vst [vmem:[%s3 + $0x50] sm:$0xff] %v118
  %135 = vst [vmem:[%s3 + $0x58] sm:$0xff] %v119
  %136 = vst [vmem:[%s3 + $0x60] sm:$0xff] %v120
  %137 = vst [vmem:[%s3 + $0x68] sm:$0xff] %v121
  %138 = vst [vmem:[%s3 + $0x70] sm:$0xff] %v122
  %139 = vst [vmem:[%s3 + $0x78] sm:$0xff] %v123
  // Predicated region
  $region14: #{_lambda_.12} parent=0 // pred_check
    _
  $region15: #{_lambda_.12} parent=0 // pred_check_branch
    %141 = sbr.rel (0) target = $region17
  $region16: #{_lambda_.12} parent=0 // pred_region
    _
  $region17: #{_lambda_.12} parent=0 // pred_fallthru
    _
  // Predicated region
  $region18: #{_lambda_.12} parent=0 // pred_check
    _
  $region19: #{_lambda_.12} parent=0 // pred_check_branch
    %143 = sbr.rel (0) target = $region21
  $region20: #{_lambda_.12} parent=0 // pred_region
    _
  $region21: #{_lambda_.12} parent=0 // pred_fallthru
    _

// kernel: _lambda_.13
$region0: #{_lambda_.13}
  #allocation0 [shape = 'u32[]', space=smem, size = 0x4, offset = 0x4, fixed_abs, tag = 'smem constant byte address 0x4 - core index']
  #allocation1 [shape = 'u32[144,128]{1,0:T(1,128)}', space=vmem, size = 0x12000, scoped, tag = 'internal scratch']
  %s0 = inlined_call_operand.vmem [shape: bf16[32,512], index: 0, kind: input, shape index: {}]
  %s1 = inlined_call_operand.vmem [shape: bf16[512,128], index: 1, kind: input, shape index: {}]
  %s2 = inlined_call_operand.vmem [shape: f32[32,128], index: 2, kind: output, shape index: {0}]
  %s3 = inlined_call_operand.vmem [shape: f32[8,128], index: 3, kind: output, shape index: {1}]
  %s4 = inlined_call_operand.vmem [shape: f32[8,128], index: 4, kind: output, shape index: {2}]
  %5 = xla_tuple %s2, %s3, %s4
  %s6 = sld [smem:[#allocation0]]
  $region38: #{_lambda_.13} parent=0
    _
  %s8 = ssub.s32 1, %s6
  %s9 = scalar_select 0, %s8, %s6
  // Predicated region
  $region2: #{_lambda_.13} parent=0 // pred_check
    _
  $region3: #{_lambda_.13} parent=0 // pred_check_branch
    %11 = sbr.rel (0) target = $region5
  $region4: #{_lambda_.13} parent=0 // pred_region
    _
  $region5: #{_lambda_.13} parent=0 // pred_fallthru
    _
  // Predicated region
  $region6: #{_lambda_.13} parent=0 // pred_check
    _
  $region7: #{_lambda_.13} parent=0 // pred_check_branch
    %13 = sbr.rel (0) target = $region9
  $region8: #{_lambda_.13} parent=0 // pred_region
    _
  $region9: #{_lambda_.13} parent=0 // pred_fallthru
    _
  %v15 = vld [vmem:[%s0] sm:$0xff]
  %v16 = vld [vmem:[%s0 + $0x8] sm:$0xff]
  %v17 = vld [vmem:[%s0 + $0x10] sm:$0xff]
  %v18 = vld [vmem:[%s0 + $0x18] sm:$0xff]
  %v19 = vld [vmem:[%s0 + $0x20] sm:$0xff]
  %v20 = vld [vmem:[%s0 + $0x28] sm:$0xff]
  %v21 = vld [vmem:[%s0 + $0x30] sm:$0xff]
  %v22 = vld [vmem:[%s0 + $0x38] sm:$0xff]
  %v23 = vld [vmem:[%s1] sm:$0xf]
  %v24 = vld [vmem:[%s1 + $0x4] sm:$0xf]
  %v25 = vld [vmem:[%s1 + $0x8] sm:$0xf]
  %v26 = vld [vmem:[%s1 + $0xc] sm:$0xf]
  %v27 = vld [vmem:[%s1 + $0x10] sm:$0xf]
  %v28 = vld [vmem:[%s1 + $0x14] sm:$0xf]
  %v29 = vld [vmem:[%s1 + $0x18] sm:$0xf]
  %v30 = vld [vmem:[%s1 + $0x1c] sm:$0xf]
  %v31 = vld [vmem:[%s1 + $0x20] sm:$0xf]
  %v32 = vld [vmem:[%s1 + $0x24] sm:$0xf]
  %v33 = vld [vmem:[%s1 + $0x28] sm:$0xf]
  %v34 = vld [vmem:[%s1 + $0x2c] sm:$0xf]
  %v35 = vld [vmem:[%s1 + $0x30] sm:$0xf]
  %v36 = vld [vmem:[%s1 + $0x34] sm:$0xf]
  %v37 = vld [vmem:[%s1 + $0x38] sm:$0xf]
  %v38 = vld [vmem:[%s1 + $0x3c] sm:$0xf]
  %v39 = vld [vmem:[%s1 + $0x40] sm:$0xf]
  %v40 = vld [vmem:[%s1 + $0x44] sm:$0xf]
  %v41 = vld [vmem:[%s1 + $0x48] sm:$0xf]
  %v42 = vld [vmem:[%s1 + $0x4c] sm:$0xf]
  %v43 = vld [vmem:[%s1 + $0x50] sm:$0xf]
  %v44 = vld [vmem:[%s1 + $0x54] sm:$0xf]
  %v45 = vld [vmem:[%s1 + $0x58] sm:$0xf]
  %v46 = vld [vmem:[%s1 + $0x5c] sm:$0xf]
  %v47 = vld [vmem:[%s1 + $0x60] sm:$0xf]
  %v48 = vld [vmem:[%s1 + $0x64] sm:$0xf]
  %v49 = vld [vmem:[%s1 + $0x68] sm:$0xf]
  %v50 = vld [vmem:[%s1 + $0x6c] sm:$0xf]
  %v51 = vld [vmem:[%s1 + $0x70] sm:$0xf]
  %v52 = vld [vmem:[%s1 + $0x74] sm:$0xf]
  %v53 = vld [vmem:[%s1 + $0x78] sm:$0xf]
  %v54 = vld [vmem:[%s1 + $0x7c] sm:$0xf]
  %v55 = vld [vmem:[%s1 + $0x80] sm:$0xf]
  %v56 = vld [vmem:[%s1 + $0x84] sm:$0xf]
  %v57 = vld [vmem:[%s1 + $0x88] sm:$0xf]
  %v58 = vld [vmem:[%s1 + $0x8c] sm:$0xf]
  %v59 = vld [vmem:[%s1 + $0x90] sm:$0xf]
  %v60 = vld [vmem:[%s1 + $0x94] sm:$0xf]
  %v61 = vld [vmem:[%s1 + $0x98] sm:$0xf]
  %v62 = vld [vmem:[%s1 + $0x9c] sm:$0xf]
  %v63 = vld [vmem:[%s1 + $0xa0] sm:$0xf]
  %v64 = vld [vmem:[%s1 + $0xa4] sm:$0xf]
  %v65 = vld [vmem:[%s1 + $0xa8] sm:$0xf]
  %v66 = vld [vmem:[%s1 + $0xac] sm:$0xf]
  %v67 = vld [vmem:[%s1 + $0xb0] sm:$0xf]
  %v68 = vld [vmem:[%s1 + $0xb4] sm:$0xf]
  %v69 = vld [vmem:[%s1 + $0xb8] sm:$0xf]
  %v70 = vld [vmem:[%s1 + $0xbc] sm:$0xf]
  %v71 = vld [vmem:[%s1 + $0xc0] sm:$0xf]
  %v72 = vld [vmem:[%s1 + $0xc4] sm:$0xf]
  %v73 = vld [vmem:[%s1 + $0xc8] sm:$0xf]
  %v74 = vld [vmem:[%s1 + $0xcc] sm:$0xf]
  %v75 = vld [vmem:[%s1 + $0xd0] sm:$0xf]
  %v76 = vld [vmem:[%s1 + $0xd4] sm:$0xf]
  %v77 = vld [vmem:[%s1 + $0xd8] sm:$0xf]
  %v78 = vld [vmem:[%s1 + $0xdc] sm:$0xf]
  %v79 = vld [vmem:[%s1 + $0xe0] sm:$0xf]
  %v80 = vld [vmem:[%s1 + $0xe4] sm:$0xf]
  %v81 = vld [vmem:[%s1 + $0xe8] sm:$0xf]
  %v82 = vld [vmem:[%s1 + $0xec] sm:$0xf]
  %v83 = vld [vmem:[%s1 + $0xf0] sm:$0xf]
  %v84 = vld [vmem:[%s1 + $0xf4] sm:$0xf]
  %v85 = vld [vmem:[%s1 + $0xf8] sm:$0xf]
  %v86 = vld [vmem:[%s1 + $0xfc] sm:$0xf]
  %v95 = vunpack.c.l.b16 %v15
  %v96 = vunpack.c.h.b16 %v15
  %v97 = vunpack.c.l.b16 %v16
  %v98 = vunpack.c.h.b16 %v16
  %v99 = vunpack.c.l.b16 %v17
  %v100 = vunpack.c.h.b16 %v17
  %v101 = vunpack.c.l.b16 %v18
  %v102 = vunpack.c.h.b16 %v18
  %v103 = vunpack.c.l.b16 %v19
  %v104 = vunpack.c.h.b16 %v19
  %v105 = vunpack.c.l.b16 %v20
  %v106 = vunpack.c.h.b16 %v20
  %v107 = vunpack.c.l.b16 %v21
  %v108 = vunpack.c.h.b16 %v21
  %v109 = vunpack.c.l.b16 %v22
  %v110 = vunpack.c.h.b16 %v22
  %v111 = vpack.c.b16 %v99, %v95
  %v112 = vpack.c.b16 %v100, %v96
  %v113 = vpack.c.b16 %v101, %v97
  %v114 = vpack.c.b16 %v102, %v98
  %v115 = vpack.c.b16 %v107, %v103
  %v116 = vpack.c.b16 %v108, %v104
  %v117 = vpack.c.b16 %v109, %v105
  %v118 = vpack.c.b16 %v110, %v106
  %v191 = vunpack.c.l.b16 %v23
  %v192 = vunpack.c.l.b16 %v24
  %v193 = vunpack.c.l.b16 %v25
  %v194 = vunpack.c.l.b16 %v26
  %v195 = vunpack.c.l.b16 %v27
  %v196 = vunpack.c.l.b16 %v28
  %v197 = vunpack.c.l.b16 %v29
  %v198 = vunpack.c.l.b16 %v30
  %v199 = vunpack.c.l.b16 %v31
  %v200 = vunpack.c.l.b16 %v32
  %v201 = vunpack.c.l.b16 %v33
  %v202 = vunpack.c.l.b16 %v34
  %v203 = vunpack.c.l.b16 %v35
  %v204 = vunpack.c.l.b16 %v36
  %v205 = vunpack.c.l.b16 %v37
  %v206 = vunpack.c.l.b16 %v38
  %v207 = vunpack.c.l.b16 %v39
  %v208 = vunpack.c.l.b16 %v40
  %v209 = vunpack.c.l.b16 %v41
  %v210 = vunpack.c.l.b16 %v42
  %v211 = vunpack.c.l.b16 %v43
  %v212 = vunpack.c.l.b16 %v44
  %v213 = vunpack.c.l.b16 %v45
  %v214 = vunpack.c.l.b16 %v46
  %v215 = vunpack.c.l.b16 %v47
  %v216 = vunpack.c.l.b16 %v48
  %v217 = vunpack.c.l.b16 %v49
  %v218 = vunpack.c.l.b16 %v50
  %v219 = vunpack.c.l.b16 %v51
  %v220 = vunpack.c.l.b16 %v52
  %v221 = vunpack.c.l.b16 %v53
  %v222 = vunpack.c.l.b16 %v54
  %v223 = vunpack.c.l.b16 %v55
  %v224 = vunpack.c.l.b16 %v56
  %v225 = vunpack.c.l.b16 %v57
  %v226 = vunpack.c.l.b16 %v58
  %v227 = vunpack.c.l.b16 %v59
  %v228 = vunpack.c.l.b16 %v60
  %v229 = vunpack.c.l.b16 %v61
  %v230 = vunpack.c.l.b16 %v62
  %v231 = vunpack.c.l.b16 %v63
  %v232 = vunpack.c.l.b16 %v64
  %v233 = vunpack.c.l.b16 %v65
  %v234 = vunpack.c.l.b16 %v66
  %v235 = vunpack.c.l.b16 %v67
  %v236 = vunpack.c.l.b16 %v68
  %v237 = vunpack.c.l.b16 %v69
  %v238 = vunpack.c.l.b16 %v70
  %v239 = vunpack.c.l.b16 %v71
  %v240 = vunpack.c.l.b16 %v72
  %v241 = vunpack.c.l.b16 %v73
  %v242 = vunpack.c.l.b16 %v74
  %v243 = vunpack.c.l.b16 %v75
  %v244 = vunpack.c.l.b16 %v76
  %v245 = vunpack.c.l.b16 %v77
  %v246 = vunpack.c.l.b16 %v78
  %v247 = vunpack.c.l.b16 %v79
  %v248 = vunpack.c.l.b16 %v80
  %v249 = vunpack.c.l.b16 %v81
  %v250 = vunpack.c.l.b16 %v82
  %v251 = vunpack.c.l.b16 %v83
  %v252 = vunpack.c.l.b16 %v84
  %v253 = vunpack.c.l.b16 %v85
  %v254 = vunpack.c.l.b16 %v86
  %v255 = vpack.c.b16 %v192, %v191
  %v256 = vpack.c.b16 %v194, %v193
  %v257 = vpack.c.b16 %v196, %v195
  %v258 = vpack.c.b16 %v198, %v197
  %v259 = vpack.c.b16 %v200, %v199
  %v260 = vpack.c.b16 %v202, %v201
  %v261 = vpack.c.b16 %v204, %v203
  %v262 = vpack.c.b16 %v206, %v205
  %v263 = vpack.c.b16 %v208, %v207
  %v264 = vpack.c.b16 %v210, %v209
  %v265 = vpack.c.b16 %v212, %v211
  %v266 = vpack.c.b16 %v214, %v213
  %v267 = vpack.c.b16 %v216, %v215
  %v268 = vpack.c.b16 %v218, %v217
  %v269 = vpack.c.b16 %v220, %v219
  %v270 = vpack.c.b16 %v222, %v221
  %v271 = vpack.c.b16 %v224, %v223
  %v272 = vpack.c.b16 %v226, %v225
  %v273 = vpack.c.b16 %v228, %v227
  %v274 = vpack.c.b16 %v230, %v229
  %v275 = vpack.c.b16 %v232, %v231
  %v276 = vpack.c.b16 %v234, %v233
  %v277 = vpack.c.b16 %v236, %v235
  %v278 = vpack.c.b16 %v238, %v237
  %v279 = vpack.c.b16 %v240, %v239
  %v280 = vpack.c.b16 %v242, %v241
  %v281 = vpack.c.b16 %v244, %v243
  %v282 = vpack.c.b16 %v246, %v245
  %v283 = vpack.c.b16 %v248, %v247
  %v284 = vpack.c.b16 %v250, %v249
  %v285 = vpack.c.b16 %v252, %v251
  %v286 = vpack.c.b16 %v254, %v253
  %319 = vmatprep.subr.bf16.mxu0 0
  %320 = vmatpush1.bf16.msra.mxu0 %v255
  %321 = vmatprep.subr.bf16.mxu0 0
  %322 = vmatpush1.bf16.msra.mxu0 %v256
  %323 = vmatprep.subr.bf16.mxu0 0
  %324 = vmatpush1.bf16.msra.mxu0 %v257
  %325 = vmatprep.subr.bf16.mxu0 0
  %326 = vmatpush1.bf16.msra.mxu0 %v258
  %327 = vmatprep.subr.bf16.mxu0 0
  %328 = vmatpush1.bf16.msra.mxu0 %v259
  %329 = vmatprep.subr.bf16.mxu0 0
  %330 = vmatpush1.bf16.msra.mxu0 %v260
  %331 = vmatprep.subr.bf16.mxu0 0
  %332 = vmatpush1.bf16.msra.mxu0 %v261
  %333 = vmatprep.subr.bf16.mxu0 0
  %334 = vmatpush1.bf16.msra.mxu0 %v262
  %335 = vmatprep.subr.bf16.mxu0 0
  %336 = vmatpush1.bf16.msra.mxu0 %v263
  %337 = vmatprep.subr.bf16.mxu0 0
  %338 = vmatpush1.bf16.msra.mxu0 %v264
  %339 = vmatprep.subr.bf16.mxu0 0
  %340 = vmatpush1.bf16.msra.mxu0 %v265
  %341 = vmatprep.subr.bf16.mxu0 0
  %342 = vmatpush1.bf16.msra.mxu0 %v266
  %343 = vmatprep.subr.bf16.mxu0 0
  %344 = vmatpush1.bf16.msra.mxu0 %v267
  %345 = vmatprep.subr.bf16.mxu0 0
  %346 = vmatpush1.bf16.msra.mxu0 %v268
  %347 = vmatprep.subr.bf16.mxu0 0
  %348 = vmatpush1.bf16.msra.mxu0 %v269
  %349 = vmatprep.subr.bf16.mxu0 0
  %350 = vmatpush1.bf16.msra.mxu0 %v270
  %351 = vmatprep.mubr.bf16.mxu0 %v112
  %352 = vmatmul.mubr.bf16.gmra.mrb[0].mxu0 %v111
  %v353 = vpop.f32.mrb[0].mxu0
  %v354 = vadd.f32 0.0, %v353
  %v355 = vpop.f32.mrb[0].mxu0
  %v356 = vpop.f32.mrb[0].mxu0
  %v357 = vadd.f32 0.0, %v356
  %v358 = vpop.f32.mrb[0].mxu0
  %359 = vmatprep.mubr.bf16.mxu0 %v116
  %360 = vmatmul.mubr.bf16.gmra.mrb[0].mxu0 %v115
  %v361 = vpop.f32.mrb[0].mxu0
  %v362 = vadd.f32 0.0, %v361
  %v363 = vpop.f32.mrb[0].mxu0
  %v364 = vpop.f32.mrb[0].mxu0
  %v365 = vadd.f32 0.0, %v364
  %v366 = vpop.f32.mrb[0].mxu0
  %367 = vdwg.mxu0
  %368 = vmatprep.subr.bf16.mxu0 0
  %369 = vmatpush1.bf16.msra.mxu0 %v271
  %370 = vmatprep.subr.bf16.mxu0 0
  %371 = vmatpush1.bf16.msra.mxu0 %v272
  %372 = vmatprep.subr.bf16.mxu0 0
  %373 = vmatpush1.bf16.msra.mxu0 %v273
  %374 = vmatprep.subr.bf16.mxu0 0
  %375 = vmatpush1.bf16.msra.mxu0 %v274
  %376 = vmatprep.subr.bf16.mxu0 0
  %377 = vmatpush1.bf16.msra.mxu0 %v275
  %378 = vmatprep.subr.bf16.mxu0 0
  %379 = vmatpush1.bf16.msra.mxu0 %v276
  %380 = vmatprep.subr.bf16.mxu0 0
  %381 = vmatpush1.bf16.msra.mxu0 %v277
  %382 = vmatprep.subr.bf16.mxu0 0
  %383 = vmatpush1.bf16.msra.mxu0 %v278
  %384 = vmatprep.subr.bf16.mxu0 0
  %385 = vmatpush1.bf16.msra.mxu0 %v279
  %386 = vmatprep.subr.bf16.mxu0 0
  %387 = vmatpush1.bf16.msra.mxu0 %v280
  %388 = vmatprep.subr.bf16.mxu0 0
  %389 = vmatpush1.bf16.msra.mxu0 %v281
  %390 = vmatprep.subr.bf16.mxu0 0
  %391 = vmatpush1.bf16.msra.mxu0 %v282
  %392 = vmatprep.subr.bf16.mxu0 0
  %393 = vmatpush1.bf16.msra.mxu0 %v283
  %394 = vmatprep.subr.bf16.mxu0 0
  %395 = vmatpush1.bf16.msra.mxu0 %v284
  %396 = vmatprep.subr.bf16.mxu0 0
  %397 = vmatpush1.bf16.msra.mxu0 %v285
  %398 = vmatprep.subr.bf16.mxu0 0
  %399 = vmatpush1.bf16.msra.mxu0 %v286
  %400 = vmatprep.mubr.bf16.mxu0 %v114
  %401 = vmatmul.mubr.bf16.gmra.mrb[0].mxu0 %v113
  %v402 = vpop.f32.mrb[0].mxu0
  %v403 = vadd.f32 %v354, %v402
  %v404 = vpop.f32.mrb[0].mxu0
  %v405 = vpop.f32.mrb[0].mxu0
  %v406 = vadd.f32 %v357, %v405
  %v407 = vpop.f32.mrb[0].mxu0
  %408 = vmatprep.mubr.bf16.mxu0 %v118
  %409 = vmatmul.mubr.bf16.gmra.mrb[0].mxu0 %v117
  %v410 = vpop.f32.mrb[0].mxu0
  %v411 = vadd.f32 %v362, %v410
  %v412 = vpop.f32.mrb[0].mxu0
  %v413 = vpop.f32.mrb[0].mxu0
  %v414 = vadd.f32 %v365, %v413
  %v415 = vpop.f32.mrb[0].mxu0
  %416 = vdwg.mxu0
  %417 = vst [vmem:[%s2] sm:$0xff] %v403
  %418 = vst [vmem:[%s2 + $0x8] sm:$0xff] %v406
  %419 = vst [vmem:[%s2 + $0x10] sm:$0xff] %v411
  %420 = vst [vmem:[%s2 + $0x18] sm:$0xff] %v414
  %p421 = scmp.eq.s32.totalorder 0, 0
  // Predicated region
  $region10: #{_lambda_.13} parent=0 // pred_check
    %p422 = pneg %p421
  $region11: #{_lambda_.13} parent=0 // pred_check_branch
    %424 = sbr.rel (%p422) target = $region13
  $region12: #{_lambda_.13} parent=0 // pred_region
    %425 = vst [vmem:[%s3] sm:$0xff] 0.0
    %426 = vst [vmem:[%s4] sm:$0xff] 0.0
  $region13: #{_lambda_.13} parent=0 // pred_fallthru
    _
  %v427 = vld [vmem:[%s3] sm:$0xff]
  %v428 = vadd.f32 %v403, %v406
  %v429 = vadd.f32 %v428, %v411
  %v430 = vadd.f32 %v429, %v414
  %v431 = vrot.slane %v430, 4
  %v432 = vadd.f32 %v430, %v431
  %v433 = vrot.slane %v432, 2
  %v434 = vadd.f32 %v432, %v433
  %v435 = vrot.slane %v434, 1
  %v436 = vadd.f32 %v434, %v435
  %v437 = vadd.f32 %v427, %v436
  %438 = vst [vmem:[%s3] sm:$0xff] %v437
  %v439 = vld [vmem:[%s4] sm:$0xff]
  %v440 = vmul.f32 %v403, %v403
  %v441 = vmul.f32 %v406, %v406
  %v442 = vmul.f32 %v411, %v411
  %v443 = vmul.f32 %v414, %v414
  %v444 = vadd.f32 %v440, %v441
  %v445 = vadd.f32 %v444, %v442
  %v446 = vadd.f32 %v445, %v443
  %v447 = vrot.slane %v446, 4
  %v448 = vadd.f32 %v446, %v447
  %v449 = vrot.slane %v448, 2
  %v450 = vadd.f32 %v448, %v449
  %v451 = vrot.slane %v450, 1
  %v452 = vadd.f32 %v450, %v451
  %v453 = vadd.f32 %v439, %v452
  %454 = vst [vmem:[%s4] sm:$0xff] %v453
  // Predicated region
  $region14: #{_lambda_.13} parent=0 // pred_check
    _
  $region15: #{_lambda_.13} parent=0 // pred_check_branch
    %456 = sbr.rel (0) target = $region17
  $region16: #{_lambda_.13} parent=0 // pred_region
    _
  $region17: #{_lambda_.13} parent=0 // pred_fallthru
    _
  // Predicated region
  $region18: #{_lambda_.13} parent=0 // pred_check
    _
  $region19: #{_lambda_.13} parent=0 // pred_check_branch
    %458 = sbr.rel (0) target = $region21
  $region20: #{_lambda_.13} parent=0 // pred_region
    _
  $region21: #{_lambda_.13} parent=0 // pred_fallthru
    _
  // Predicated region
  $region22: #{_lambda_.13} parent=0 // pred_check
    _
  $region23: #{_lambda_.13} parent=0 // pred_check_branch
    %460 = sbr.rel (0) target = $region25
  $region24: #{_lambda_.13} parent=0 // pred_region
    _
  $region25: #{_lambda_.13} parent=0 // pred_fallthru
    _
  // Predicated region
  $region26: #{_lambda_.13} parent=0 // pred_check
    _
  $region27: #{_lambda_.13} parent=0 // pred_check_branch
    %462 = sbr.rel (0) target = $region29
  $region28: #{_lambda_.13} parent=0 // pred_region
    _
  $region29: #{_lambda_.13} parent=0 // pred_fallthru
    _
  // Predicated region
  $region30: #{_lambda_.13} parent=0 // pred_check
    _
  $region31: #{_lambda_.13} parent=0 // pred_check_branch
    %464 = sbr.rel (0) target = $region33
  $region32: #{_lambda_.13} parent=0 // pred_region
    _
  $region33: #{_lambda_.13} parent=0 // pred_fallthru
    _
  // Predicated region
  $region34: #{_lambda_.13} parent=0 // pred_check
    _
  $region35: #{_lambda_.13} parent=0 // pred_check_branch
    %466 = sbr.rel (0) target = $region37
  $region36: #{_lambda_.13} parent=0 // pred_region
    _
  $region37: #{_lambda_.13} parent=0 // pred_fallthru
    _

// kernel: _lambda_.14
$region0: #{_lambda_.14}
  #allocation0 [shape = 'u32[]', space=smem, size = 0x4, offset = 0x4, fixed_abs, tag = 'smem constant byte address 0x4 - core index']
  #allocation1 [shape = 'u32[144,128]{1,0:T(1,128)}', space=vmem, size = 0x12000, scoped, tag = 'internal scratch']
  %s0 = inlined_call_operand.vmem [shape: f32[32,128], index: 0, kind: input, shape index: {}]
  %s1 = inlined_call_operand.vmem [shape: f32[1,128], index: 1, kind: input, shape index: {}]
  %s2 = inlined_call_operand.vmem [shape: f32[1,128], index: 2, kind: input, shape index: {}]
  %s3 = inlined_call_operand.vmem [shape: f32[32,128], index: 3, kind: output, shape index: {}]
  %s4 = sld [smem:[#allocation0]]
  $region22: #{_lambda_.14} parent=0
    _
  %s6 = ssub.s32 1, %s4
  %s7 = scalar_select 0, %s6, %s4
  // Predicated region
  $region2: #{_lambda_.14} parent=0 // pred_check
    _
  $region3: #{_lambda_.14} parent=0 // pred_check_branch
    %9 = sbr.rel (0) target = $region5
  $region4: #{_lambda_.14} parent=0 // pred_region
    _
  $region5: #{_lambda_.14} parent=0 // pred_fallthru
    _
  // Predicated region
  $region6: #{_lambda_.14} parent=0 // pred_check
    _
  $region7: #{_lambda_.14} parent=0 // pred_check_branch
    %11 = sbr.rel (0) target = $region9
  $region8: #{_lambda_.14} parent=0 // pred_region
    _
  $region9: #{_lambda_.14} parent=0 // pred_fallthru
    _
  // Predicated region
  $region10: #{_lambda_.14} parent=0 // pred_check
    _
  $region11: #{_lambda_.14} parent=0 // pred_check_branch
    %13 = sbr.rel (0) target = $region13
  $region12: #{_lambda_.14} parent=0 // pred_region
    _
  $region13: #{_lambda_.14} parent=0 // pred_fallthru
    _
  %v14 = vld [vmem:[%s0] sm:$0xff]
  %v15 = vld [vmem:[%s0 + $0x8] sm:$0xff]
  %v16 = vld [vmem:[%s0 + $0x10] sm:$0xff]
  %v17 = vld [vmem:[%s0 + $0x18] sm:$0xff]
  %v18 = vld [vmem:[%s1] sm:$0x1]
  %v20 = vlaneseq
  %v21 = vshrl.u32 %v20, 7
  %v22 = vsub.s32 0, %v21
  %v23 = vrot.slane %v18, %v22
  %v25 = vmul.f32 %v14, %v23
  %v26 = vmul.f32 %v15, %v23
  %v27 = vmul.f32 %v16, %v23
  %v28 = vmul.f32 %v17, %v23
  %v29 = vld [vmem:[%s2] sm:$0x1]
  %v31 = vlaneseq
  %v32 = vshrl.u32 %v31, 7
  %v33 = vsub.s32 0, %v32
  %v34 = vrot.slane %v29, %v33
  %v36 = vadd.f32 %v25, %v34
  %v37 = vadd.f32 %v26, %v34
  %v38 = vadd.f32 %v27, %v34
  %v39 = vadd.f32 %v28, %v34
  %vm40 = vcmp.gt.f32.partialorder %v36, 0.0
  %vm41 = vcmp.gt.f32.partialorder %v37, 0.0
  %vm42 = vcmp.gt.f32.partialorder %v38, 0.0
  %vm43 = vcmp.gt.f32.partialorder %v39, 0.0
  %v44 = vmul.f32 %v36, 0.2
  %v45 = vmul.f32 %v37, 0.2
  %v46 = vmul.f32 %v38, 0.2
  %v47 = vmul.f32 %v39, 0.2
  %v48 = vsel %vm40, %v36, %v44
  %v49 = vsel %vm41, %v37, %v45
  %v50 = vsel %vm42, %v38, %v46
  %v51 = vsel %vm43, %v39, %v47
  %52 = vst [vmem:[%s3] sm:$0xff] %v48
  %53 = vst [vmem:[%s3 + $0x8] sm:$0xff] %v49
  %54 = vst [vmem:[%s3 + $0x10] sm:$0xff] %v50
  %55 = vst [vmem:[%s3 + $0x18] sm:$0xff] %v51
  // Predicated region
  $region14: #{_lambda_.14} parent=0 // pred_check
    _
  $region15: #{_lambda_.14} parent=0 // pred_check_branch
    %57 = sbr.rel (0) target = $region17
  $region16: #{_lambda_.14} parent=0 // pred_region
    _
  $region17: #{_lambda_.14} parent=0 // pred_fallthru
    _
  // Predicated region
  $region18: #{_lambda_.14} parent=0 // pred_check
    _
  $region19: #{_lambda_.14} parent=0 // pred_check_branch
    %59 = sbr.rel (0) target = $region21
  $region20: #{_lambda_.14} parent=0 // pred_region
    _
  $region21: #{_lambda_.14} parent=0 // pred_fallthru
    _

// kernel: _lambda_.15
$region0: #{_lambda_.15}
  #allocation0 [shape = 'u32[]', space=smem, size = 0x4, offset = 0x4, fixed_abs, tag = 'smem constant byte address 0x4 - core index']
  #allocation1 [shape = 'u32[144,128]{1,0:T(1,128)}', space=vmem, size = 0x12000, scoped, tag = 'internal scratch']
  %s0 = inlined_call_operand.vmem [shape: bf16[8,1024], index: 0, kind: input, shape index: {}]
  %s1 = inlined_call_operand.vmem [shape: bf16[1024,128], index: 1, kind: input, shape index: {}]
  %s2 = inlined_call_operand.vmem [shape: f32[8,128], index: 2, kind: output, shape index: {}]
  %s3 = sld [smem:[#allocation0]]
  $region18: #{_lambda_.15} parent=0
    _
  %s5 = ssub.s32 1, %s3
  %s6 = scalar_select 0, %s5, %s3
  // Predicated region
  $region2: #{_lambda_.15} parent=0 // pred_check
    _
  $region3: #{_lambda_.15} parent=0 // pred_check_branch
    %8 = sbr.rel (0) target = $region5
  $region4: #{_lambda_.15} parent=0 // pred_region
    _
  $region5: #{_lambda_.15} parent=0 // pred_fallthru
    _
  // Predicated region
  $region6: #{_lambda_.15} parent=0 // pred_check
    _
  $region7: #{_lambda_.15} parent=0 // pred_check_branch
    %10 = sbr.rel (0) target = $region9
  $region8: #{_lambda_.15} parent=0 // pred_region
    _
  $region9: #{_lambda_.15} parent=0 // pred_fallthru
    _
  %v12 = vld [vmem:[%s0] sm:$0xff]
  %v13 = vld [vmem:[%s0 + $0x8] sm:$0xff]
  %v14 = vld [vmem:[%s0 + $0x10] sm:$0xff]
  %v15 = vld [vmem:[%s0 + $0x18] sm:$0xff]
  %v16 = vld [vmem:[%s1] sm:$0xf]
  %v17 = vld [vmem:[%s1 + $0x4] sm:$0xf]
  %v18 = vld [vmem:[%s1 + $0x8] sm:$0xf]
  %v19 = vld [vmem:[%s1 + $0xc] sm:$0xf]
  %v20 = vld [vmem:[%s1 + $0x10] sm:$0xf]
  %v21 = vld [vmem:[%s1 + $0x14] sm:$0xf]
  %v22 = vld [vmem:[%s1 + $0x18] sm:$0xf]
  %v23 = vld [vmem:[%s1 + $0x1c] sm:$0xf]
  %v24 = vld [vmem:[%s1 + $0x20] sm:$0xf]
  %v25 = vld [vmem:[%s1 + $0x24] sm:$0xf]
  %v26 = vld [vmem:[%s1 + $0x28] sm:$0xf]
  %v27 = vld [vmem:[%s1 + $0x2c] sm:$0xf]
  %v28 = vld [vmem:[%s1 + $0x30] sm:$0xf]
  %v29 = vld [vmem:[%s1 + $0x34] sm:$0xf]
  %v30 = vld [vmem:[%s1 + $0x38] sm:$0xf]
  %v31 = vld [vmem:[%s1 + $0x3c] sm:$0xf]
  %v32 = vld [vmem:[%s1 + $0x40] sm:$0xf]
  %v33 = vld [vmem:[%s1 + $0x44] sm:$0xf]
  %v34 = vld [vmem:[%s1 + $0x48] sm:$0xf]
  %v35 = vld [vmem:[%s1 + $0x4c] sm:$0xf]
  %v36 = vld [vmem:[%s1 + $0x50] sm:$0xf]
  %v37 = vld [vmem:[%s1 + $0x54] sm:$0xf]
  %v38 = vld [vmem:[%s1 + $0x58] sm:$0xf]
  %v39 = vld [vmem:[%s1 + $0x5c] sm:$0xf]
  %v40 = vld [vmem:[%s1 + $0x60] sm:$0xf]
  %v41 = vld [vmem:[%s1 + $0x64] sm:$0xf]
  %v42 = vld [vmem:[%s1 + $0x68] sm:$0xf]
  %v43 = vld [vmem:[%s1 + $0x6c] sm:$0xf]
  %v44 = vld [vmem:[%s1 + $0x70] sm:$0xf]
  %v45 = vld [vmem:[%s1 + $0x74] sm:$0xf]
  %v46 = vld [vmem:[%s1 + $0x78] sm:$0xf]
  %v47 = vld [vmem:[%s1 + $0x7c] sm:$0xf]
  %v48 = vld [vmem:[%s1 + $0x80] sm:$0xf]
  %v49 = vld [vmem:[%s1 + $0x84] sm:$0xf]
  %v50 = vld [vmem:[%s1 + $0x88] sm:$0xf]
  %v51 = vld [vmem:[%s1 + $0x8c] sm:$0xf]
  %v52 = vld [vmem:[%s1 + $0x90] sm:$0xf]
  %v53 = vld [vmem:[%s1 + $0x94] sm:$0xf]
  %v54 = vld [vmem:[%s1 + $0x98] sm:$0xf]
  %v55 = vld [vmem:[%s1 + $0x9c] sm:$0xf]
  %v56 = vld [vmem:[%s1 + $0xa0] sm:$0xf]
  %v57 = vld [vmem:[%s1 + $0xa4] sm:$0xf]
  %v58 = vld [vmem:[%s1 + $0xa8] sm:$0xf]
  %v59 = vld [vmem:[%s1 + $0xac] sm:$0xf]
  %v60 = vld [vmem:[%s1 + $0xb0] sm:$0xf]
  %v61 = vld [vmem:[%s1 + $0xb4] sm:$0xf]
  %v62 = vld [vmem:[%s1 + $0xb8] sm:$0xf]
  %v63 = vld [vmem:[%s1 + $0xbc] sm:$0xf]
  %v64 = vld [vmem:[%s1 + $0xc0] sm:$0xf]
  %v65 = vld [vmem:[%s1 + $0xc4] sm:$0xf]
  %v66 = vld [vmem:[%s1 + $0xc8] sm:$0xf]
  %v67 = vld [vmem:[%s1 + $0xcc] sm:$0xf]
  %v68 = vld [vmem:[%s1 + $0xd0] sm:$0xf]
  %v69 = vld [vmem:[%s1 + $0xd4] sm:$0xf]
  %v70 = vld [vmem:[%s1 + $0xd8] sm:$0xf]
  %v71 = vld [vmem:[%s1 + $0xdc] sm:$0xf]
  %v72 = vld [vmem:[%s1 + $0xe0] sm:$0xf]
  %v73 = vld [vmem:[%s1 + $0xe4] sm:$0xf]
  %v74 = vld [vmem:[%s1 + $0xe8] sm:$0xf]
  %v75 = vld [vmem:[%s1 + $0xec] sm:$0xf]
  %v76 = vld [vmem:[%s1 + $0xf0] sm:$0xf]
  %v77 = vld [vmem:[%s1 + $0xf4] sm:$0xf]
  %v78 = vld [vmem:[%s1 + $0xf8] sm:$0xf]
  %v79 = vld [vmem:[%s1 + $0xfc] sm:$0xf]
  %v80 = vld [vmem:[%s1 + $0x100] sm:$0xf]
  %v81 = vld [vmem:[%s1 + $0x104] sm:$0xf]
  %v82 = vld [vmem:[%s1 + $0x108] sm:$0xf]
  %v83 = vld [vmem:[%s1 + $0x10c] sm:$0xf]
  %v84 = vld [vmem:[%s1 + $0x110] sm:$0xf]
  %v85 = vld [vmem:[%s1 + $0x114] sm:$0xf]
  %v86 = vld [vmem:[%s1 + $0x118] sm:$0xf]
  %v87 = vld [vmem:[%s1 + $0x11c] sm:$0xf]
  %v88 = vld [vmem:[%s1 + $0x120] sm:$0xf]
  %v89 = vld [vmem:[%s1 + $0x124] sm:$0xf]
  %v90 = vld [vmem:[%s1 + $0x128] sm:$0xf]
  %v91 = vld [vmem:[%s1 + $0x12c] sm:$0xf]
  %v92 = vld [vmem:[%s1 + $0x130] sm:$0xf]
  %v93 = vld [vmem:[%s1 + $0x134] sm:$0xf]
  %v94 = vld [vmem:[%s1 + $0x138] sm:$0xf]
  %v95 = vld [vmem:[%s1 + $0x13c] sm:$0xf]
  %v96 = vld [vmem:[%s1 + $0x140] sm:$0xf]
  %v97 = vld [vmem:[%s1 + $0x144] sm:$0xf]
  %v98 = vld [vmem:[%s1 + $0x148] sm:$0xf]
  %v99 = vld [vmem:[%s1 + $0x14c] sm:$0xf]
  %v100 = vld [vmem:[%s1 + $0x150] sm:$0xf]
  %v101 = vld [vmem:[%s1 + $0x154] sm:$0xf]
  %v102 = vld [vmem:[%s1 + $0x158] sm:$0xf]
  %v103 = vld [vmem:[%s1 + $0x15c] sm:$0xf]
  %v104 = vld [vmem:[%s1 + $0x160] sm:$0xf]
  %v105 = vld [vmem:[%s1 + $0x164] sm:$0xf]
  %v106 = vld [vmem:[%s1 + $0x168] sm:$0xf]
  %v107 = vld [vmem:[%s1 + $0x16c] sm:$0xf]
  %v108 = vld [vmem:[%s1 + $0x170] sm:$0xf]
  %v109 = vld [vmem:[%s1 + $0x174] sm:$0xf]
  %v110 = vld [vmem:[%s1 + $0x178] sm:$0xf]
  %v111 = vld [vmem:[%s1 + $0x17c] sm:$0xf]
  %v112 = vld [vmem:[%s1 + $0x180] sm:$0xf]
  %v113 = vld [vmem:[%s1 + $0x184] sm:$0xf]
  %v114 = vld [vmem:[%s1 + $0x188] sm:$0xf]
  %v115 = vld [vmem:[%s1 + $0x18c] sm:$0xf]
  %v116 = vld [vmem:[%s1 + $0x190] sm:$0xf]
  %v117 = vld [vmem:[%s1 + $0x194] sm:$0xf]
  %v118 = vld [vmem:[%s1 + $0x198] sm:$0xf]
  %v119 = vld [vmem:[%s1 + $0x19c] sm:$0xf]
  %v120 = vld [vmem:[%s1 + $0x1a0] sm:$0xf]
  %v121 = vld [vmem:[%s1 + $0x1a4] sm:$0xf]
  %v122 = vld [vmem:[%s1 + $0x1a8] sm:$0xf]
  %v123 = vld [vmem:[%s1 + $0x1ac] sm:$0xf]
  %v124 = vld [vmem:[%s1 + $0x1b0] sm:$0xf]
  %v125 = vld [vmem:[%s1 + $0x1b4] sm:$0xf]
  %v126 = vld [vmem:[%s1 + $0x1b8] sm:$0xf]
  %v127 = vld [vmem:[%s1 + $0x1bc] sm:$0xf]
  %v128 = vld [vmem:[%s1 + $0x1c0] sm:$0xf]
  %v129 = vld [vmem:[%s1 + $0x1c4] sm:$0xf]
  %v130 = vld [vmem:[%s1 + $0x1c8] sm:$0xf]
  %v131 = vld [vmem:[%s1 + $0x1cc] sm:$0xf]
  %v132 = vld [vmem:[%s1 + $0x1d0] sm:$0xf]
  %v133 = vld [vmem:[%s1 + $0x1d4] sm:$0xf]
  %v134 = vld [vmem:[%s1 + $0x1d8] sm:$0xf]
  %v135 = vld [vmem:[%s1 + $0x1dc] sm:$0xf]
  %v136 = vld [vmem:[%s1 + $0x1e0] sm:$0xf]
  %v137 = vld [vmem:[%s1 + $0x1e4] sm:$0xf]
  %v138 = vld [vmem:[%s1 + $0x1e8] sm:$0xf]
  %v139 = vld [vmem:[%s1 + $0x1ec] sm:$0xf]
  %v140 = vld [vmem:[%s1 + $0x1f0] sm:$0xf]
  %v141 = vld [vmem:[%s1 + $0x1f4] sm:$0xf]
  %v142 = vld [vmem:[%s1 + $0x1f8] sm:$0xf]
  %v143 = vld [vmem:[%s1 + $0x1fc] sm:$0xf]
  %v148 = vunpack.c.l.b16 %v12
  %v149 = vunpack.c.h.b16 %v12
  %v150 = vunpack.c.l.b16 %v13
  %v151 = vunpack.c.h.b16 %v13
  %v152 = vunpack.c.l.b16 %v14
  %v153 = vunpack.c.h.b16 %v14
  %v154 = vunpack.c.l.b16 %v15
  %v155 = vunpack.c.h.b16 %v15
  %v156 = vpack.c.b16 %v148, %v148
  %v157 = vpack.c.b16 %v149, %v149
  %v158 = vpack.c.b16 %v150, %v150
  %v159 = vpack.c.b16 %v151, %v151
  %v160 = vpack.c.b16 %v152, %v152
  %v161 = vpack.c.b16 %v153, %v153
  %v162 = vpack.c.b16 %v154, %v154
  %v163 = vpack.c.b16 %v155, %v155
  %v300 = vunpack.c.l.b16 %v16
  %v301 = vunpack.c.l.b16 %v17
  %v302 = vunpack.c.l.b16 %v18
  %v303 = vunpack.c.l.b16 %v19
  %v304 = vunpack.c.l.b16 %v20
  %v305 = vunpack.c.l.b16 %v21
  %v306 = vunpack.c.l.b16 %v22
  %v307 = vunpack.c.l.b16 %v23
  %v308 = vunpack.c.l.b16 %v24
  %v309 = vunpack.c.l.b16 %v25
  %v310 = vunpack.c.l.b16 %v26
  %v311 = vunpack.c.l.b16 %v27
  %v312 = vunpack.c.l.b16 %v28
  %v313 = vunpack.c.l.b16 %v29
  %v314 = vunpack.c.l.b16 %v30
  %v315 = vunpack.c.l.b16 %v31
  %v316 = vunpack.c.l.b16 %v32
  %v317 = vunpack.c.l.b16 %v33
  %v318 = vunpack.c.l.b16 %v34
  %v319 = vunpack.c.l.b16 %v35
  %v320 = vunpack.c.l.b16 %v36
  %v321 = vunpack.c.l.b16 %v37
  %v322 = vunpack.c.l.b16 %v38
  %v323 = vunpack.c.l.b16 %v39
  %v324 = vunpack.c.l.b16 %v40
  %v325 = vunpack.c.l.b16 %v41
  %v326 = vunpack.c.l.b16 %v42
  %v327 = vunpack.c.l.b16 %v43
  %v328 = vunpack.c.l.b16 %v44
  %v329 = vunpack.c.l.b16 %v45
  %v330 = vunpack.c.l.b16 %v46
  %v331 = vunpack.c.l.b16 %v47
  %v332 = vunpack.c.l.b16 %v48
  %v333 = vunpack.c.l.b16 %v49
  %v334 = vunpack.c.l.b16 %v50
  %v335 = vunpack.c.l.b16 %v51
  %v336 = vunpack.c.l.b16 %v52
  %v337 = vunpack.c.l.b16 %v53
  %v338 = vunpack.c.l.b16 %v54
  %v339 = vunpack.c.l.b16 %v55
  %v340 = vunpack.c.l.b16 %v56
  %v341 = vunpack.c.l.b16 %v57
  %v342 = vunpack.c.l.b16 %v58
  %v343 = vunpack.c.l.b16 %v59
  %v344 = vunpack.c.l.b16 %v60
  %v345 = vunpack.c.l.b16 %v61
  %v346 = vunpack.c.l.b16 %v62
  %v347 = vunpack.c.l.b16 %v63
  %v348 = vunpack.c.l.b16 %v64
  %v349 = vunpack.c.l.b16 %v65
  %v350 = vunpack.c.l.b16 %v66
  %v351 = vunpack.c.l.b16 %v67
  %v352 = vunpack.c.l.b16 %v68
  %v353 = vunpack.c.l.b16 %v69
  %v354 = vunpack.c.l.b16 %v70
  %v355 = vunpack.c.l.b16 %v71
  %v356 = vunpack.c.l.b16 %v72
  %v357 = vunpack.c.l.b16 %v73
  %v358 = vunpack.c.l.b16 %v74
  %v359 = vunpack.c.l.b16 %v75
  %v360 = vunpack.c.l.b16 %v76
  %v361 = vunpack.c.l.b16 %v77
  %v362 = vunpack.c.l.b16 %v78
  %v363 = vunpack.c.l.b16 %v79
  %v364 = vunpack.c.l.b16 %v80
  %v365 = vunpack.c.l.b16 %v81
  %v366 = vunpack.c.l.b16 %v82
  %v367 = vunpack.c.l.b16 %v83
  %v368 = vunpack.c.l.b16 %v84
  %v369 = vunpack.c.l.b16 %v85
  %v370 = vunpack.c.l.b16 %v86
  %v371 = vunpack.c.l.b16 %v87
  %v372 = vunpack.c.l.b16 %v88
  %v373 = vunpack.c.l.b16 %v89
  %v374 = vunpack.c.l.b16 %v90
  %v375 = vunpack.c.l.b16 %v91
  %v376 = vunpack.c.l.b16 %v92
  %v377 = vunpack.c.l.b16 %v93
  %v378 = vunpack.c.l.b16 %v94
  %v379 = vunpack.c.l.b16 %v95
  %v380 = vunpack.c.l.b16 %v96
  %v381 = vunpack.c.l.b16 %v97
  %v382 = vunpack.c.l.b16 %v98
  %v383 = vunpack.c.l.b16 %v99
  %v384 = vunpack.c.l.b16 %v100
  %v385 = vunpack.c.l.b16 %v101
  %v386 = vunpack.c.l.b16 %v102
  %v387 = vunpack.c.l.b16 %v103
  %v388 = vunpack.c.l.b16 %v104
  %v389 = vunpack.c.l.b16 %v105
  %v390 = vunpack.c.l.b16 %v106
  %v391 = vunpack.c.l.b16 %v107
  %v392 = vunpack.c.l.b16 %v108
  %v393 = vunpack.c.l.b16 %v109
  %v394 = vunpack.c.l.b16 %v110
  %v395 = vunpack.c.l.b16 %v111
  %v396 = vunpack.c.l.b16 %v112
  %v397 = vunpack.c.l.b16 %v113
  %v398 = vunpack.c.l.b16 %v114
  %v399 = vunpack.c.l.b16 %v115
  %v400 = vunpack.c.l.b16 %v116
  %v401 = vunpack.c.l.b16 %v117
  %v402 = vunpack.c.l.b16 %v118
  %v403 = vunpack.c.l.b16 %v119
  %v404 = vunpack.c.l.b16 %v120
  %v405 = vunpack.c.l.b16 %v121
  %v406 = vunpack.c.l.b16 %v122
  %v407 = vunpack.c.l.b16 %v123
  %v408 = vunpack.c.l.b16 %v124
  %v409 = vunpack.c.l.b16 %v125
  %v410 = vunpack.c.l.b16 %v126
  %v411 = vunpack.c.l.b16 %v127
  %v412 = vunpack.c.l.b16 %v128
  %v413 = vunpack.c.l.b16 %v129
  %v414 = vunpack.c.l.b16 %v130
  %v415 = vunpack.c.l.b16 %v131
  %v416 = vunpack.c.l.b16 %v132
  %v417 = vunpack.c.l.b16 %v133
  %v418 = vunpack.c.l.b16 %v134
  %v419 = vunpack.c.l.b16 %v135
  %v420 = vunpack.c.l.b16 %v136
  %v421 = vunpack.c.l.b16 %v137
  %v422 = vunpack.c.l.b16 %v138
  %v423 = vunpack.c.l.b16 %v139
  %v424 = vunpack.c.l.b16 %v140
  %v425 = vunpack.c.l.b16 %v141
  %v426 = vunpack.c.l.b16 %v142
  %v427 = vunpack.c.l.b16 %v143
  %v428 = vpack.c.b16 %v301, %v300
  %v429 = vpack.c.b16 %v303, %v302
  %v430 = vpack.c.b16 %v305, %v304
  %v431 = vpack.c.b16 %v307, %v306
  %v432 = vpack.c.b16 %v309, %v308
  %v433 = vpack.c.b16 %v311, %v310
  %v434 = vpack.c.b16 %v313, %v312
  %v435 = vpack.c.b16 %v315, %v314
  %v436 = vpack.c.b16 %v317, %v316
  %v437 = vpack.c.b16 %v319, %v318
  %v438 = vpack.c.b16 %v321, %v320
  %v439 = vpack.c.b16 %v323, %v322
  %v440 = vpack.c.b16 %v325, %v324
  %v441 = vpack.c.b16 %v327, %v326
  %v442 = vpack.c.b16 %v329, %v328
  %v443 = vpack.c.b16 %v331, %v330
  %v444 = vpack.c.b16 %v333, %v332
  %v445 = vpack.c.b16 %v335, %v334
  %v446 = vpack.c.b16 %v337, %v336
  %v447 = vpack.c.b16 %v339, %v338
  %v448 = vpack.c.b16 %v341, %v340
  %v449 = vpack.c.b16 %v343, %v342
  %v450 = vpack.c.b16 %v345, %v344
  %v451 = vpack.c.b16 %v347, %v346
  %v452 = vpack.c.b16 %v349, %v348
  %v453 = vpack.c.b16 %v351, %v350
  %v454 = vpack.c.b16 %v353, %v352
  %v455 = vpack.c.b16 %v355, %v354
  %v456 = vpack.c.b16 %v357, %v356
  %v457 = vpack.c.b16 %v359, %v358
  %v458 = vpack.c.b16 %v361, %v360
  %v459 = vpack.c.b16 %v363, %v362
  %v460 = vpack.c.b16 %v365, %v364
  %v461 = vpack.c.b16 %v367, %v366
  %v462 = vpack.c.b16 %v369, %v368
  %v463 = vpack.c.b16 %v371, %v370
  %v464 = vpack.c.b16 %v373, %v372
  %v465 = vpack.c.b16 %v375, %v374
  %v466 = vpack.c.b16 %v377, %v376
  %v467 = vpack.c.b16 %v379, %v378
  %v468 = vpack.c.b16 %v381, %v380
  %v469 = vpack.c.b16 %v383, %v382
  %v470 = vpack.c.b16 %v385, %v384
  %v471 = vpack.c.b16 %v387, %v386
  %v472 = vpack.c.b16 %v389, %v388
  %v473 = vpack.c.b16 %v391, %v390
  %v474 = vpack.c.b16 %v393, %v392
  %v475 = vpack.c.b16 %v395, %v394
  %v476 = vpack.c.b16 %v397, %v396
  %v477 = vpack.c.b16 %v399, %v398
  %v478 = vpack.c.b16 %v401, %v400
  %v479 = vpack.c.b16 %v403, %v402
  %v480 = vpack.c.b16 %v405, %v404
  %v481 = vpack.c.b16 %v407, %v406
  %v482 = vpack.c.b16 %v409, %v408
  %v483 = vpack.c.b16 %v411, %v410
  %v484 = vpack.c.b16 %v413, %v412
  %v485 = vpack.c.b16 %v415, %v414
  %v486 = vpack.c.b16 %v417, %v416
  %v487 = vpack.c.b16 %v419, %v418
  %v488 = vpack.c.b16 %v421, %v420
  %v489 = vpack.c.b16 %v423, %v422
  %v490 = vpack.c.b16 %v425, %v424
  %v491 = vpack.c.b16 %v427, %v426
  %556 = vmatprep.subr.bf16.mxu0 0
  %557 = vmatpush1.bf16.msra.mxu0 %v428
  %558 = vmatprep.subr.bf16.mxu0 0
  %559 = vmatpush1.bf16.msra.mxu0 %v429
  %560 = vmatprep.subr.bf16.mxu0 0
  %561 = vmatpush1.bf16.msra.mxu0 %v430
  %562 = vmatprep.subr.bf16.mxu0 0
  %563 = vmatpush1.bf16.msra.mxu0 %v431
  %564 = vmatprep.subr.bf16.mxu0 0
  %565 = vmatpush1.bf16.msra.mxu0 %v432
  %566 = vmatprep.subr.bf16.mxu0 0
  %567 = vmatpush1.bf16.msra.mxu0 %v433
  %568 = vmatprep.subr.bf16.mxu0 0
  %569 = vmatpush1.bf16.msra.mxu0 %v434
  %570 = vmatprep.subr.bf16.mxu0 0
  %571 = vmatpush1.bf16.msra.mxu0 %v435
  %572 = vmatprep.subr.bf16.mxu0 0
  %573 = vmatpush1.bf16.msra.mxu0 %v436
  %574 = vmatprep.subr.bf16.mxu0 0
  %575 = vmatpush1.bf16.msra.mxu0 %v437
  %576 = vmatprep.subr.bf16.mxu0 0
  %577 = vmatpush1.bf16.msra.mxu0 %v438
  %578 = vmatprep.subr.bf16.mxu0 0
  %579 = vmatpush1.bf16.msra.mxu0 %v439
  %580 = vmatprep.subr.bf16.mxu0 0
  %581 = vmatpush1.bf16.msra.mxu0 %v440
  %582 = vmatprep.subr.bf16.mxu0 0
  %583 = vmatpush1.bf16.msra.mxu0 %v441
  %584 = vmatprep.subr.bf16.mxu0 0
  %585 = vmatpush1.bf16.msra.mxu0 %v442
  %586 = vmatprep.subr.bf16.mxu0 0
  %587 = vmatpush1.bf16.msra.mxu0 %v443
  %588 = vmatprep.mubr.bf16.mxu0 %v157
  %589 = vmatmul.mubr.bf16.gmra.mrb[0].mxu0 %v156
  %v590 = vpop.f32.mrb[0].mxu0
  %v591 = vadd.f32 0.0, %v590
  %v592 = vpop.f32.mrb[0].mxu0
  %v593 = vpop.f32.mrb[0].mxu0
  %v594 = vpop.f32.mrb[0].mxu0
  %595 = vdwg.mxu0
  %596 = vmatprep.subr.bf16.mxu0 0
  %597 = vmatpush1.bf16.msra.mxu0 %v444
  %598 = vmatprep.subr.bf16.mxu0 0
  %599 = vmatpush1.bf16.msra.mxu0 %v445
  %600 = vmatprep.subr.bf16.mxu0 0
  %601 = vmatpush1.bf16.msra.mxu0 %v446
  %602 = vmatprep.subr.bf16.mxu0 0
  %603 = vmatpush1.bf16.msra.mxu0 %v447
  %604 = vmatprep.subr.bf16.mxu0 0
  %605 = vmatpush1.bf16.msra.mxu0 %v448
  %606 = vmatprep.subr.bf16.mxu0 0
  %607 = vmatpush1.bf16.msra.mxu0 %v449
  %608 = vmatprep.subr.bf16.mxu0 0
  %609 = vmatpush1.bf16.msra.mxu0 %v450
  %610 = vmatprep.subr.bf16.mxu0 0
  %611 = vmatpush1.bf16.msra.mxu0 %v451
  %612 = vmatprep.subr.bf16.mxu0 0
  %613 = vmatpush1.bf16.msra.mxu0 %v452
  %614 = vmatprep.subr.bf16.mxu0 0
  %615 = vmatpush1.bf16.msra.mxu0 %v453
  %616 = vmatprep.subr.bf16.mxu0 0
  %617 = vmatpush1.bf16.msra.mxu0 %v454
  %618 = vmatprep.subr.bf16.mxu0 0
  %619 = vmatpush1.bf16.msra.mxu0 %v455
  %620 = vmatprep.subr.bf16.mxu0 0
  %621 = vmatpush1.bf16.msra.mxu0 %v456
  %622 = vmatprep.subr.bf16.mxu0 0
  %623 = vmatpush1.bf16.msra.mxu0 %v457
  %624 = vmatprep.subr.bf16.mxu0 0
  %625 = vmatpush1.bf16.msra.mxu0 %v458
  %626 = vmatprep.subr.bf16.mxu0 0
  %627 = vmatpush1.bf16.msra.mxu0 %v459
  %628 = vmatprep.mubr.bf16.mxu0 %v159
  %629 = vmatmul.mubr.bf16.gmra.mrb[0].mxu0 %v158
  %v630 = vpop.f32.mrb[0].mxu0
  %v631 = vadd.f32 %v591, %v630
  %v632 = vpop.f32.mrb[0].mxu0
  %v633 = vpop.f32.mrb[0].mxu0
  %v634 = vpop.f32.mrb[0].mxu0
  %635 = vdwg.mxu0
  %636 = vmatprep.subr.bf16.mxu0 0
  %637 = vmatpush1.bf16.msra.mxu0 %v460
  %638 = vmatprep.subr.bf16.mxu0 0
  %639 = vmatpush1.bf16.msra.mxu0 %v461
  %640 = vmatprep.subr.bf16.mxu0 0
  %641 = vmatpush1.bf16.msra.mxu0 %v462
  %642 = vmatprep.subr.bf16.mxu0 0
  %643 = vmatpush1.bf16.msra.mxu0 %v463
  %644 = vmatprep.subr.bf16.mxu0 0
  %645 = vmatpush1.bf16.msra.mxu0 %v464
  %646 = vmatprep.subr.bf16.mxu0 0
  %647 = vmatpush1.bf16.msra.mxu0 %v465
  %648 = vmatprep.subr.bf16.mxu0 0
  %649 = vmatpush1.bf16.msra.mxu0 %v466
  %650 = vmatprep.subr.bf16.mxu0 0
  %651 = vmatpush1.bf16.msra.mxu0 %v467
  %652 = vmatprep.subr.bf16.mxu0 0
  %653 = vmatpush1.bf16.msra.mxu0 %v468
  %654 = vmatprep.subr.bf16.mxu0 0
  %655 = vmatpush1.bf16.msra.mxu0 %v469
  %656 = vmatprep.subr.bf16.mxu0 0
  %657 = vmatpush1.bf16.msra.mxu0 %v470
  %658 = vmatprep.subr.bf16.mxu0 0
  %659 = vmatpush1.bf16.msra.mxu0 %v471
  %660 = vmatprep.subr.bf16.mxu0 0
  %661 = vmatpush1.bf16.msra.mxu0 %v472
  %662 = vmatprep.subr.bf16.mxu0 0
  %663 = vmatpush1.bf16.msra.mxu0 %v473
  %664 = vmatprep.subr.bf16.mxu0 0
  %665 = vmatpush1.bf16.msra.mxu0 %v474
  %666 = vmatprep.subr.bf16.mxu0 0
  %667 = vmatpush1.bf16.msra.mxu0 %v475
  %668 = vmatprep.mubr.bf16.mxu0 %v161
  %669 = vmatmul.mubr.bf16.gmra.mrb[0].mxu0 %v160
  %v670 = vpop.f32.mrb[0].mxu0
  %v671 = vadd.f32 %v631, %v670
  %v672 = vpop.f32.mrb[0].mxu0
  %v673 = vpop.f32.mrb[0].mxu0
  %v674 = vpop.f32.mrb[0].mxu0
  %675 = vdwg.mxu0
  %676 = vmatprep.subr.bf16.mxu0 0
  %677 = vmatpush1.bf16.msra.mxu0 %v476
  %678 = vmatprep.subr.bf16.mxu0 0
  %679 = vmatpush1.bf16.msra.mxu0 %v477
  %680 = vmatprep.subr.bf16.mxu0 0
  %681 = vmatpush1.bf16.msra.mxu0 %v478
  %682 = vmatprep.subr.bf16.mxu0 0
  %683 = vmatpush1.bf16.msra.mxu0 %v479
  %684 = vmatprep.subr.bf16.mxu0 0
  %685 = vmatpush1.bf16.msra.mxu0 %v480
  %686 = vmatprep.subr.bf16.mxu0 0
  %687 = vmatpush1.bf16.msra.mxu0 %v481
  %688 = vmatprep.subr.bf16.mxu0 0
  %689 = vmatpush1.bf16.msra.mxu0 %v482
  %690 = vmatprep.subr.bf16.mxu0 0
  %691 = vmatpush1.bf16.msra.mxu0 %v483
  %692 = vmatprep.subr.bf16.mxu0 0
  %693 = vmatpush1.bf16.msra.mxu0 %v484
  %694 = vmatprep.subr.bf16.mxu0 0
  %695 = vmatpush1.bf16.msra.mxu0 %v485
  %696 = vmatprep.subr.bf16.mxu0 0
  %697 = vmatpush1.bf16.msra.mxu0 %v486
  %698 = vmatprep.subr.bf16.mxu0 0
  %699 = vmatpush1.bf16.msra.mxu0 %v487
  %700 = vmatprep.subr.bf16.mxu0 0
  %701 = vmatpush1.bf16.msra.mxu0 %v488
  %702 = vmatprep.subr.bf16.mxu0 0
  %703 = vmatpush1.bf16.msra.mxu0 %v489
  %704 = vmatprep.subr.bf16.mxu0 0
  %705 = vmatpush1.bf16.msra.mxu0 %v490
  %706 = vmatprep.subr.bf16.mxu0 0
  %707 = vmatpush1.bf16.msra.mxu0 %v491
  %708 = vmatprep.mubr.bf16.mxu0 %v163
  %709 = vmatmul.mubr.bf16.gmra.mrb[0].mxu0 %v162
  %v710 = vpop.f32.mrb[0].mxu0
  %v711 = vadd.f32 %v671, %v710
  %v712 = vpop.f32.mrb[0].mxu0
  %v713 = vpop.f32.mrb[0].mxu0
  %v714 = vpop.f32.mrb[0].mxu0
  %715 = vdwg.mxu0
  %v716 = vand.u32 2147483647, %v711
  %v717 = vsub.f32 0.0, %v716
  %v718 = vmul.f32 %v717, 1.442695
  %v719 = vpow.pop %v718
  %vm720 = vcmp.ge.f32.partialorder %v711, 0.0
  %v721 = vadd.f32 %v719, 1.0
  %v722 = vrcp.pop %v721
  %v723 = vmul.f32 1.0, %v722
  %v724 = vmul.f32 %v719, %v722
  %v725 = vsel %vm720, %v723, %v724
  %726 = vst [vmem:[%s2] sm:$0xff] %v725
  // Predicated region
  $region10: #{_lambda_.15} parent=0 // pred_check
    _
  $region11: #{_lambda_.15} parent=0 // pred_check_branch
    %728 = sbr.rel (0) target = $region13
  $region12: #{_lambda_.15} parent=0 // pred_region
    _
  $region13: #{_lambda_.15} parent=0 // pred_fallthru
    _
  // Predicated region
  $region14: #{_lambda_.15} parent=0 // pred_check
    _
  $region15: #{_lambda_.15} parent=0 // pred_check_branch
    %730 = sbr.rel (0) target = $region17
  $region16: #{_lambda_.15} parent=0 // pred_region
    _
  $region17: #{_lambda_.15} parent=0 // pred_fallthru
    _

</llo_original>
